<compile_context>
chip_gen: v7x
topology: tpu7x:2x2x1
jax: 0.10.0
libtpu: 0.0.40
codegen_flags: <defaults>
</compile_context>

<pallas_src>
import jax
import jax.numpy as jnp
import numpy as np
from jax.experimental import pallas as pl
from jax.experimental.pallas import tpu as pltpu

# ---- MANO structural constants (from the module / MANO_RIGHT model) ---------
V = 778              # vertex count
V_PAD = 896          # 7 * 128, lane-aligned padded vertex count
NJ = 16              # number of joints
NS = 10              # shape basis size (betas)
NPOSE_FEAT = 135     # 15 joints * 9 (pose blendshape feature)
NCOMP = 45           # hand pose PCA components
POSE_PARAMS = 12     # self.pose_param_count
FINGER_INDEX = [734, 333, 443, 555, 678]
PARENTS = [-1, 0, 1, 2, 0, 4, 5, 0, 7, 8, 0, 10, 11, 0, 13, 14]
WIDE = 3 * V_PAD     # 2688
J3 = 3 * NJ          # 48
NBLEND = NS + NPOSE_FEAT   # 145 stacked blendshape rows
NBLEND_PAD = 152           # padded to a multiple of 8
MAX_B_TILE = 128           # batch tile cap (VMEM-safe on v5e/v7x)


# =============================================================================
# Fused Pallas kernel: blendshapes + LBS + joint regression for one batch tile
#   v_posed_w = [beta|pose_feat] @ blend_w + v_template_w      (B, 2688)
#   F         = ak (4B, 48) @ weights_block (48, 2688)         (4B, 2688)
#   verts_w[:, cP:(c+1)P] = F0_c*vpx + F1_c*vpy + F2_c*vpz + F3_c
#   joints    = sum_c verts_plane_c @ jrb3[c]                  (B, 48)
# =============================================================================
def _mano_kernel(lhs_ref, ak_ref, blend_ref, vt_ref, wblk_ref, jrb_ref,
                 verts_ref, jnt_ref):
    bt = lhs_ref.shape[0]                       # static batch tile size

    # fused shape+pose blendshapes (bf16 MXU, f32 accumulation)
    vposed = jnp.dot(lhs_ref[...].astype(jnp.bfloat16), blend_ref[...],
                     preferred_element_type=jnp.float32) + vt_ref[...]

    # single weight-stationary LBS matmul for all four transform rows
    f_all = jnp.dot(ak_ref[...].astype(jnp.bfloat16), wblk_ref[...],
                    preferred_element_type=jnp.float32)        # (4*bt, WIDE)

    # lane-aligned coordinate planes of v_posed (V_PAD is a multiple of 128)
    vpx = vposed[:, 0 * V_PAD:1 * V_PAD]
    vpy = vposed[:, 1 * V_PAD:2 * V_PAD]
    vpz = vposed[:, 2 * V_PAD:3 * V_PAD]

    jnt = jnp.zeros((bt, J3), jnp.float32)
    for c in range(3):                          # static unroll over planes
        lo, hi = c * V_PAD, (c + 1) * V_PAD
        plane = (f_all[0 * bt:1 * bt, lo:hi] * vpx
                 + f_all[1 * bt:2 * bt, lo:hi] * vpy
                 + f_all[2 * bt:3 * bt, lo:hi] * vpz
                 + f_all[3 * bt:4 * bt, lo:hi])
        verts_ref[:, lo:hi] = plane             # direct plane store, no concat
        jnt = jnt + jnp.dot(plane.astype(jnp.bfloat16), jrb_ref[c],
                            preferred_element_type=jnp.float32)
    jnt_ref[...] = jnt


def mano_skin(lhs, ak_flat, blend_w, vt_w, wblk, jrb3, b_tile, n_pad):
    grid = (n_pad // b_tile,)
    return pl.pallas_call(
        _mano_kernel,
        out_shape=(jax.ShapeDtypeStruct((n_pad, WIDE), jnp.float32),
                   jax.ShapeDtypeStruct((n_pad, J3), jnp.float32)),
        grid=grid,
        in_specs=[
            pl.BlockSpec((b_tile, NBLEND_PAD), lambda b: (b, 0)),
            pl.BlockSpec((4 * b_tile, J3), lambda b: (b, 0)),
            pl.BlockSpec((NBLEND_PAD, WIDE), lambda b: (0, 0)),
            pl.BlockSpec((1, WIDE), lambda b: (0, 0)),
            pl.BlockSpec((J3, WIDE), lambda b: (0, 0)),
            pl.BlockSpec((3, V_PAD, J3), lambda b: (0, 0, 0)),
        ],
        out_specs=(
            pl.BlockSpec((b_tile, WIDE), lambda b: (b, 0)),
            pl.BlockSpec((b_tile, J3), lambda b: (b, 0)),
        ),
        compiler_params=pltpu.CompilerParams(
            dimension_semantics=("parallel",),
            vmem_limit_bytes=48 * 1024 * 1024),
    )(lhs, ak_flat, blend_w, vt_w, wblk, jrb3)


# =============================================================================
# Plain-JAX glue (tiny per-joint math, identical semantics to the PyTorch code)
# =============================================================================
def quat2mat(quat):
    nq = quat / jnp.sqrt(jnp.sum(quat ** 2, axis=1, keepdims=True))
    w, x, y, z = nq[:, 0], nq[:, 1], nq[:, 2], nq[:, 3]
    w2, x2, y2, z2 = w * w, x * x, y * y, z * z
    wx, wy, wz = w * x, w * y, w * z
    xy, xz, yz = x * y, x * z, y * z
    rot = jnp.stack([
        w2 + x2 - y2 - z2, 2 * xy - 2 * wz, 2 * wy + 2 * xz,
        2 * wz + 2 * xy, w2 - x2 + y2 - z2, 2 * yz - 2 * wx,
        2 * xz - 2 * wy, 2 * wx + 2 * yz, w2 - x2 - y2 + z2], axis=1)
    return rot.reshape(-1, 3, 3)


def batch_rodrigues(theta):
    l1norm = jnp.sqrt(jnp.sum((theta + 1e-8) ** 2, axis=1))
    angle = l1norm[:, None]
    normalized = theta / angle
    angle = angle * 0.5
    quat = jnp.concatenate([jnp.cos(angle), jnp.sin(angle) * normalized], axis=1)
    return quat2mat(quat)


def _make_A(R, t):
    """R (..., 3, 3), t (..., 3, 1) -> homogeneous (..., 4, 4)."""
    R_homo = jnp.concatenate(
        [R, jnp.zeros(R.shape[:-2] + (1, 3), jnp.float32)], axis=-2)
    t_homo = jnp.concatenate(
        [t, jnp.ones(t.shape[:-2] + (1, 1), jnp.float32)], axis=-2)
    return jnp.concatenate([R_homo, t_homo], axis=-1)


# MANO tree = 5 independent chains of depth 3 -> batch each depth level.
_LEVEL_CHILDREN = [[1, 4, 7, 10, 13], [2, 5, 8, 11, 14], [3, 6, 9, 12, 15]]


def batch_global_rigid_transformation(Rs, Js, parents):
    n = Rs.shape[0]
    Js_e = Js[..., None]                                  # (N, 16, 3, 1)

    A_world = [None] * NJ
    A_world[0] = _make_A(Rs[:, 0], Js_e[:, 0])            # (N, 4, 4)

    prev = jnp.broadcast_to(A_world[0][:, None], (n, 5, 4, 4))
    for children in _LEVEL_CHILDREN:
        ci = np.array(children)
        pi = np.array([parents[c] for c in children])
        j_here = Js_e[:, ci] - Js_e[:, pi]                # (N, 5, 3, 1)
        A_local = _make_A(Rs[:, ci], j_here)              # (N, 5, 4, 4)
        world = jnp.matmul(prev, A_local)                 # (N, 5, 4, 4)
        for k, c in enumerate(children):
            A_world[c] = world[:, k]
        prev = world

    results = jnp.stack(A_world, axis=1)                  # (N, 16, 4, 4)
    new_J = results[:, :, :3, 3]
    Js_w0 = jnp.concatenate([Js_e, jnp.zeros((n, NJ, 1, 1), jnp.float32)],
                            axis=2)
    init_bone = jnp.matmul(results, Js_w0)                # (N, 16, 4, 1)
    init_bone = jnp.pad(init_bone, ((0, 0), (0, 0), (0, 0), (3, 0)))
    A = results - init_bone
    return new_J, A


def _choose_tile(n):
    n8 = ((n + 7) // 8) * 8                               # sublane-aligned
    b_tile = min(MAX_B_TILE, n8)
    n_pad = ((n8 + b_tile - 1) // b_tile) * b_tile
    return b_tile, n_pad


def mano_forward(params, beta, theta):
    """Equivalent of ManoHand.forward(beta, theta, get_skin=True)."""
    n = beta.shape[0]
    b_tile, n_pad = _choose_tile(n)

    # _get_full_pose
    g_rot = theta[:, :3]
    full_local = jnp.matmul(theta[:, 3:],
                            params["hands_components"][:POSE_PARAMS, :]) \
        + params["hands_mean"]
    theta_full = jnp.concatenate([g_rot, full_local], axis=1)        # (N, 48)

    Rs = batch_rodrigues(theta_full.reshape(-1, 3)).reshape(n, NJ, 3, 3)
    pose_feature = (Rs[:, 1:, :, :] - jnp.eye(3, dtype=jnp.float32)
                    ).reshape(n, NPOSE_FEAT)

    # rest-pose joints via algebraically folded regression (tiny plain JAX)
    J = jnp.einsum('bs,sjc->bjc', beta, params["sd_fold"]) + params["vt_fold"]

    # kinematic-tree recursion (tiny 4x4 math, level-batched plain JAX)
    _, A = batch_global_rigid_transformation(Rs, J, PARENTS)
    # akmat[k, b, c*16 + j] = A[b, j, c, k]  (only the first 3 rows are needed)
    akmat = jnp.transpose(A[:, :, :3, :], (3, 0, 2, 1)).reshape(4, n, J3)

    # batch-padded LHS for the fused blendshape matmul
    lhs = jnp.concatenate([beta, pose_feature], axis=1)              # (N, 145)
    lhs = jnp.pad(lhs, ((0, n_pad - n), (0, NBLEND_PAD - NBLEND)))
    # per-tile k-major layout so the kernel sees (4*b_tile, 48) directly
    ak = jnp.pad(akmat, ((0, 0), (0, n_pad - n), (0, 0)))
    ak = jnp.transpose(ak.reshape(4, n_pad // b_tile, b_tile, J3),
                       (1, 0, 2, 3)).reshape(4 * n_pad, J3)

    verts_w, jnt_w = mano_skin(lhs, ak, params["blend_w"],
                               params["v_template_w"],
                               params["weights_block"], params["jrb3"],
                               b_tile, n_pad)

    verts = verts_w[:n].reshape(n, 3, V_PAD)[:, :, :V].transpose(0, 2, 1)
    joints = jnt_w[:n].reshape(n, 3, NJ).transpose(0, 2, 1)          # (N, 16, 3)
    finger_verts = verts[:, jnp.array(FINGER_INDEX), :]
    joints = jnp.concatenate([joints, finger_verts], axis=1)         # (N, 21, 3)
    return verts, joints, Rs


# =============================================================================
# Pure-JAX reference (mirrors the PyTorch forward literally) for verification
# =============================================================================
def _rigid_ref(Rs, Js, parents):
    n = Rs.shape[0]
    Js_e = Js[..., None]
    results = [_make_A(Rs[:, 0], Js_e[:, 0])]
    for i in range(1, len(parents)):
        j_here = Js_e[:, i] - Js_e[:, parents[i]]
        results.append(jnp.matmul(results[parents[i]],
                                  _make_A(Rs[:, i], j_here)))
    results = jnp.stack(results, axis=1)
    new_J = results[:, :, :3, 3]
    Js_w0 = jnp.concatenate([Js_e, jnp.zeros((n, NJ, 1, 1), jnp.float32)],
                            axis=2)
    init_bone = jnp.matmul(results, Js_w0)
    init_bone = jnp.pad(init_bone, ((0, 0), (0, 0), (0, 0), (3, 0)))
    return new_J, results - init_bone


def mano_forward_ref(params, beta, theta):
    n = beta.shape[0]
    g_rot = theta[:, :3]
    full_local = jnp.matmul(theta[:, 3:],
                            params["hands_components"][:POSE_PARAMS, :]) \
        + params["hands_mean"]
    theta_full = jnp.concatenate([g_rot, full_local], axis=1)
    Rs = batch_rodrigues(theta_full.reshape(-1, 3)).reshape(n, NJ, 3, 3)

    v_shaped = jnp.matmul(beta, params["shapedirs"]).reshape(n, V, 3) \
        + params["v_template"]
    Jx = jnp.matmul(v_shaped[:, :, 0], params["J_regressor"])
    Jy = jnp.matmul(v_shaped[:, :, 1], params["J_regressor"])
    Jz = jnp.matmul(v_shaped[:, :, 2], params["J_regressor"])
    J = jnp.stack([Jx, Jy, Jz], axis=2)

    pose_feature = (Rs[:, 1:, :, :] - jnp.eye(3, dtype=jnp.float32)
                    ).reshape(n, NPOSE_FEAT)
    v_posed = jnp.matmul(pose_feature, params["posedirs"]).reshape(n, V, 3) \
        + v_shaped
    _, A = _rigid_ref(Rs, J, PARENTS)

    W = jnp.broadcast_to(params["weights"], (n, V, NJ))
    T = jnp.matmul(W, A.reshape(n, NJ, 16)).reshape(n, V, 4, 4)
    v_posed_homo = jnp.concatenate(
        [v_posed, jnp.ones((n, V, 1), jnp.float32)], axis=2)
    v_homo = jnp.matmul(T, v_posed_homo[..., None])
    verts = v_homo[:, :, :3, 0]

    jx = jnp.matmul(verts[:, :, 0], params["J_regressor"])
    jy = jnp.matmul(verts[:, :, 1], params["J_regressor"])
    jz = jnp.matmul(verts[:, :, 2], params["J_regressor"])
    joints = jnp.stack([jx, jy, jz], axis=2)
    joints = jnp.concatenate([joints, verts[:, jnp.array(FINGER_INDEX), :]],
                             axis=1)
    return verts, joints, Rs


# =============================================================================
# Deterministic synthetic parameter initialization (no checkpoint loading)
# =============================================================================
def init_params(key):
    ks = jax.random.split(key, 8)
    v_template = 0.1 * jax.random.normal(ks[0], (V, 3), jnp.float32)
    shapedirs = 0.01 * jax.random.normal(ks[1], (NS, V * 3), jnp.float32)
    posedirs = 0.01 * jax.random.normal(ks[2], (NPOSE_FEAT, V * 3), jnp.float32)
    jreg = jax.random.uniform(ks[3], (V, NJ), jnp.float32)
    jreg = jreg / jnp.sum(jreg, axis=0, keepdims=True)     # column-normalized
    weights = jax.random.uniform(ks[4], (V, NJ), jnp.float32)
    weights = weights / jnp.sum(weights, axis=1, keepdims=True)  # row-normalized
    hands_components = 0.1 * jax.random.normal(ks[5], (NCOMP, NCOMP), jnp.float32)
    hands_mean = 0.1 * jax.random.normal(ks[6], (NCOMP,), jnp.float32)

    def to_wide(dirs, rows):
        d3 = dirs.reshape(rows, V, 3)                       # [s, v, c]
        dp = jnp.transpose(d3, (0, 2, 1))                   # [s, c, v]
        dp = jnp.pad(dp, ((0, 0), (0, 0), (0, V_PAD - V)))
        return dp.reshape(rows, WIDE)                       # col = c*V_PAD + v

    # fused [shapedirs ; posedirs] wide slab, padded to NBLEND_PAD rows
    blend_w = to_wide(jnp.concatenate([shapedirs, posedirs], axis=0), NBLEND)
    blend_w = jnp.pad(blend_w, ((0, NBLEND_PAD - NBLEND), (0, 0)))
    v_template_w = jnp.pad(v_template.T,
                           ((0, 0), (0, V_PAD - V))).reshape(1, WIDE)

    # block-diagonal LBS weights: wblk[c*16+j, c*V_PAD+v] = W[v, j]
    wblk = jnp.zeros((J3, WIDE), jnp.float32)
    for c in range(3):
        wblk = wblk.at[c * NJ:(c + 1) * NJ,
                       c * V_PAD:c * V_PAD + V].set(weights.T)
    # per-plane joint regressor: jrb3[c, v, c*16+j] = jreg[v, j]
    jrb3 = jnp.zeros((3, V_PAD, J3), jnp.float32)
    for c in range(3):
        jrb3 = jrb3.at[c, :V, c * NJ:(c + 1) * NJ].set(jreg)

    # algebraically folded rest-joint regression: J = beta @ sd_fold + vt_fold
    sd_fold = jnp.einsum('svc,vj->sjc', shapedirs.reshape(NS, V, 3), jreg)
    vt_fold = jnp.einsum('vc,vj->jc', v_template, jreg)

    return dict(
        v_template=v_template,
        shapedirs=shapedirs,
        posedirs=posedirs,
        J_regressor=jreg,
        weights=weights,
        hands_components=hands_components,
        hands_mean=hands_mean,
        # bf16 lane-dense weights used by the fused Pallas kernel
        blend_w=blend_w.astype(jnp.bfloat16),
        v_template_w=v_template_w,
        weights_block=wblk.astype(jnp.bfloat16),
        jrb3=jrb3.astype(jnp.bfloat16),
        # folded rest-joint regression (plain JAX, f32)
        sd_fold=sd_fold,
        vt_fold=vt_fold,
    )


if __name__ == "__main__":
    key = jax.random.PRNGKey(0)
    kp, kb, kt = jax.random.split(key, 3)
    params = init_params(kp)

    batch = 2
    beta = jax.random.normal(kb, (batch, NS), jnp.float32)            # (2, 10)
    theta = 0.2 * jax.random.normal(kt, (batch, 3 + POSE_PARAMS),
                                    jnp.float32)                      # (2, 15)

    verts, joints, Rs = jax.block_until_ready(mano_forward(params, beta, theta))

    # Cross-check against a literal pure-JAX f32 port of the PyTorch forward.
    verts_ref, joints_ref, Rs_ref = jax.block_until_ready(
        mano_forward_ref(params, beta, theta))

    assert verts.shape == (batch, V, 3)
    assert joints.shape == (batch, NJ + len(FINGER_INDEX), 3)
    assert Rs.shape == (batch, NJ, 3, 3)
    # bf16 weights in the Pallas path -> loose-ish but meaningful tolerance
    assert np.allclose(np.asarray(verts), np.asarray(verts_ref),
                       atol=2e-2, rtol=2e-2)
    assert np.allclose(np.asarray(joints), np.asarray(joints_ref),
                       atol=2e-2, rtol=2e-2)
    assert np.allclose(np.asarray(Rs), np.asarray(Rs_ref), atol=1e-4)

    # TODO(synk): obj saving (save_obj) is file I/O and intentionally omitted.
    print("KERNEL_OK")
</pallas_src>

<mosaic_0001>
module attributes {stable_mosaic.version = 11 : i64} {
  func.func @_mano_kernel(%arg0: i32, %arg1: memref<8x152xf32, #tpu.memory_space<vmem>>, %arg2: memref<32x48xf32, #tpu.memory_space<vmem>>, %arg3: memref<152x2688xbf16, #tpu.memory_space<vmem>>, %arg4: memref<1x2688xf32, #tpu.memory_space<vmem>>, %arg5: memref<48x2688xbf16, #tpu.memory_space<vmem>>, %arg6: memref<3x896x48xbf16, #tpu.memory_space<vmem>>, %arg7: memref<8x2688xf32, #tpu.memory_space<vmem>>, %arg8: memref<8x48xf32, #tpu.memory_space<vmem>>) attributes {dimension_semantics = [#tpu.dimension_semantics<parallel>], iteration_bounds = array<i64: 1>, scalar_prefetch = 0 : i64, scratch_operands = 0 : i64, tpu.core_type = #tpu.core_type<tc>, window_params = [{transform_indices = @transform_0, window_bounds = array<i64: 8, 152>}, {transform_indices = @transform_1, window_bounds = array<i64: 32, 48>}, {pipeline_mode = #tpu.pipeline_mode<synchronous>, transform_indices = @transform_2, window_bounds = array<i64: 152, 2688>}, {pipeline_mode = #tpu.pipeline_mode<synchronous>, transform_indices = @transform_3, window_bounds = array<i64: 1, 2688>}, {pipeline_mode = #tpu.pipeline_mode<synchronous>, transform_indices = @transform_4, window_bounds = array<i64: 48, 2688>}, {pipeline_mode = #tpu.pipeline_mode<synchronous>, transform_indices = @transform_5, window_bounds = array<i64: 3, 896, 48>}, {transform_indices = @transform_6, window_bounds = array<i64: 8, 2688>}, {transform_indices = @transform_7, window_bounds = array<i64: 8, 48>}]} {
    %c0 = arith.constant 0 : index
    %c0_0 = arith.constant 0 : index
    %0 = vector.load %arg1[%c0, %c0_0] : memref<8x152xf32, #tpu.memory_space<vmem>>, vector<8x152xf32>
    %1 = arith.truncf %0 : vector<8x152xf32> to vector<8x152xbf16>
    %c0_1 = arith.constant 0 : index
    %c0_2 = arith.constant 0 : index
    %2 = vector.load %arg3[%c0_1, %c0_2] : memref<152x2688xbf16, #tpu.memory_space<vmem>>, vector<152x2688xbf16>
    %cst = arith.constant dense<0.000000e+00> : vector<8x2688xf32>
    %3 = tpu.matmul %1, %2, %cst {dimension_numbers = #tpu.dot_dimension_numbers<[1], [0], [0], [1], [0, 0, 1, 1], [], []>} : vector<8x152xbf16>, vector<152x2688xbf16>, vector<8x2688xf32> -> vector<8x2688xf32>
    %c0_3 = arith.constant 0 : index
    %c0_4 = arith.constant 0 : index
    %4 = vector.load %arg4[%c0_3, %c0_4] : memref<1x2688xf32, #tpu.memory_space<vmem>>, vector<1x2688xf32>
    %5 = vector.broadcast %4 : vector<1x2688xf32> to vector<8x2688xf32>
    %6 = arith.addf %3, %5 : vector<8x2688xf32>
    %c0_5 = arith.constant 0 : index
    %c0_6 = arith.constant 0 : index
    %7 = vector.load %arg2[%c0_5, %c0_6] : memref<32x48xf32, #tpu.memory_space<vmem>>, vector<32x48xf32>
    %8 = arith.truncf %7 : vector<32x48xf32> to vector<32x48xbf16>
    %c0_7 = arith.constant 0 : index
    %c0_8 = arith.constant 0 : index
    %9 = vector.load %arg5[%c0_7, %c0_8] : memref<48x2688xbf16, #tpu.memory_space<vmem>>, vector<48x2688xbf16>
    %cst_9 = arith.constant dense<0.000000e+00> : vector<32x2688xf32>
    %10 = tpu.matmul %8, %9, %cst_9 {dimension_numbers = #tpu.dot_dimension_numbers<[1], [0], [0], [1], [0, 0, 1, 1], [], []>} : vector<32x48xbf16>, vector<48x2688xbf16>, vector<32x2688xf32> -> vector<32x2688xf32>
    %11 = vector.extract_strided_slice %6 {offsets = [0, 0], sizes = [8, 896], strides = [1, 1]} : vector<8x2688xf32> to vector<8x896xf32>
    %12 = vector.extract_strided_slice %6 {offsets = [0, 896], sizes = [8, 896], strides = [1, 1]} : vector<8x2688xf32> to vector<8x896xf32>
    %13 = vector.extract_strided_slice %6 {offsets = [0, 1792], sizes = [8, 896], strides = [1, 1]} : vector<8x2688xf32> to vector<8x896xf32>
    %cst_10 = arith.constant 0.000000e+00 : f32
    %14 = vector.broadcast %cst_10 : f32 to vector<8x48xf32>
    %15 = vector.extract_strided_slice %10 {offsets = [0, 0], sizes = [8, 896], strides = [1, 1]} : vector<32x2688xf32> to vector<8x896xf32>
    %16 = arith.mulf %15, %11 : vector<8x896xf32>
    %17 = vector.extract_strided_slice %10 {offsets = [8, 0], sizes = [8, 896], strides = [1, 1]} : vector<32x2688xf32> to vector<8x896xf32>
    %18 = arith.mulf %17, %12 : vector<8x896xf32>
    %19 = arith.addf %16, %18 : vector<8x896xf32>
    %20 = vector.extract_strided_slice %10 {offsets = [16, 0], sizes = [8, 896], strides = [1, 1]} : vector<32x2688xf32> to vector<8x896xf32>
    %21 = arith.mulf %20, %13 : vector<8x896xf32>
    %22 = arith.addf %19, %21 : vector<8x896xf32>
    %23 = vector.extract_strided_slice %10 {offsets = [24, 0], sizes = [8, 896], strides = [1, 1]} : vector<32x2688xf32> to vector<8x896xf32>
    %24 = arith.addf %22, %23 : vector<8x896xf32>
    %c0_11 = arith.constant 0 : index
    %c0_12 = arith.constant 0 : index
    %25 = vector.load %arg7[%c0_11, %c0_12] : memref<8x2688xf32, #tpu.memory_space<vmem>>, vector<8x896xf32>
    tpu.vector_store %arg7[%c0_11, %c0_12], %24 {strides = array<i32>} : memref<8x2688xf32, #tpu.memory_space<vmem>>, vector<8x896xf32>,
    %26 = arith.truncf %24 : vector<8x896xf32> to vector<8x896xbf16>
    %c0_13 = arith.constant 0 : index
    %c0_14 = arith.constant 0 : index
    %c0_15 = arith.constant 0 : index
    %27 = vector.load %arg6[%c0_13, %c0_14, %c0_15] : memref<3x896x48xbf16, #tpu.memory_space<vmem>>, vector<1x896x48xbf16>
    %28 = vector.shape_cast %27 : vector<1x896x48xbf16> to vector<896x48xbf16>
    %cst_16 = arith.constant dense<0.000000e+00> : vector<8x48xf32>
    %29 = tpu.matmul %26, %28, %cst_16 {dimension_numbers = #tpu.dot_dimension_numbers<[1], [0], [0], [1], [0, 0, 1, 1], [], []>} : vector<8x896xbf16>, vector<896x48xbf16>, vector<8x48xf32> -> vector<8x48xf32>
    %30 = arith.addf %14, %29 : vector<8x48xf32>
    %31 = vector.extract_strided_slice %10 {offsets = [0, 896], sizes = [8, 896], strides = [1, 1]} : vector<32x2688xf32> to vector<8x896xf32>
    %32 = arith.mulf %31, %11 : vector<8x896xf32>
    %33 = vector.extract_strided_slice %10 {offsets = [8, 896], sizes = [8, 896], strides = [1, 1]} : vector<32x2688xf32> to vector<8x896xf32>
    %34 = arith.mulf %33, %12 : vector<8x896xf32>
    %35 = arith.addf %32, %34 : vector<8x896xf32>
    %36 = vector.extract_strided_slice %10 {offsets = [16, 896], sizes = [8, 896], strides = [1, 1]} : vector<32x2688xf32> to vector<8x896xf32>
    %37 = arith.mulf %36, %13 : vector<8x896xf32>
    %38 = arith.addf %35, %37 : vector<8x896xf32>
    %39 = vector.extract_strided_slice %10 {offsets = [24, 896], sizes = [8, 896], strides = [1, 1]} : vector<32x2688xf32> to vector<8x896xf32>
    %40 = arith.addf %38, %39 : vector<8x896xf32>
    %c0_17 = arith.constant 0 : index
    %c896 = arith.constant 896 : index
    %41 = vector.load %arg7[%c0_17, %c896] : memref<8x2688xf32, #tpu.memory_space<vmem>>, vector<8x896xf32>
    tpu.vector_store %arg7[%c0_17, %c896], %40 {strides = array<i32>} : memref<8x2688xf32, #tpu.memory_space<vmem>>, vector<8x896xf32>,
    %42 = arith.truncf %40 : vector<8x896xf32> to vector<8x896xbf16>
    %c1 = arith.constant 1 : index
    %c0_18 = arith.constant 0 : index
    %c0_19 = arith.constant 0 : index
    %43 = vector.load %arg6[%c1, %c0_18, %c0_19] : memref<3x896x48xbf16, #tpu.memory_space<vmem>>, vector<1x896x48xbf16>
    %44 = vector.shape_cast %43 : vector<1x896x48xbf16> to vector<896x48xbf16>
    %cst_20 = arith.constant dense<0.000000e+00> : vector<8x48xf32>
    %45 = tpu.matmul %42, %44, %cst_20 {dimension_numbers = #tpu.dot_dimension_numbers<[1], [0], [0], [1], [0, 0, 1, 1], [], []>} : vector<8x896xbf16>, vector<896x48xbf16>, vector<8x48xf32> -> vector<8x48xf32>
    %46 = arith.addf %30, %45 : vector<8x48xf32>
    %47 = vector.extract_strided_slice %10 {offsets = [0, 1792], sizes = [8, 896], strides = [1, 1]} : vector<32x2688xf32> to vector<8x896xf32>
    %48 = arith.mulf %47, %11 : vector<8x896xf32>
    %49 = vector.extract_strided_slice %10 {offsets = [8, 1792], sizes = [8, 896], strides = [1, 1]} : vector<32x2688xf32> to vector<8x896xf32>
    %50 = arith.mulf %49, %12 : vector<8x896xf32>
    %51 = arith.addf %48, %50 : vector<8x896xf32>
    %52 = vector.extract_strided_slice %10 {offsets = [16, 1792], sizes = [8, 896], strides = [1, 1]} : vector<32x2688xf32> to vector<8x896xf32>
    %53 = arith.mulf %52, %13 : vector<8x896xf32>
    %54 = arith.addf %51, %53 : vector<8x896xf32>
    %55 = vector.extract_strided_slice %10 {offsets = [24, 1792], sizes = [8, 896], strides = [1, 1]} : vector<32x2688xf32> to vector<8x896xf32>
    %56 = arith.addf %54, %55 : vector<8x896xf32>
    %c0_21 = arith.constant 0 : index
    %c1792 = arith.constant 1792 : index
    %57 = vector.load %arg7[%c0_21, %c1792] : memref<8x2688xf32, #tpu.memory_space<vmem>>, vector<8x896xf32>
    tpu.vector_store %arg7[%c0_21, %c1792], %56 {strides = array<i32>} : memref<8x2688xf32, #tpu.memory_space<vmem>>, vector<8x896xf32>,
    %58 = arith.truncf %56 : vector<8x896xf32> to vector<8x896xbf16>
    %c2 = arith.constant 2 : index
    %c0_22 = arith.constant 0 : index
    %c0_23 = arith.constant 0 : index
    %59 = vector.load %arg6[%c2, %c0_22, %c0_23] : memref<3x896x48xbf16, #tpu.memory_space<vmem>>, vector<1x896x48xbf16>
    %60 = vector.shape_cast %59 : vector<1x896x48xbf16> to vector<896x48xbf16>
    %cst_24 = arith.constant dense<0.000000e+00> : vector<8x48xf32>
    %61 = tpu.matmul %58, %60, %cst_24 {dimension_numbers = #tpu.dot_dimension_numbers<[1], [0], [0], [1], [0, 0, 1, 1], [], []>} : vector<8x896xbf16>, vector<896x48xbf16>, vector<8x48xf32> -> vector<8x48xf32>
    %62 = arith.addf %46, %61 : vector<8x48xf32>
    %c0_25 = arith.constant 0 : index
    %c0_26 = arith.constant 0 : index
    %63 = vector.load %arg8[%c0_25, %c0_26] : memref<8x48xf32, #tpu.memory_space<vmem>>, vector<8x48xf32>
    tpu.vector_store %arg8[%c0_25, %c0_26], %62 {strides = array<i32>} : memref<8x48xf32, #tpu.memory_space<vmem>>, vector<8x48xf32>,
    return
  }
  func.func @transform_0(%arg0: i32) -> (i32, i32) {
    %c0_i32 = arith.constant 0 : i32
    %c0_i32_0 = arith.constant 0 : i32
    return %arg0, %c0_i32 : i32, i32
  }
  func.func @transform_1(%arg0: i32) -> (i32, i32) {
    %c0_i32 = arith.constant 0 : i32
    %c0_i32_0 = arith.constant 0 : i32
    return %arg0, %c0_i32 : i32, i32
  }
  func.func @transform_2(%arg0: i32) -> (i32, i32) {
    %c0_i32 = arith.constant 0 : i32
    %c0_i32_0 = arith.constant 0 : i32
    %c0_i32_1 = arith.constant 0 : i32
    return %c0_i32, %c0_i32_0 : i32, i32
  }
  func.func @transform_3(%arg0: i32) -> (i32, i32) {
    %c0_i32 = arith.constant 0 : i32
    %c0_i32_0 = arith.constant 0 : i32
    %c0_i32_1 = arith.constant 0 : i32
    return %c0_i32, %c0_i32_0 : i32, i32
  }
  func.func @transform_4(%arg0: i32) -> (i32, i32) {
    %c0_i32 = arith.constant 0 : i32
    %c0_i32_0 = arith.constant 0 : i32
    %c0_i32_1 = arith.constant 0 : i32
    return %c0_i32, %c0_i32_0 : i32, i32
  }
  func.func @transform_5(%arg0: i32) -> (i32, i32, i32) {
    %c0_i32 = arith.constant 0 : i32
    %c0_i32_0 = arith.constant 0 : i32
    %c0_i32_1 = arith.constant 0 : i32
    %c0_i32_2 = arith.constant 0 : i32
    return %c0_i32, %c0_i32_0, %c0_i32_1 : i32, i32, i32
  }
  func.func @transform_6(%arg0: i32) -> (i32, i32) {
    %c0_i32 = arith.constant 0 : i32
    %c0_i32_0 = arith.constant 0 : i32
    return %arg0, %c0_i32 : i32, i32
  }
  func.func @transform_7(%arg0: i32) -> (i32, i32) {
    %c0_i32 = arith.constant 0 : i32
    %c0_i32_0 = arith.constant 0 : i32
    return %arg0, %c0_i32 : i32, i32
  }
}

</mosaic_0001>

<llo_original>
// kernel: tpu_custom_call.1
$region0: #{tpu_custom_call.1}
  #allocation0 [shape = 'u32[]', space=smem, size = 0x4, offset = 0x4, fixed_abs, tag = 'smem constant byte address 0x4 - core index']
  #allocation1 [shape = 'u32[144,128]{1,0:T(1,128)}', space=vmem, size = 0x12000, scoped, tag = 'internal scratch']
  %s0 = inlined_call_operand.vmem [shape: f32[8,152], index: 0, kind: input, shape index: {}]
  %s1 = inlined_call_operand.vmem [shape: f32[32,48], index: 1, kind: input, shape index: {}]
  %s2 = inlined_call_operand.vmem [shape: bf16[152,2688], index: 2, kind: input, shape index: {}]
  %s3 = inlined_call_operand.vmem [shape: f32[1,2688], index: 3, kind: input, shape index: {}]
  %s4 = inlined_call_operand.hbm [shape: bf16[48,2688], index: 4, kind: input, shape index: {}]
  %s5 = inlined_call_operand.vmem [shape: bf16[3,896,48], index: 5, kind: input, shape index: {}]
  %s6 = inlined_call_operand.hbm [shape: f32[8,2688], index: 6, kind: output, shape index: {0}]
  %s7 = inlined_call_operand.hbm [shape: f32[8,48], index: 7, kind: output, shape index: {1}]
  %8 = xla_tuple %s6, %s7
  %s9 = sld [smem:[#allocation0]]
  $region46: #{tpu_custom_call.1} parent=0
    _
  %s11 = ssub.s32 1, %s9
  %s12 = scalar_select 0, %s11, %s9
  $region1: #{tpu_custom_call.1} parent=0
    #allocation2 [shape = 'u8[258048]{0}', space=vmem, size = 0x3f000, scoped, tag = 'input window, operand 4, single buffered']
    #allocation3 [shape = 's32[1]{0}', space=sflag, size = 0x4, scoped, tag = 'scoped memory for tpu_custom_call.1']
    #allocation4 [shape = 's32[1]{0}', space=sflag, size = 0x4, scoped, tag = 'scoped memory for tpu_custom_call.1']
    #allocation5 [shape = 'u8[86016]{0}', space=vmem, size = 0x15000, scoped, tag = 'output window, operand 0, single buffered']
    #allocation6 [shape = 'u8[4096]{0}', space=vmem, size = 0x1000, scoped, tag = 'output window, operand 1, single buffered']
    #allocation7 [shape = 's32[1]{0}', space=sflag, size = 0x4, scoped, tag = 'scoped memory for tpu_custom_call.1']
    %13 = vsyncpa [#allocation3], 0
    %14 = vsyncpa [#allocation4], 0
    %15 = vsyncpa [#allocation7], 0
    // Predicated region
    $region2: #{tpu_custom_call.1} parent=1 // pred_check
      _
    $region3: #{tpu_custom_call.1} parent=1 // pred_check_branch
      %17 = sbr.rel (0) target = $region5
    $region4: #{tpu_custom_call.1} parent=1 // pred_region
      _
    $region5: #{tpu_custom_call.1} parent=1 // pred_fallthru
      _
    // Predicated region
    $region6: #{tpu_custom_call.1} parent=1 // pred_check
      _
    $region7: #{tpu_custom_call.1} parent=1 // pred_check_branch
      %19 = sbr.rel (0) target = $region9
    $region8: #{tpu_custom_call.1} parent=1 // pred_region
      _
    $region9: #{tpu_custom_call.1} parent=1 // pred_fallthru
      _
    // Predicated region
    $region10: #{tpu_custom_call.1} parent=1 // pred_check
      _
    $region11: #{tpu_custom_call.1} parent=1 // pred_check_branch
      %21 = sbr.rel (0) target = $region13
    $region12: #{tpu_custom_call.1} parent=1 // pred_region
      _
    $region13: #{tpu_custom_call.1} parent=1 // pred_fallthru
      _
    // Predicated region
    $region14: #{tpu_custom_call.1} parent=1 // pred_check
      _
    $region15: #{tpu_custom_call.1} parent=1 // pred_check_branch
      %23 = sbr.rel (0) target = $region17
    $region16: #{tpu_custom_call.1} parent=1 // pred_region
      _
    $region17: #{tpu_custom_call.1} parent=1 // pred_fallthru
      _
    // Predicated region
    $region18: #{tpu_custom_call.1} parent=1 // pred_check
      _
    $region19: #{tpu_custom_call.1} parent=1 // pred_check_branch
      %25 = sbr.rel (0) target = $region21
    $region20: #{tpu_custom_call.1} parent=1 // pred_region
      %s27 = ssub.s32 8064, 8064
      %28 = vsyncadd [#allocation3], %s27
      %s29 = sshll.u32 [#allocation2], 4
      %s30 = int_to_ptr.vmem [resolvable:$true] %s29
      %35 = dma.hbm_to_vmem [thread:$0]  %s4, 8064, %s30, [#allocation3], 1344, 1344, 84
    $region21: #{tpu_custom_call.1} parent=1 // pred_fallthru
      _
    // Predicated region
    $region22: #{tpu_custom_call.1} parent=1 // pred_check
      _
    $region23: #{tpu_custom_call.1} parent=1 // pred_check_branch
      %37 = sbr.rel (0) target = $region25
    $region24: #{tpu_custom_call.1} parent=1 // pred_region
      _
    $region25: #{tpu_custom_call.1} parent=1 // pred_fallthru
      _
    // Predicated region
    $region26: #{tpu_custom_call.1} parent=1 // pred_check
      _
    $region27: #{tpu_custom_call.1} parent=1 // pred_check_branch
      %39 = sbr.rel (0) target = $region29
    $region28: #{tpu_custom_call.1} parent=1 // pred_region
      %40 = dma.done [#allocation3], 8064
    $region29: #{tpu_custom_call.1} parent=1 // pred_fallthru
      _
    %v42 = vld [vmem:[%s0] sm:$0xff]
    %v43 = vld [vmem:[%s0 + $0x8] sm:$0xff]
    %v44 = vpack.c.bf16 %v42, %v42
    %v45 = vpack.c.bf16 %v43, %v43
    %v46 = vld [vmem:[%s2] sm:$0xff]
    %v47 = vld [vmem:[%s2 + $0x8] sm:$0xff]
    %v48 = vld [vmem:[%s2 + $0x10] sm:$0xff]
    %v49 = vld [vmem:[%s2 + $0x18] sm:$0xff]
    %v50 = vld [vmem:[%s2 + $0x20] sm:$0xff]
    %v51 = vld [vmem:[%s2 + $0x28] sm:$0xff]
    %v52 = vld [vmem:[%s2 + $0x30] sm:$0xff]
    %v53 = vld [vmem:[%s2 + $0x38] sm:$0xff]
    %v54 = vld [vmem:[%s2 + $0x40] sm:$0xff]
    %v55 = vld [vmem:[%s2 + $0x48] sm:$0xff]
    %v56 = vld [vmem:[%s2 + $0x50] sm:$0xf]
    %v57 = vld [vmem:[%s2 + $0x54] sm:$0xff]
    %v58 = vld [vmem:[%s2 + $0x5c] sm:$0xff]
    %v59 = vld [vmem:[%s2 + $0x64] sm:$0xff]
    %v60 = vld [vmem:[%s2 + $0x6c] sm:$0xff]
    %v61 = vld [vmem:[%s2 + $0x74] sm:$0xff]
    %v62 = vld [vmem:[%s2 + $0x7c] sm:$0xff]
    %v63 = vld [vmem:[%s2 + $0x84] sm:$0xff]
    %v64 = vld [vmem:[%s2 + $0x8c] sm:$0xff]
    %v65 = vld [vmem:[%s2 + $0x94] sm:$0xff]
    %v66 = vld [vmem:[%s2 + $0x9c] sm:$0xff]
    %v67 = vld [vmem:[%s2 + $0xa4] sm:$0xf]
    %v68 = vld [vmem:[%s2 + $0xa8] sm:$0xff]
    %v69 = vld [vmem:[%s2 + $0xb0] sm:$0xff]
    %v70 = vld [vmem:[%s2 + $0xb8] sm:$0xff]
    %v71 = vld [vmem:[%s2 + $0xc0] sm:$0xff]
    %v72 = vld [vmem:[%s2 + $0xc8] sm:$0xff]
    %v73 = vld [vmem:[%s2 + $0xd0] sm:$0xff]
    %v74 = vld [vmem:[%s2 + $0xd8] sm:$0xff]
    %v75 = vld [vmem:[%s2 + $0xe0] sm:$0xff]
    %v76 = vld [vmem:[%s2 + $0xe8] sm:$0xff]
    %v77 = vld [vmem:[%s2 + $0xf0] sm:$0xff]
    %v78 = vld [vmem:[%s2 + $0xf8] sm:$0xf]
    %v79 = vld [vmem:[%s2 + $0xfc] sm:$0xff]
    %v80 = vld [vmem:[%s2 + $0x104] sm:$0xff]
    %v81 = vld [vmem:[%s2 + $0x10c] sm:$0xff]
    %v82 = vld [vmem:[%s2 + $0x114] sm:$0xff]
    %v83 = vld [vmem:[%s2 + $0x11c] sm:$0xff]
    %v84 = vld [vmem:[%s2 + $0x124] sm:$0xff]
    %v85 = vld [vmem:[%s2 + $0x12c] sm:$0xff]
    %v86 = vld [vmem:[%s2 + $0x134] sm:$0xff]
    %v87 = vld [vmem:[%s2 + $0x13c] sm:$0xff]
    %v88 = vld [vmem:[%s2 + $0x144] sm:$0xff]
    %v89 = vld [vmem:[%s2 + $0x14c] sm:$0xf]
    %v90 = vld [vmem:[%s2 + $0x150] sm:$0xff]
    %v91 = vld [vmem:[%s2 + $0x158] sm:$0xff]
    %v92 = vld [vmem:[%s2 + $0x160] sm:$0xff]
    %v93 = vld [vmem:[%s2 + $0x168] sm:$0xff]
    %v94 = vld [vmem:[%s2 + $0x170] sm:$0xff]
    %v95 = vld [vmem:[%s2 + $0x178] sm:$0xff]
    %v96 = vld [vmem:[%s2 + $0x180] sm:$0xff]
    %v97 = vld [vmem:[%s2 + $0x188] sm:$0xff]
    %v98 = vld [vmem:[%s2 + $0x190] sm:$0xff]
    %v99 = vld [vmem:[%s2 + $0x198] sm:$0xff]
    %v100 = vld [vmem:[%s2 + $0x1a0] sm:$0xf]
    %v101 = vld [vmem:[%s2 + $0x1a4] sm:$0xff]
    %v102 = vld [vmem:[%s2 + $0x1ac] sm:$0xff]
    %v103 = vld [vmem:[%s2 + $0x1b4] sm:$0xff]
    %v104 = vld [vmem:[%s2 + $0x1bc] sm:$0xff]
    %v105 = vld [vmem:[%s2 + $0x1c4] sm:$0xff]
    %v106 = vld [vmem:[%s2 + $0x1cc] sm:$0xff]
    %v107 = vld [vmem:[%s2 + $0x1d4] sm:$0xff]
    %v108 = vld [vmem:[%s2 + $0x1dc] sm:$0xff]
    %v109 = vld [vmem:[%s2 + $0x1e4] sm:$0xff]
    %v110 = vld [vmem:[%s2 + $0x1ec] sm:$0xff]
    %v111 = vld [vmem:[%s2 + $0x1f4] sm:$0xf]
    %v112 = vld [vmem:[%s2 + $0x1f8] sm:$0xff]
    %v113 = vld [vmem:[%s2 + $0x200] sm:$0xff]
    %v114 = vld [vmem:[%s2 + $0x208] sm:$0xff]
    %v115 = vld [vmem:[%s2 + $0x210] sm:$0xff]
    %v116 = vld [vmem:[%s2 + $0x218] sm:$0xff]
    %v117 = vld [vmem:[%s2 + $0x220] sm:$0xff]
    %v118 = vld [vmem:[%s2 + $0x228] sm:$0xff]
    %v119 = vld [vmem:[%s2 + $0x230] sm:$0xff]
    %v120 = vld [vmem:[%s2 + $0x238] sm:$0xff]
    %v121 = vld [vmem:[%s2 + $0x240] sm:$0xff]
    %v122 = vld [vmem:[%s2 + $0x248] sm:$0xf]
    %v123 = vld [vmem:[%s2 + $0x24c] sm:$0xff]
    %v124 = vld [vmem:[%s2 + $0x254] sm:$0xff]
    %v125 = vld [vmem:[%s2 + $0x25c] sm:$0xff]
    %v126 = vld [vmem:[%s2 + $0x264] sm:$0xff]
    %v127 = vld [vmem:[%s2 + $0x26c] sm:$0xff]
    %v128 = vld [vmem:[%s2 + $0x274] sm:$0xff]
    %v129 = vld [vmem:[%s2 + $0x27c] sm:$0xff]
    %v130 = vld [vmem:[%s2 + $0x284] sm:$0xff]
    %v131 = vld [vmem:[%s2 + $0x28c] sm:$0xff]
    %v132 = vld [vmem:[%s2 + $0x294] sm:$0xff]
    %v133 = vld [vmem:[%s2 + $0x29c] sm:$0xf]
    %v134 = vld [vmem:[%s2 + $0x2a0] sm:$0xff]
    %v135 = vld [vmem:[%s2 + $0x2a8] sm:$0xff]
    %v136 = vld [vmem:[%s2 + $0x2b0] sm:$0xff]
    %v137 = vld [vmem:[%s2 + $0x2b8] sm:$0xff]
    %v138 = vld [vmem:[%s2 + $0x2c0] sm:$0xff]
    %v139 = vld [vmem:[%s2 + $0x2c8] sm:$0xff]
    %v140 = vld [vmem:[%s2 + $0x2d0] sm:$0xff]
    %v141 = vld [vmem:[%s2 + $0x2d8] sm:$0xff]
    %v142 = vld [vmem:[%s2 + $0x2e0] sm:$0xff]
    %v143 = vld [vmem:[%s2 + $0x2e8] sm:$0xff]
    %v144 = vld [vmem:[%s2 + $0x2f0] sm:$0xf]
    %v145 = vld [vmem:[%s2 + $0x2f4] sm:$0xff]
    %v146 = vld [vmem:[%s2 + $0x2fc] sm:$0xff]
    %v147 = vld [vmem:[%s2 + $0x304] sm:$0xff]
    %v148 = vld [vmem:[%s2 + $0x30c] sm:$0xff]
    %v149 = vld [vmem:[%s2 + $0x314] sm:$0xff]
    %v150 = vld [vmem:[%s2 + $0x31c] sm:$0xff]
    %v151 = vld [vmem:[%s2 + $0x324] sm:$0xff]
    %v152 = vld [vmem:[%s2 + $0x32c] sm:$0xff]
    %v153 = vld [vmem:[%s2 + $0x334] sm:$0xff]
    %v154 = vld [vmem:[%s2 + $0x33c] sm:$0xff]
    %v155 = vld [vmem:[%s2 + $0x344] sm:$0xf]
    %v156 = vld [vmem:[%s2 + $0x348] sm:$0xff]
    %v157 = vld [vmem:[%s2 + $0x350] sm:$0xff]
    %v158 = vld [vmem:[%s2 + $0x358] sm:$0xff]
    %v159 = vld [vmem:[%s2 + $0x360] sm:$0xff]
    %v160 = vld [vmem:[%s2 + $0x368] sm:$0xff]
    %v161 = vld [vmem:[%s2 + $0x370] sm:$0xff]
    %v162 = vld [vmem:[%s2 + $0x378] sm:$0xff]
    %v163 = vld [vmem:[%s2 + $0x380] sm:$0xff]
    %v164 = vld [vmem:[%s2 + $0x388] sm:$0xff]
    %v165 = vld [vmem:[%s2 + $0x390] sm:$0xff]
    %v166 = vld [vmem:[%s2 + $0x398] sm:$0xf]
    %v167 = vld [vmem:[%s2 + $0x39c] sm:$0xff]
    %v168 = vld [vmem:[%s2 + $0x3a4] sm:$0xff]
    %v169 = vld [vmem:[%s2 + $0x3ac] sm:$0xff]
    %v170 = vld [vmem:[%s2 + $0x3b4] sm:$0xff]
    %v171 = vld [vmem:[%s2 + $0x3bc] sm:$0xff]
    %v172 = vld [vmem:[%s2 + $0x3c4] sm:$0xff]
    %v173 = vld [vmem:[%s2 + $0x3cc] sm:$0xff]
    %v174 = vld [vmem:[%s2 + $0x3d4] sm:$0xff]
    %v175 = vld [vmem:[%s2 + $0x3dc] sm:$0xff]
    %v176 = vld [vmem:[%s2 + $0x3e4] sm:$0xff]
    %v177 = vld [vmem:[%s2 + $0x3ec] sm:$0xf]
    %v178 = vld [vmem:[%s2 + $0x3f0] sm:$0xff]
    %v179 = vld [vmem:[%s2 + $0x3f8] sm:$0xff]
    %v180 = vld [vmem:[%s2 + $0x400] sm:$0xff]
    %v181 = vld [vmem:[%s2 + $0x408] sm:$0xff]
    %v182 = vld [vmem:[%s2 + $0x410] sm:$0xff]
    %v183 = vld [vmem:[%s2 + $0x418] sm:$0xff]
    %v184 = vld [vmem:[%s2 + $0x420] sm:$0xff]
    %v185 = vld [vmem:[%s2 + $0x428] sm:$0xff]
    %v186 = vld [vmem:[%s2 + $0x430] sm:$0xff]
    %v187 = vld [vmem:[%s2 + $0x438] sm:$0xff]
    %v188 = vld [vmem:[%s2 + $0x440] sm:$0xf]
    %v189 = vld [vmem:[%s2 + $0x444] sm:$0xff]
    %v190 = vld [vmem:[%s2 + $0x44c] sm:$0xff]
    %v191 = vld [vmem:[%s2 + $0x454] sm:$0xff]
    %v192 = vld [vmem:[%s2 + $0x45c] sm:$0xff]
    %v193 = vld [vmem:[%s2 + $0x464] sm:$0xff]
    %v194 = vld [vmem:[%s2 + $0x46c] sm:$0xff]
    %v195 = vld [vmem:[%s2 + $0x474] sm:$0xff]
    %v196 = vld [vmem:[%s2 + $0x47c] sm:$0xff]
    %v197 = vld [vmem:[%s2 + $0x484] sm:$0xff]
    %v198 = vld [vmem:[%s2 + $0x48c] sm:$0xff]
    %v199 = vld [vmem:[%s2 + $0x494] sm:$0xf]
    %v200 = vld [vmem:[%s2 + $0x498] sm:$0xff]
    %v201 = vld [vmem:[%s2 + $0x4a0] sm:$0xff]
    %v202 = vld [vmem:[%s2 + $0x4a8] sm:$0xff]
    %v203 = vld [vmem:[%s2 + $0x4b0] sm:$0xff]
    %v204 = vld [vmem:[%s2 + $0x4b8] sm:$0xff]
    %v205 = vld [vmem:[%s2 + $0x4c0] sm:$0xff]
    %v206 = vld [vmem:[%s2 + $0x4c8] sm:$0xff]
    %v207 = vld [vmem:[%s2 + $0x4d0] sm:$0xff]
    %v208 = vld [vmem:[%s2 + $0x4d8] sm:$0xff]
    %v209 = vld [vmem:[%s2 + $0x4e0] sm:$0xff]
    %v210 = vld [vmem:[%s2 + $0x4e8] sm:$0xf]
    %v211 = vld [vmem:[%s2 + $0x4ec] sm:$0xff]
    %v212 = vld [vmem:[%s2 + $0x4f4] sm:$0xff]
    %v213 = vld [vmem:[%s2 + $0x4fc] sm:$0xff]
    %v214 = vld [vmem:[%s2 + $0x504] sm:$0xff]
    %v215 = vld [vmem:[%s2 + $0x50c] sm:$0xff]
    %v216 = vld [vmem:[%s2 + $0x514] sm:$0xff]
    %v217 = vld [vmem:[%s2 + $0x51c] sm:$0xff]
    %v218 = vld [vmem:[%s2 + $0x524] sm:$0xff]
    %v219 = vld [vmem:[%s2 + $0x52c] sm:$0xff]
    %v220 = vld [vmem:[%s2 + $0x534] sm:$0xff]
    %v221 = vld [vmem:[%s2 + $0x53c] sm:$0xf]
    %v222 = vld [vmem:[%s2 + $0x540] sm:$0xff]
    %v223 = vld [vmem:[%s2 + $0x548] sm:$0xff]
    %v224 = vld [vmem:[%s2 + $0x550] sm:$0xff]
    %v225 = vld [vmem:[%s2 + $0x558] sm:$0xff]
    %v226 = vld [vmem:[%s2 + $0x560] sm:$0xff]
    %v227 = vld [vmem:[%s2 + $0x568] sm:$0xff]
    %v228 = vld [vmem:[%s2 + $0x570] sm:$0xff]
    %v229 = vld [vmem:[%s2 + $0x578] sm:$0xff]
    %v230 = vld [vmem:[%s2 + $0x580] sm:$0xff]
    %v231 = vld [vmem:[%s2 + $0x588] sm:$0xff]
    %v232 = vld [vmem:[%s2 + $0x590] sm:$0xf]
    %v233 = vld [vmem:[%s2 + $0x594] sm:$0xff]
    %v234 = vld [vmem:[%s2 + $0x59c] sm:$0xff]
    %v235 = vld [vmem:[%s2 + $0x5a4] sm:$0xff]
    %v236 = vld [vmem:[%s2 + $0x5ac] sm:$0xff]
    %v237 = vld [vmem:[%s2 + $0x5b4] sm:$0xff]
    %v238 = vld [vmem:[%s2 + $0x5bc] sm:$0xff]
    %v239 = vld [vmem:[%s2 + $0x5c4] sm:$0xff]
    %v240 = vld [vmem:[%s2 + $0x5cc] sm:$0xff]
    %v241 = vld [vmem:[%s2 + $0x5d4] sm:$0xff]
    %v242 = vld [vmem:[%s2 + $0x5dc] sm:$0xff]
    %v243 = vld [vmem:[%s2 + $0x5e4] sm:$0xf]
    %v244 = vld [vmem:[%s2 + $0x5e8] sm:$0xff]
    %v245 = vld [vmem:[%s2 + $0x5f0] sm:$0xff]
    %v246 = vld [vmem:[%s2 + $0x5f8] sm:$0xff]
    %v247 = vld [vmem:[%s2 + $0x600] sm:$0xff]
    %v248 = vld [vmem:[%s2 + $0x608] sm:$0xff]
    %v249 = vld [vmem:[%s2 + $0x610] sm:$0xff]
    %v250 = vld [vmem:[%s2 + $0x618] sm:$0xff]
    %v251 = vld [vmem:[%s2 + $0x620] sm:$0xff]
    %v252 = vld [vmem:[%s2 + $0x628] sm:$0xff]
    %v253 = vld [vmem:[%s2 + $0x630] sm:$0xff]
    %v254 = vld [vmem:[%s2 + $0x638] sm:$0xf]
    %v255 = vld [vmem:[%s3] sm:$0xff]
    %v256 = vld [vmem:[%s3 + $0x8] sm:$0xff]
    %v257 = vld [vmem:[%s3 + $0x10] sm:$0x1f]
    %v261 = vlaneseq
    %v262 = vshrl.u32 %v261, 7
    %v263 = vsub.s32 0, %v262
    %v264 = vrot.slane %v255, %v263
    %v265 = vlaneseq
    %v266 = vshrl.u32 %v265, 7
    %v267 = vsub.s32 1, %v266
    %v268 = vrot.slane %v255, %v267
    %v269 = vlaneseq
    %v270 = vshrl.u32 %v269, 7
    %v271 = vsub.s32 2, %v270
    %v272 = vrot.slane %v255, %v271
    %v273 = vlaneseq
    %v274 = vshrl.u32 %v273, 7
    %v275 = vsub.s32 3, %v274
    %v276 = vrot.slane %v255, %v275
    %v277 = vlaneseq
    %v278 = vshrl.u32 %v277, 7
    %v279 = vsub.s32 4, %v278
    %v280 = vrot.slane %v255, %v279
    %v281 = vlaneseq
    %v282 = vshrl.u32 %v281, 7
    %v283 = vsub.s32 5, %v282
    %v284 = vrot.slane %v255, %v283
    %v285 = vlaneseq
    %v286 = vshrl.u32 %v285, 7
    %v287 = vsub.s32 6, %v286
    %v288 = vrot.slane %v255, %v287
    %v289 = vlaneseq
    %v290 = vshrl.u32 %v289, 7
    %v291 = vsub.s32 7, %v290
    %v292 = vrot.slane %v255, %v291
    %v293 = vlaneseq
    %v294 = vshrl.u32 %v293, 7
    %v295 = vsub.s32 0, %v294
    %v296 = vrot.slane %v256, %v295
    %v297 = vlaneseq
    %v298 = vshrl.u32 %v297, 7
    %v299 = vsub.s32 1, %v298
    %v300 = vrot.slane %v256, %v299
    %v301 = vlaneseq
    %v302 = vshrl.u32 %v301, 7
    %v303 = vsub.s32 2, %v302
    %v304 = vrot.slane %v256, %v303
    %v305 = vlaneseq
    %v306 = vshrl.u32 %v305, 7
    %v307 = vsub.s32 3, %v306
    %v308 = vrot.slane %v256, %v307
    %v309 = vlaneseq
    %v310 = vshrl.u32 %v309, 7
    %v311 = vsub.s32 4, %v310
    %v312 = vrot.slane %v256, %v311
    %v313 = vlaneseq
    %v314 = vshrl.u32 %v313, 7
    %v315 = vsub.s32 5, %v314
    %v316 = vrot.slane %v256, %v315
    %v317 = vlaneseq
    %v318 = vshrl.u32 %v317, 7
    %v319 = vsub.s32 6, %v318
    %v320 = vrot.slane %v256, %v319
    %v321 = vlaneseq
    %v322 = vshrl.u32 %v321, 7
    %v323 = vsub.s32 7, %v322
    %v324 = vrot.slane %v256, %v323
    %v325 = vlaneseq
    %v326 = vshrl.u32 %v325, 7
    %v327 = vsub.s32 0, %v326
    %v328 = vrot.slane %v257, %v327
    %v329 = vlaneseq
    %v330 = vshrl.u32 %v329, 7
    %v331 = vsub.s32 1, %v330
    %v332 = vrot.slane %v257, %v331
    %v333 = vlaneseq
    %v334 = vshrl.u32 %v333, 7
    %v335 = vsub.s32 2, %v334
    %v336 = vrot.slane %v257, %v335
    %v337 = vlaneseq
    %v338 = vshrl.u32 %v337, 7
    %v339 = vsub.s32 3, %v338
    %v340 = vrot.slane %v257, %v339
    %v341 = vlaneseq
    %v342 = vshrl.u32 %v341, 7
    %v343 = vsub.s32 4, %v342
    %v344 = vrot.slane %v257, %v343
    %v575 = vunpack.c.l.b16 %v46
    %v576 = vunpack.c.h.b16 %v46
    %v577 = vunpack.c.l.b16 %v47
    %v578 = vunpack.c.h.b16 %v47
    %v579 = vunpack.c.l.b16 %v48
    %v580 = vunpack.c.h.b16 %v48
    %v581 = vunpack.c.l.b16 %v49
    %v582 = vunpack.c.h.b16 %v49
    %v583 = vunpack.c.l.b16 %v50
    %v584 = vunpack.c.h.b16 %v50
    %v585 = vunpack.c.l.b16 %v51
    %v586 = vunpack.c.h.b16 %v51
    %v587 = vunpack.c.l.b16 %v52
    %v588 = vunpack.c.h.b16 %v52
    %v589 = vunpack.c.l.b16 %v53
    %v590 = vunpack.c.h.b16 %v53
    %v591 = vunpack.c.l.b16 %v54
    %v592 = vunpack.c.h.b16 %v54
    %v593 = vunpack.c.l.b16 %v55
    %v594 = vunpack.c.h.b16 %v55
    %v595 = vunpack.c.l.b16 %v56
    %v596 = vunpack.c.l.b16 %v57
    %v597 = vunpack.c.h.b16 %v57
    %v598 = vunpack.c.l.b16 %v58
    %v599 = vunpack.c.h.b16 %v58
    %v600 = vunpack.c.l.b16 %v59
    %v601 = vunpack.c.h.b16 %v59
    %v602 = vunpack.c.l.b16 %v60
    %v603 = vunpack.c.h.b16 %v60
    %v604 = vunpack.c.l.b16 %v61
    %v605 = vunpack.c.h.b16 %v61
    %v606 = vunpack.c.l.b16 %v62
    %v607 = vunpack.c.h.b16 %v62
    %v608 = vunpack.c.l.b16 %v63
    %v609 = vunpack.c.h.b16 %v63
    %v610 = vunpack.c.l.b16 %v64
    %v611 = vunpack.c.h.b16 %v64
    %v612 = vunpack.c.l.b16 %v65
    %v613 = vunpack.c.h.b16 %v65
    %v614 = vunpack.c.l.b16 %v66
    %v615 = vunpack.c.h.b16 %v66
    %v616 = vunpack.c.l.b16 %v67
    %v617 = vunpack.c.l.b16 %v68
    %v618 = vunpack.c.h.b16 %v68
    %v619 = vunpack.c.l.b16 %v69
    %v620 = vunpack.c.h.b16 %v69
    %v621 = vunpack.c.l.b16 %v70
    %v622 = vunpack.c.h.b16 %v70
    %v623 = vunpack.c.l.b16 %v71
    %v624 = vunpack.c.h.b16 %v71
    %v625 = vunpack.c.l.b16 %v72
    %v626 = vunpack.c.h.b16 %v72
    %v627 = vunpack.c.l.b16 %v73
    %v628 = vunpack.c.h.b16 %v73
    %v629 = vunpack.c.l.b16 %v74
    %v630 = vunpack.c.h.b16 %v74
    %v631 = vunpack.c.l.b16 %v75
    %v632 = vunpack.c.h.b16 %v75
    %v633 = vunpack.c.l.b16 %v76
    %v634 = vunpack.c.h.b16 %v76
    %v635 = vunpack.c.l.b16 %v77
    %v636 = vunpack.c.h.b16 %v77
    %v637 = vunpack.c.l.b16 %v78
    %v638 = vunpack.c.l.b16 %v79
    %v639 = vunpack.c.h.b16 %v79
    %v640 = vunpack.c.l.b16 %v80
    %v641 = vunpack.c.h.b16 %v80
    %v642 = vunpack.c.l.b16 %v81
    %v643 = vunpack.c.h.b16 %v81
    %v644 = vunpack.c.l.b16 %v82
    %v645 = vunpack.c.h.b16 %v82
    %v646 = vunpack.c.l.b16 %v83
    %v647 = vunpack.c.h.b16 %v83
    %v648 = vunpack.c.l.b16 %v84
    %v649 = vunpack.c.h.b16 %v84
    %v650 = vunpack.c.l.b16 %v85
    %v651 = vunpack.c.h.b16 %v85
    %v652 = vunpack.c.l.b16 %v86
    %v653 = vunpack.c.h.b16 %v86
    %v654 = vunpack.c.l.b16 %v87
    %v655 = vunpack.c.h.b16 %v87
    %v656 = vunpack.c.l.b16 %v88
    %v657 = vunpack.c.h.b16 %v88
    %v658 = vunpack.c.l.b16 %v89
    %v659 = vunpack.c.l.b16 %v90
    %v660 = vunpack.c.h.b16 %v90
    %v661 = vunpack.c.l.b16 %v91
    %v662 = vunpack.c.h.b16 %v91
    %v663 = vunpack.c.l.b16 %v92
    %v664 = vunpack.c.h.b16 %v92
    %v665 = vunpack.c.l.b16 %v93
    %v666 = vunpack.c.h.b16 %v93
    %v667 = vunpack.c.l.b16 %v94
    %v668 = vunpack.c.h.b16 %v94
    %v669 = vunpack.c.l.b16 %v95
    %v670 = vunpack.c.h.b16 %v95
    %v671 = vunpack.c.l.b16 %v96
    %v672 = vunpack.c.h.b16 %v96
    %v673 = vunpack.c.l.b16 %v97
    %v674 = vunpack.c.h.b16 %v97
    %v675 = vunpack.c.l.b16 %v98
    %v676 = vunpack.c.h.b16 %v98
    %v677 = vunpack.c.l.b16 %v99
    %v678 = vunpack.c.h.b16 %v99
    %v679 = vunpack.c.l.b16 %v100
    %v680 = vunpack.c.l.b16 %v101
    %v681 = vunpack.c.h.b16 %v101
    %v682 = vunpack.c.l.b16 %v102
    %v683 = vunpack.c.h.b16 %v102
    %v684 = vunpack.c.l.b16 %v103
    %v685 = vunpack.c.h.b16 %v103
    %v686 = vunpack.c.l.b16 %v104
    %v687 = vunpack.c.h.b16 %v104
    %v688 = vunpack.c.l.b16 %v105
    %v689 = vunpack.c.h.b16 %v105
    %v690 = vunpack.c.l.b16 %v106
    %v691 = vunpack.c.h.b16 %v106
    %v692 = vunpack.c.l.b16 %v107
    %v693 = vunpack.c.h.b16 %v107
    %v694 = vunpack.c.l.b16 %v108
    %v695 = vunpack.c.h.b16 %v108
    %v696 = vunpack.c.l.b16 %v109
    %v697 = vunpack.c.h.b16 %v109
    %v698 = vunpack.c.l.b16 %v110
    %v699 = vunpack.c.h.b16 %v110
    %v700 = vunpack.c.l.b16 %v111
    %v701 = vunpack.c.l.b16 %v112
    %v702 = vunpack.c.h.b16 %v112
    %v703 = vunpack.c.l.b16 %v113
    %v704 = vunpack.c.h.b16 %v113
    %v705 = vunpack.c.l.b16 %v114
    %v706 = vunpack.c.h.b16 %v114
    %v707 = vunpack.c.l.b16 %v115
    %v708 = vunpack.c.h.b16 %v115
    %v709 = vunpack.c.l.b16 %v116
    %v710 = vunpack.c.h.b16 %v116
    %v711 = vunpack.c.l.b16 %v117
    %v712 = vunpack.c.h.b16 %v117
    %v713 = vunpack.c.l.b16 %v118
    %v714 = vunpack.c.h.b16 %v118
    %v715 = vunpack.c.l.b16 %v119
    %v716 = vunpack.c.h.b16 %v119
    %v717 = vunpack.c.l.b16 %v120
    %v718 = vunpack.c.h.b16 %v120
    %v719 = vunpack.c.l.b16 %v121
    %v720 = vunpack.c.h.b16 %v121
    %v721 = vunpack.c.l.b16 %v122
    %v722 = vunpack.c.l.b16 %v123
    %v723 = vunpack.c.h.b16 %v123
    %v724 = vunpack.c.l.b16 %v124
    %v725 = vunpack.c.h.b16 %v124
    %v726 = vunpack.c.l.b16 %v125
    %v727 = vunpack.c.h.b16 %v125
    %v728 = vunpack.c.l.b16 %v126
    %v729 = vunpack.c.h.b16 %v126
    %v730 = vunpack.c.l.b16 %v127
    %v731 = vunpack.c.h.b16 %v127
    %v732 = vunpack.c.l.b16 %v128
    %v733 = vunpack.c.h.b16 %v128
    %v734 = vunpack.c.l.b16 %v129
    %v735 = vunpack.c.h.b16 %v129
    %v736 = vunpack.c.l.b16 %v130
    %v737 = vunpack.c.h.b16 %v130
    %v738 = vunpack.c.l.b16 %v131
    %v739 = vunpack.c.h.b16 %v131
    %v740 = vunpack.c.l.b16 %v132
    %v741 = vunpack.c.h.b16 %v132
    %v742 = vunpack.c.l.b16 %v133
    %v743 = vunpack.c.l.b16 %v134
    %v744 = vunpack.c.h.b16 %v134
    %v745 = vunpack.c.l.b16 %v135
    %v746 = vunpack.c.h.b16 %v135
    %v747 = vunpack.c.l.b16 %v136
    %v748 = vunpack.c.h.b16 %v136
    %v749 = vunpack.c.l.b16 %v137
    %v750 = vunpack.c.h.b16 %v137
    %v751 = vunpack.c.l.b16 %v138
    %v752 = vunpack.c.h.b16 %v138
    %v753 = vunpack.c.l.b16 %v139
    %v754 = vunpack.c.h.b16 %v139
    %v755 = vunpack.c.l.b16 %v140
    %v756 = vunpack.c.h.b16 %v140
    %v757 = vunpack.c.l.b16 %v141
    %v758 = vunpack.c.h.b16 %v141
    %v759 = vunpack.c.l.b16 %v142
    %v760 = vunpack.c.h.b16 %v142
    %v761 = vunpack.c.l.b16 %v143
    %v762 = vunpack.c.h.b16 %v143
    %v763 = vunpack.c.l.b16 %v144
    %v764 = vunpack.c.l.b16 %v145
    %v765 = vunpack.c.h.b16 %v145
    %v766 = vunpack.c.l.b16 %v146
    %v767 = vunpack.c.h.b16 %v146
    %v768 = vunpack.c.l.b16 %v147
    %v769 = vunpack.c.h.b16 %v147
    %v770 = vunpack.c.l.b16 %v148
    %v771 = vunpack.c.h.b16 %v148
    %v772 = vunpack.c.l.b16 %v149
    %v773 = vunpack.c.h.b16 %v149
    %v774 = vunpack.c.l.b16 %v150
    %v775 = vunpack.c.h.b16 %v150
    %v776 = vunpack.c.l.b16 %v151
    %v777 = vunpack.c.h.b16 %v151
    %v778 = vunpack.c.l.b16 %v152
    %v779 = vunpack.c.h.b16 %v152
    %v780 = vunpack.c.l.b16 %v153
    %v781 = vunpack.c.h.b16 %v153
    %v782 = vunpack.c.l.b16 %v154
    %v783 = vunpack.c.h.b16 %v154
    %v784 = vunpack.c.l.b16 %v155
    %v785 = vunpack.c.l.b16 %v156
    %v786 = vunpack.c.h.b16 %v156
    %v787 = vunpack.c.l.b16 %v157
    %v788 = vunpack.c.h.b16 %v157
    %v789 = vunpack.c.l.b16 %v158
    %v790 = vunpack.c.h.b16 %v158
    %v791 = vunpack.c.l.b16 %v159
    %v792 = vunpack.c.h.b16 %v159
    %v793 = vunpack.c.l.b16 %v160
    %v794 = vunpack.c.h.b16 %v160
    %v795 = vunpack.c.l.b16 %v161
    %v796 = vunpack.c.h.b16 %v161
    %v797 = vunpack.c.l.b16 %v162
    %v798 = vunpack.c.h.b16 %v162
    %v799 = vunpack.c.l.b16 %v163
    %v800 = vunpack.c.h.b16 %v163
    %v801 = vunpack.c.l.b16 %v164
    %v802 = vunpack.c.h.b16 %v164
    %v803 = vunpack.c.l.b16 %v165
    %v804 = vunpack.c.h.b16 %v165
    %v805 = vunpack.c.l.b16 %v166
    %v806 = vunpack.c.l.b16 %v167
    %v807 = vunpack.c.h.b16 %v167
    %v808 = vunpack.c.l.b16 %v168
    %v809 = vunpack.c.h.b16 %v168
    %v810 = vunpack.c.l.b16 %v169
    %v811 = vunpack.c.h.b16 %v169
    %v812 = vunpack.c.l.b16 %v170
    %v813 = vunpack.c.h.b16 %v170
    %v814 = vunpack.c.l.b16 %v171
    %v815 = vunpack.c.h.b16 %v171
    %v816 = vunpack.c.l.b16 %v172
    %v817 = vunpack.c.h.b16 %v172
    %v818 = vunpack.c.l.b16 %v173
    %v819 = vunpack.c.h.b16 %v173
    %v820 = vunpack.c.l.b16 %v174
    %v821 = vunpack.c.h.b16 %v174
    %v822 = vunpack.c.l.b16 %v175
    %v823 = vunpack.c.h.b16 %v175
    %v824 = vunpack.c.l.b16 %v176
    %v825 = vunpack.c.h.b16 %v176
    %v826 = vunpack.c.l.b16 %v177
    %v827 = vunpack.c.l.b16 %v178
    %v828 = vunpack.c.h.b16 %v178
    %v829 = vunpack.c.l.b16 %v179
    %v830 = vunpack.c.h.b16 %v179
    %v831 = vunpack.c.l.b16 %v180
    %v832 = vunpack.c.h.b16 %v180
    %v833 = vunpack.c.l.b16 %v181
    %v834 = vunpack.c.h.b16 %v181
    %v835 = vunpack.c.l.b16 %v182
    %v836 = vunpack.c.h.b16 %v182
    %v837 = vunpack.c.l.b16 %v183
    %v838 = vunpack.c.h.b16 %v183
    %v839 = vunpack.c.l.b16 %v184
    %v840 = vunpack.c.h.b16 %v184
    %v841 = vunpack.c.l.b16 %v185
    %v842 = vunpack.c.h.b16 %v185
    %v843 = vunpack.c.l.b16 %v186
    %v844 = vunpack.c.h.b16 %v186
    %v845 = vunpack.c.l.b16 %v187
    %v846 = vunpack.c.h.b16 %v187
    %v847 = vunpack.c.l.b16 %v188
    %v848 = vunpack.c.l.b16 %v189
    %v849 = vunpack.c.h.b16 %v189
    %v850 = vunpack.c.l.b16 %v190
    %v851 = vunpack.c.h.b16 %v190
    %v852 = vunpack.c.l.b16 %v191
    %v853 = vunpack.c.h.b16 %v191
    %v854 = vunpack.c.l.b16 %v192
    %v855 = vunpack.c.h.b16 %v192
    %v856 = vunpack.c.l.b16 %v193
    %v857 = vunpack.c.h.b16 %v193
    %v858 = vunpack.c.l.b16 %v194
    %v859 = vunpack.c.h.b16 %v194
    %v860 = vunpack.c.l.b16 %v195
    %v861 = vunpack.c.h.b16 %v195
    %v862 = vunpack.c.l.b16 %v196
    %v863 = vunpack.c.h.b16 %v196
    %v864 = vunpack.c.l.b16 %v197
    %v865 = vunpack.c.h.b16 %v197
    %v866 = vunpack.c.l.b16 %v198
    %v867 = vunpack.c.h.b16 %v198
    %v868 = vunpack.c.l.b16 %v199
    %v869 = vunpack.c.l.b16 %v200
    %v870 = vunpack.c.h.b16 %v200
    %v871 = vunpack.c.l.b16 %v201
    %v872 = vunpack.c.h.b16 %v201
    %v873 = vunpack.c.l.b16 %v202
    %v874 = vunpack.c.h.b16 %v202
    %v875 = vunpack.c.l.b16 %v203
    %v876 = vunpack.c.h.b16 %v203
    %v877 = vunpack.c.l.b16 %v204
    %v878 = vunpack.c.h.b16 %v204
    %v879 = vunpack.c.l.b16 %v205
    %v880 = vunpack.c.h.b16 %v205
    %v881 = vunpack.c.l.b16 %v206
    %v882 = vunpack.c.h.b16 %v206
    %v883 = vunpack.c.l.b16 %v207
    %v884 = vunpack.c.h.b16 %v207
    %v885 = vunpack.c.l.b16 %v208
    %v886 = vunpack.c.h.b16 %v208
    %v887 = vunpack.c.l.b16 %v209
    %v888 = vunpack.c.h.b16 %v209
    %v889 = vunpack.c.l.b16 %v210
    %v890 = vunpack.c.l.b16 %v211
    %v891 = vunpack.c.h.b16 %v211
    %v892 = vunpack.c.l.b16 %v212
    %v893 = vunpack.c.h.b16 %v212
    %v894 = vunpack.c.l.b16 %v213
    %v895 = vunpack.c.h.b16 %v213
    %v896 = vunpack.c.l.b16 %v214
    %v897 = vunpack.c.h.b16 %v214
    %v898 = vunpack.c.l.b16 %v215
    %v899 = vunpack.c.h.b16 %v215
    %v900 = vunpack.c.l.b16 %v216
    %v901 = vunpack.c.h.b16 %v216
    %v902 = vunpack.c.l.b16 %v217
    %v903 = vunpack.c.h.b16 %v217
    %v904 = vunpack.c.l.b16 %v218
    %v905 = vunpack.c.h.b16 %v218
    %v906 = vunpack.c.l.b16 %v219
    %v907 = vunpack.c.h.b16 %v219
    %v908 = vunpack.c.l.b16 %v220
    %v909 = vunpack.c.h.b16 %v220
    %v910 = vunpack.c.l.b16 %v221
    %v911 = vunpack.c.l.b16 %v222
    %v912 = vunpack.c.h.b16 %v222
    %v913 = vunpack.c.l.b16 %v223
    %v914 = vunpack.c.h.b16 %v223
    %v915 = vunpack.c.l.b16 %v224
    %v916 = vunpack.c.h.b16 %v224
    %v917 = vunpack.c.l.b16 %v225
    %v918 = vunpack.c.h.b16 %v225
    %v919 = vunpack.c.l.b16 %v226
    %v920 = vunpack.c.h.b16 %v226
    %v921 = vunpack.c.l.b16 %v227
    %v922 = vunpack.c.h.b16 %v227
    %v923 = vunpack.c.l.b16 %v228
    %v924 = vunpack.c.h.b16 %v228
    %v925 = vunpack.c.l.b16 %v229
    %v926 = vunpack.c.h.b16 %v229
    %v927 = vunpack.c.l.b16 %v230
    %v928 = vunpack.c.h.b16 %v230
    %v929 = vunpack.c.l.b16 %v231
    %v930 = vunpack.c.h.b16 %v231
    %v931 = vunpack.c.l.b16 %v232
    %v932 = vunpack.c.l.b16 %v233
    %v933 = vunpack.c.h.b16 %v233
    %v934 = vunpack.c.l.b16 %v234
    %v935 = vunpack.c.h.b16 %v234
    %v936 = vunpack.c.l.b16 %v235
    %v937 = vunpack.c.h.b16 %v235
    %v938 = vunpack.c.l.b16 %v236
    %v939 = vunpack.c.h.b16 %v236
    %v940 = vunpack.c.l.b16 %v237
    %v941 = vunpack.c.h.b16 %v237
    %v942 = vunpack.c.l.b16 %v238
    %v943 = vunpack.c.h.b16 %v238
    %v944 = vunpack.c.l.b16 %v239
    %v945 = vunpack.c.h.b16 %v239
    %v946 = vunpack.c.l.b16 %v240
    %v947 = vunpack.c.h.b16 %v240
    %v948 = vunpack.c.l.b16 %v241
    %v949 = vunpack.c.h.b16 %v241
    %v950 = vunpack.c.l.b16 %v242
    %v951 = vunpack.c.h.b16 %v242
    %v952 = vunpack.c.l.b16 %v243
    %v953 = vunpack.c.l.b16 %v244
    %v954 = vunpack.c.h.b16 %v244
    %v955 = vunpack.c.l.b16 %v245
    %v956 = vunpack.c.h.b16 %v245
    %v957 = vunpack.c.l.b16 %v246
    %v958 = vunpack.c.h.b16 %v246
    %v959 = vunpack.c.l.b16 %v247
    %v960 = vunpack.c.h.b16 %v247
    %v961 = vunpack.c.l.b16 %v248
    %v962 = vunpack.c.h.b16 %v248
    %v963 = vunpack.c.l.b16 %v249
    %v964 = vunpack.c.h.b16 %v249
    %v965 = vunpack.c.l.b16 %v250
    %v966 = vunpack.c.h.b16 %v250
    %v967 = vunpack.c.l.b16 %v251
    %v968 = vunpack.c.h.b16 %v251
    %v969 = vunpack.c.l.b16 %v252
    %v970 = vunpack.c.h.b16 %v252
    %v971 = vunpack.c.l.b16 %v253
    %v972 = vunpack.c.h.b16 %v253
    %v973 = vunpack.c.l.b16 %v254
    %v974 = vpack.c.b16 %v596, %v575
    %v975 = vpack.c.b16 %v597, %v576
    %v976 = vpack.c.b16 %v598, %v577
    %v977 = vpack.c.b16 %v599, %v578
    %v978 = vpack.c.b16 %v600, %v579
    %v979 = vpack.c.b16 %v601, %v580
    %v980 = vpack.c.b16 %v602, %v581
    %v981 = vpack.c.b16 %v603, %v582
    %v982 = vpack.c.b16 %v604, %v583
    %v983 = vpack.c.b16 %v605, %v584
    %v984 = vpack.c.b16 %v606, %v585
    %v985 = vpack.c.b16 %v607, %v586
    %v986 = vpack.c.b16 %v608, %v587
    %v987 = vpack.c.b16 %v609, %v588
    %v988 = vpack.c.b16 %v610, %v589
    %v989 = vpack.c.b16 %v611, %v590
    %v990 = vpack.c.b16 %v612, %v591
    %v991 = vpack.c.b16 %v613, %v592
    %v992 = vpack.c.b16 %v614, %v593
    %v993 = vpack.c.b16 %v615, %v594
    %v994 = vpack.c.b16 %v616, %v595
    %v995 = vpack.c.b16 %v638, %v617
    %v996 = vpack.c.b16 %v639, %v618
    %v997 = vpack.c.b16 %v640, %v619
    %v998 = vpack.c.b16 %v641, %v620
    %v999 = vpack.c.b16 %v642, %v621
    %v1000 = vpack.c.b16 %v643, %v622
    %v1001 = vpack.c.b16 %v644, %v623
    %v1002 = vpack.c.b16 %v645, %v624
    %v1003 = vpack.c.b16 %v646, %v625
    %v1004 = vpack.c.b16 %v647, %v626
    %v1005 = vpack.c.b16 %v648, %v627
    %v1006 = vpack.c.b16 %v649, %v628
    %v1007 = vpack.c.b16 %v650, %v629
    %v1008 = vpack.c.b16 %v651, %v630
    %v1009 = vpack.c.b16 %v652, %v631
    %v1010 = vpack.c.b16 %v653, %v632
    %v1011 = vpack.c.b16 %v654, %v633
    %v1012 = vpack.c.b16 %v655, %v634
    %v1013 = vpack.c.b16 %v656, %v635
    %v1014 = vpack.c.b16 %v657, %v636
    %v1015 = vpack.c.b16 %v658, %v637
    %v1016 = vpack.c.b16 %v680, %v659
    %v1017 = vpack.c.b16 %v681, %v660
    %v1018 = vpack.c.b16 %v682, %v661
    %v1019 = vpack.c.b16 %v683, %v662
    %v1020 = vpack.c.b16 %v684, %v663
    %v1021 = vpack.c.b16 %v685, %v664
    %v1022 = vpack.c.b16 %v686, %v665
    %v1023 = vpack.c.b16 %v687, %v666
    %v1024 = vpack.c.b16 %v688, %v667
    %v1025 = vpack.c.b16 %v689, %v668
    %v1026 = vpack.c.b16 %v690, %v669
    %v1027 = vpack.c.b16 %v691, %v670
    %v1028 = vpack.c.b16 %v692, %v671
    %v1029 = vpack.c.b16 %v693, %v672
    %v1030 = vpack.c.b16 %v694, %v673
    %v1031 = vpack.c.b16 %v695, %v674
    %v1032 = vpack.c.b16 %v696, %v675
    %v1033 = vpack.c.b16 %v697, %v676
    %v1034 = vpack.c.b16 %v698, %v677
    %v1035 = vpack.c.b16 %v699, %v678
    %v1036 = vpack.c.b16 %v700, %v679
    %v1037 = vpack.c.b16 %v722, %v701
    %v1038 = vpack.c.b16 %v723, %v702
    %v1039 = vpack.c.b16 %v724, %v703
    %v1040 = vpack.c.b16 %v725, %v704
    %v1041 = vpack.c.b16 %v726, %v705
    %v1042 = vpack.c.b16 %v727, %v706
    %v1043 = vpack.c.b16 %v728, %v707
    %v1044 = vpack.c.b16 %v729, %v708
    %v1045 = vpack.c.b16 %v730, %v709
    %v1046 = vpack.c.b16 %v731, %v710
    %v1047 = vpack.c.b16 %v732, %v711
    %v1048 = vpack.c.b16 %v733, %v712
    %v1049 = vpack.c.b16 %v734, %v713
    %v1050 = vpack.c.b16 %v735, %v714
    %v1051 = vpack.c.b16 %v736, %v715
    %v1052 = vpack.c.b16 %v737, %v716
    %v1053 = vpack.c.b16 %v738, %v717
    %v1054 = vpack.c.b16 %v739, %v718
    %v1055 = vpack.c.b16 %v740, %v719
    %v1056 = vpack.c.b16 %v741, %v720
    %v1057 = vpack.c.b16 %v742, %v721
    %v1058 = vpack.c.b16 %v764, %v743
    %v1059 = vpack.c.b16 %v765, %v744
    %v1060 = vpack.c.b16 %v766, %v745
    %v1061 = vpack.c.b16 %v767, %v746
    %v1062 = vpack.c.b16 %v768, %v747
    %v1063 = vpack.c.b16 %v769, %v748
    %v1064 = vpack.c.b16 %v770, %v749
    %v1065 = vpack.c.b16 %v771, %v750
    %v1066 = vpack.c.b16 %v772, %v751
    %v1067 = vpack.c.b16 %v773, %v752
    %v1068 = vpack.c.b16 %v774, %v753
    %v1069 = vpack.c.b16 %v775, %v754
    %v1070 = vpack.c.b16 %v776, %v755
    %v1071 = vpack.c.b16 %v777, %v756
    %v1072 = vpack.c.b16 %v778, %v757
    %v1073 = vpack.c.b16 %v779, %v758
    %v1074 = vpack.c.b16 %v780, %v759
    %v1075 = vpack.c.b16 %v781, %v760
    %v1076 = vpack.c.b16 %v782, %v761
    %v1077 = vpack.c.b16 %v783, %v762
    %v1078 = vpack.c.b16 %v784, %v763
    %v1079 = vpack.c.b16 %v806, %v785
    %v1080 = vpack.c.b16 %v807, %v786
    %v1081 = vpack.c.b16 %v808, %v787
    %v1082 = vpack.c.b16 %v809, %v788
    %v1083 = vpack.c.b16 %v810, %v789
    %v1084 = vpack.c.b16 %v811, %v790
    %v1085 = vpack.c.b16 %v812, %v791
    %v1086 = vpack.c.b16 %v813, %v792
    %v1087 = vpack.c.b16 %v814, %v793
    %v1088 = vpack.c.b16 %v815, %v794
    %v1089 = vpack.c.b16 %v816, %v795
    %v1090 = vpack.c.b16 %v817, %v796
    %v1091 = vpack.c.b16 %v818, %v797
    %v1092 = vpack.c.b16 %v819, %v798
    %v1093 = vpack.c.b16 %v820, %v799
    %v1094 = vpack.c.b16 %v821, %v800
    %v1095 = vpack.c.b16 %v822, %v801
    %v1096 = vpack.c.b16 %v823, %v802
    %v1097 = vpack.c.b16 %v824, %v803
    %v1098 = vpack.c.b16 %v825, %v804
    %v1099 = vpack.c.b16 %v826, %v805
    %v1100 = vpack.c.b16 %v848, %v827
    %v1101 = vpack.c.b16 %v849, %v828
    %v1102 = vpack.c.b16 %v850, %v829
    %v1103 = vpack.c.b16 %v851, %v830
    %v1104 = vpack.c.b16 %v852, %v831
    %v1105 = vpack.c.b16 %v853, %v832
    %v1106 = vpack.c.b16 %v854, %v833
    %v1107 = vpack.c.b16 %v855, %v834
    %v1108 = vpack.c.b16 %v856, %v835
    %v1109 = vpack.c.b16 %v857, %v836
    %v1110 = vpack.c.b16 %v858, %v837
    %v1111 = vpack.c.b16 %v859, %v838
    %v1112 = vpack.c.b16 %v860, %v839
    %v1113 = vpack.c.b16 %v861, %v840
    %v1114 = vpack.c.b16 %v862, %v841
    %v1115 = vpack.c.b16 %v863, %v842
    %v1116 = vpack.c.b16 %v864, %v843
    %v1117 = vpack.c.b16 %v865, %v844
    %v1118 = vpack.c.b16 %v866, %v845
    %v1119 = vpack.c.b16 %v867, %v846
    %v1120 = vpack.c.b16 %v868, %v847
    %v1121 = vpack.c.b16 %v890, %v869
    %v1122 = vpack.c.b16 %v891, %v870
    %v1123 = vpack.c.b16 %v892, %v871
    %v1124 = vpack.c.b16 %v893, %v872
    %v1125 = vpack.c.b16 %v894, %v873
    %v1126 = vpack.c.b16 %v895, %v874
    %v1127 = vpack.c.b16 %v896, %v875
    %v1128 = vpack.c.b16 %v897, %v876
    %v1129 = vpack.c.b16 %v898, %v877
    %v1130 = vpack.c.b16 %v899, %v878
    %v1131 = vpack.c.b16 %v900, %v879
    %v1132 = vpack.c.b16 %v901, %v880
    %v1133 = vpack.c.b16 %v902, %v881
    %v1134 = vpack.c.b16 %v903, %v882
    %v1135 = vpack.c.b16 %v904, %v883
    %v1136 = vpack.c.b16 %v905, %v884
    %v1137 = vpack.c.b16 %v906, %v885
    %v1138 = vpack.c.b16 %v907, %v886
    %v1139 = vpack.c.b16 %v908, %v887
    %v1140 = vpack.c.b16 %v909, %v888
    %v1141 = vpack.c.b16 %v910, %v889
    %v1142 = vpack.c.b16 %v932, %v911
    %v1143 = vpack.c.b16 %v933, %v912
    %v1144 = vpack.c.b16 %v934, %v913
    %v1145 = vpack.c.b16 %v935, %v914
    %v1146 = vpack.c.b16 %v936, %v915
    %v1147 = vpack.c.b16 %v937, %v916
    %v1148 = vpack.c.b16 %v938, %v917
    %v1149 = vpack.c.b16 %v939, %v918
    %v1150 = vpack.c.b16 %v940, %v919
    %v1151 = vpack.c.b16 %v941, %v920
    %v1152 = vpack.c.b16 %v942, %v921
    %v1153 = vpack.c.b16 %v943, %v922
    %v1154 = vpack.c.b16 %v944, %v923
    %v1155 = vpack.c.b16 %v945, %v924
    %v1156 = vpack.c.b16 %v946, %v925
    %v1157 = vpack.c.b16 %v947, %v926
    %v1158 = vpack.c.b16 %v948, %v927
    %v1159 = vpack.c.b16 %v949, %v928
    %v1160 = vpack.c.b16 %v950, %v929
    %v1161 = vpack.c.b16 %v951, %v930
    %v1162 = vpack.c.b16 %v952, %v931
    %v1163 = vpack.c.b16 %v953, %v953
    %v1164 = vpack.c.b16 %v954, %v954
    %v1165 = vpack.c.b16 %v955, %v955
    %v1166 = vpack.c.b16 %v956, %v956
    %v1167 = vpack.c.b16 %v957, %v957
    %v1168 = vpack.c.b16 %v958, %v958
    %v1169 = vpack.c.b16 %v959, %v959
    %v1170 = vpack.c.b16 %v960, %v960
    %v1171 = vpack.c.b16 %v961, %v961
    %v1172 = vpack.c.b16 %v962, %v962
    %v1173 = vpack.c.b16 %v963, %v963
    %v1174 = vpack.c.b16 %v964, %v964
    %v1175 = vpack.c.b16 %v965, %v965
    %v1176 = vpack.c.b16 %v966, %v966
    %v1177 = vpack.c.b16 %v967, %v967
    %v1178 = vpack.c.b16 %v968, %v968
    %v1179 = vpack.c.b16 %v969, %v969
    %v1180 = vpack.c.b16 %v970, %v970
    %v1181 = vpack.c.b16 %v971, %v971
    %v1182 = vpack.c.b16 %v972, %v972
    %v1183 = vpack.c.b16 %v973, %v973
    %vm1373 = vcmask 195584
    %v1375 = vsel %vm1373, %v45, 0
    %vm1377 = vcmask 1043456
    %v1379 = vsel %vm1377, %v1163, 0
    %v1382 = vsel %vm1377, %v1164, 0
    %v1385 = vsel %vm1377, %v1165, 0
    %v1388 = vsel %vm1377, %v1166, 0
    %v1391 = vsel %vm1377, %v1167, 0
    %v1394 = vsel %vm1377, %v1168, 0
    %v1397 = vsel %vm1377, %v1169, 0
    %v1400 = vsel %vm1377, %v1170, 0
    %v1403 = vsel %vm1377, %v1171, 0
    %v1406 = vsel %vm1377, %v1172, 0
    %v1409 = vsel %vm1377, %v1173, 0
    %v1412 = vsel %vm1377, %v1174, 0
    %v1415 = vsel %vm1377, %v1175, 0
    %v1418 = vsel %vm1377, %v1176, 0
    %v1421 = vsel %vm1377, %v1177, 0
    %v1424 = vsel %vm1377, %v1178, 0
    %v1427 = vsel %vm1377, %v1179, 0
    %v1430 = vsel %vm1377, %v1180, 0
    %v1433 = vsel %vm1377, %v1181, 0
    %v1436 = vsel %vm1377, %v1182, 0
    %v1439 = vsel %vm1377, %v1183, 0
    %1441 = vmatprep.subr.bf16.mxu0 %v975
    %1442 = vmatpush1.bf16.msra.mxu0 %v974
    %1443 = vmatprep.subr.bf16.mxu0 %v996
    %1444 = vmatpush1.bf16.msra.mxu0 %v995
    %1445 = vmatprep.subr.bf16.mxu0 %v1017
    %1446 = vmatpush1.bf16.msra.mxu0 %v1016
    %1447 = vmatprep.subr.bf16.mxu0 %v1038
    %1448 = vmatpush1.bf16.msra.mxu0 %v1037
    %1449 = vmatprep.subr.bf16.mxu0 %v1059
    %1450 = vmatpush1.bf16.msra.mxu0 %v1058
    %1451 = vmatprep.subr.bf16.mxu0 %v1080
    %1452 = vmatpush1.bf16.msra.mxu0 %v1079
    %1453 = vmatprep.subr.bf16.mxu0 %v1101
    %1454 = vmatpush1.bf16.msra.mxu0 %v1100
    %1455 = vmatprep.subr.bf16.mxu0 %v1122
    %1456 = vmatpush1.bf16.msra.mxu0 %v1121
    %1457 = vmatprep.subr.bf16.mxu0 %v1143
    %1458 = vmatpush1.bf16.msra.mxu0 %v1142
    %1459 = vmatprep.subr.bf16.mxu0 %v1382
    %1460 = vmatpush1.bf16.msra.mxu0 %v1379
    %1461 = vmatprep.subr.bf16.mxu0 0
    %1462 = vmatpush1.bf16.msra.mxu0 0
    %1463 = vmatprep.subr.bf16.mxu0 0
    %1464 = vmatpush1.bf16.msra.mxu0 0
    %1465 = vmatprep.subr.bf16.mxu0 0
    %1466 = vmatpush1.bf16.msra.mxu0 0
    %1467 = vmatprep.subr.bf16.mxu0 0
    %1468 = vmatpush1.bf16.msra.mxu0 0
    %1469 = vmatprep.subr.bf16.mxu0 0
    %1470 = vmatpush1.bf16.msra.mxu0 0
    %1471 = vmatprep.subr.bf16.mxu0 0
    %1472 = vmatpush1.bf16.msra.mxu0 0
    %1473 = vmatprep.mubr.bf16.mxu0 %v1375
    %1474 = vmatmul.mubr.bf16.gmra.mrb[0].mxu0 %v44
    %v1475 = vpop.f32.mrb[0].mxu0
    %v1476 = vadd.f32 %v264, %v1475
    %v1477 = vpop.f32.mrb[0].mxu0
    %v1478 = vadd.f32 %v268, %v1477
    %v1479 = vpop.f32.mrb[0].mxu0
    %v1480 = vpop.f32.mrb[0].mxu0
    %1481 = vdwg.mxu0
    %1482 = vmatprep.subr.bf16.mxu0 %v977
    %1483 = vmatpush1.bf16.msra.mxu0 %v976
    %1484 = vmatprep.subr.bf16.mxu0 %v998
    %1485 = vmatpush1.bf16.msra.mxu0 %v997
    %1486 = vmatprep.subr.bf16.mxu0 %v1019
    %1487 = vmatpush1.bf16.msra.mxu0 %v1018
    %1488 = vmatprep.subr.bf16.mxu0 %v1040
    %1489 = vmatpush1.bf16.msra.mxu0 %v1039
    %1490 = vmatprep.subr.bf16.mxu0 %v1061
    %1491 = vmatpush1.bf16.msra.mxu0 %v1060
    %1492 = vmatprep.subr.bf16.mxu0 %v1082
    %1493 = vmatpush1.bf16.msra.mxu0 %v1081
    %1494 = vmatprep.subr.bf16.mxu0 %v1103
    %1495 = vmatpush1.bf16.msra.mxu0 %v1102
    %1496 = vmatprep.subr.bf16.mxu0 %v1124
    %1497 = vmatpush1.bf16.msra.mxu0 %v1123
    %1498 = vmatprep.subr.bf16.mxu0 %v1145
    %1499 = vmatpush1.bf16.msra.mxu0 %v1144
    %1500 = vmatprep.subr.bf16.mxu0 %v1388
    %1501 = vmatpush1.bf16.msra.mxu0 %v1385
    %1502 = vmatprep.subr.bf16.mxu0 0
    %1503 = vmatpush1.bf16.msra.mxu0 0
    %1504 = vmatprep.subr.bf16.mxu0 0
    %1505 = vmatpush1.bf16.msra.mxu0 0
    %1506 = vmatprep.subr.bf16.mxu0 0
    %1507 = vmatpush1.bf16.msra.mxu0 0
    %1508 = vmatprep.subr.bf16.mxu0 0
    %1509 = vmatpush1.bf16.msra.mxu0 0
    %1510 = vmatprep.subr.bf16.mxu0 0
    %1511 = vmatpush1.bf16.msra.mxu0 0
    %1512 = vmatprep.subr.bf16.mxu0 0
    %1513 = vmatpush1.bf16.msra.mxu0 0
    %1514 = vmatprep.mubr.bf16.mxu0 %v1375
    %1515 = vmatmul.mubr.bf16.gmra.mrb[0].mxu0 %v44
    %v1516 = vpop.f32.mrb[0].mxu0
    %v1517 = vadd.f32 %v272, %v1516
    %v1518 = vpop.f32.mrb[0].mxu0
    %v1519 = vadd.f32 %v276, %v1518
    %v1520 = vpop.f32.mrb[0].mxu0
    %v1521 = vpop.f32.mrb[0].mxu0
    %1522 = vdwg.mxu0
    %1523 = vmatprep.subr.bf16.mxu0 %v979
    %1524 = vmatpush1.bf16.msra.mxu0 %v978
    %1525 = vmatprep.subr.bf16.mxu0 %v1000
    %1526 = vmatpush1.bf16.msra.mxu0 %v999
    %1527 = vmatprep.subr.bf16.mxu0 %v1021
    %1528 = vmatpush1.bf16.msra.mxu0 %v1020
    %1529 = vmatprep.subr.bf16.mxu0 %v1042
    %1530 = vmatpush1.bf16.msra.mxu0 %v1041
    %1531 = vmatprep.subr.bf16.mxu0 %v1063
    %1532 = vmatpush1.bf16.msra.mxu0 %v1062
    %1533 = vmatprep.subr.bf16.mxu0 %v1084
    %1534 = vmatpush1.bf16.msra.mxu0 %v1083
    %1535 = vmatprep.subr.bf16.mxu0 %v1105
    %1536 = vmatpush1.bf16.msra.mxu0 %v1104
    %1537 = vmatprep.subr.bf16.mxu0 %v1126
    %1538 = vmatpush1.bf16.msra.mxu0 %v1125
    %1539 = vmatprep.subr.bf16.mxu0 %v1147
    %1540 = vmatpush1.bf16.msra.mxu0 %v1146
    %1541 = vmatprep.subr.bf16.mxu0 %v1394
    %1542 = vmatpush1.bf16.msra.mxu0 %v1391
    %1543 = vmatprep.subr.bf16.mxu0 0
    %1544 = vmatpush1.bf16.msra.mxu0 0
    %1545 = vmatprep.subr.bf16.mxu0 0
    %1546 = vmatpush1.bf16.msra.mxu0 0
    %1547 = vmatprep.subr.bf16.mxu0 0
    %1548 = vmatpush1.bf16.msra.mxu0 0
    %1549 = vmatprep.subr.bf16.mxu0 0
    %1550 = vmatpush1.bf16.msra.mxu0 0
    %1551 = vmatprep.subr.bf16.mxu0 0
    %1552 = vmatpush1.bf16.msra.mxu0 0
    %1553 = vmatprep.subr.bf16.mxu0 0
    %1554 = vmatpush1.bf16.msra.mxu0 0
    %1555 = vmatprep.mubr.bf16.mxu0 %v1375
    %1556 = vmatmul.mubr.bf16.gmra.mrb[0].mxu0 %v44
    %v1557 = vpop.f32.mrb[0].mxu0
    %v1558 = vadd.f32 %v280, %v1557
    %v1559 = vpop.f32.mrb[0].mxu0
    %v1560 = vadd.f32 %v284, %v1559
    %v1561 = vpop.f32.mrb[0].mxu0
    %v1562 = vpop.f32.mrb[0].mxu0
    %1563 = vdwg.mxu0
    %1564 = vmatprep.subr.bf16.mxu0 %v981
    %1565 = vmatpush1.bf16.msra.mxu0 %v980
    %1566 = vmatprep.subr.bf16.mxu0 %v1002
    %1567 = vmatpush1.bf16.msra.mxu0 %v1001
    %1568 = vmatprep.subr.bf16.mxu0 %v1023
    %1569 = vmatpush1.bf16.msra.mxu0 %v1022
    %1570 = vmatprep.subr.bf16.mxu0 %v1044
    %1571 = vmatpush1.bf16.msra.mxu0 %v1043
    %1572 = vmatprep.subr.bf16.mxu0 %v1065
    %1573 = vmatpush1.bf16.msra.mxu0 %v1064
    %1574 = vmatprep.subr.bf16.mxu0 %v1086
    %1575 = vmatpush1.bf16.msra.mxu0 %v1085
    %1576 = vmatprep.subr.bf16.mxu0 %v1107
    %1577 = vmatpush1.bf16.msra.mxu0 %v1106
    %1578 = vmatprep.subr.bf16.mxu0 %v1128
    %1579 = vmatpush1.bf16.msra.mxu0 %v1127
    %1580 = vmatprep.subr.bf16.mxu0 %v1149
    %1581 = vmatpush1.bf16.msra.mxu0 %v1148
    %1582 = vmatprep.subr.bf16.mxu0 %v1400
    %1583 = vmatpush1.bf16.msra.mxu0 %v1397
    %1584 = vmatprep.subr.bf16.mxu0 0
    %1585 = vmatpush1.bf16.msra.mxu0 0
    %1586 = vmatprep.subr.bf16.mxu0 0
    %1587 = vmatpush1.bf16.msra.mxu0 0
    %1588 = vmatprep.subr.bf16.mxu0 0
    %1589 = vmatpush1.bf16.msra.mxu0 0
    %1590 = vmatprep.subr.bf16.mxu0 0
    %1591 = vmatpush1.bf16.msra.mxu0 0
    %1592 = vmatprep.subr.bf16.mxu0 0
    %1593 = vmatpush1.bf16.msra.mxu0 0
    %1594 = vmatprep.subr.bf16.mxu0 0
    %1595 = vmatpush1.bf16.msra.mxu0 0
    %1596 = vmatprep.mubr.bf16.mxu0 %v1375
    %1597 = vmatmul.mubr.bf16.gmra.mrb[0].mxu0 %v44
    %v1598 = vpop.f32.mrb[0].mxu0
    %v1599 = vadd.f32 %v288, %v1598
    %v1600 = vpop.f32.mrb[0].mxu0
    %v1601 = vadd.f32 %v292, %v1600
    %v1602 = vpop.f32.mrb[0].mxu0
    %v1603 = vpop.f32.mrb[0].mxu0
    %1604 = vdwg.mxu0
    %1605 = vmatprep.subr.bf16.mxu0 %v983
    %1606 = vmatpush1.bf16.msra.mxu0 %v982
    %1607 = vmatprep.subr.bf16.mxu0 %v1004
    %1608 = vmatpush1.bf16.msra.mxu0 %v1003
    %1609 = vmatprep.subr.bf16.mxu0 %v1025
    %1610 = vmatpush1.bf16.msra.mxu0 %v1024
    %1611 = vmatprep.subr.bf16.mxu0 %v1046
    %1612 = vmatpush1.bf16.msra.mxu0 %v1045
    %1613 = vmatprep.subr.bf16.mxu0 %v1067
    %1614 = vmatpush1.bf16.msra.mxu0 %v1066
    %1615 = vmatprep.subr.bf16.mxu0 %v1088
    %1616 = vmatpush1.bf16.msra.mxu0 %v1087
    %1617 = vmatprep.subr.bf16.mxu0 %v1109
    %1618 = vmatpush1.bf16.msra.mxu0 %v1108
    %1619 = vmatprep.subr.bf16.mxu0 %v1130
    %1620 = vmatpush1.bf16.msra.mxu0 %v1129
    %1621 = vmatprep.subr.bf16.mxu0 %v1151
    %1622 = vmatpush1.bf16.msra.mxu0 %v1150
    %1623 = vmatprep.subr.bf16.mxu0 %v1406
    %1624 = vmatpush1.bf16.msra.mxu0 %v1403
    %1625 = vmatprep.subr.bf16.mxu0 0
    %1626 = vmatpush1.bf16.msra.mxu0 0
    %1627 = vmatprep.subr.bf16.mxu0 0
    %1628 = vmatpush1.bf16.msra.mxu0 0
    %1629 = vmatprep.subr.bf16.mxu0 0
    %1630 = vmatpush1.bf16.msra.mxu0 0
    %1631 = vmatprep.subr.bf16.mxu0 0
    %1632 = vmatpush1.bf16.msra.mxu0 0
    %1633 = vmatprep.subr.bf16.mxu0 0
    %1634 = vmatpush1.bf16.msra.mxu0 0
    %1635 = vmatprep.subr.bf16.mxu0 0
    %1636 = vmatpush1.bf16.msra.mxu0 0
    %1637 = vmatprep.mubr.bf16.mxu0 %v1375
    %1638 = vmatmul.mubr.bf16.gmra.mrb[0].mxu0 %v44
    %v1639 = vpop.f32.mrb[0].mxu0
    %v1640 = vadd.f32 %v296, %v1639
    %v1641 = vpop.f32.mrb[0].mxu0
    %v1642 = vadd.f32 %v300, %v1641
    %v1643 = vpop.f32.mrb[0].mxu0
    %v1644 = vpop.f32.mrb[0].mxu0
    %1645 = vdwg.mxu0
    %1646 = vmatprep.subr.bf16.mxu0 %v985
    %1647 = vmatpush1.bf16.msra.mxu0 %v984
    %1648 = vmatprep.subr.bf16.mxu0 %v1006
    %1649 = vmatpush1.bf16.msra.mxu0 %v1005
    %1650 = vmatprep.subr.bf16.mxu0 %v1027
    %1651 = vmatpush1.bf16.msra.mxu0 %v1026
    %1652 = vmatprep.subr.bf16.mxu0 %v1048
    %1653 = vmatpush1.bf16.msra.mxu0 %v1047
    %1654 = vmatprep.subr.bf16.mxu0 %v1069
    %1655 = vmatpush1.bf16.msra.mxu0 %v1068
    %1656 = vmatprep.subr.bf16.mxu0 %v1090
    %1657 = vmatpush1.bf16.msra.mxu0 %v1089
    %1658 = vmatprep.subr.bf16.mxu0 %v1111
    %1659 = vmatpush1.bf16.msra.mxu0 %v1110
    %1660 = vmatprep.subr.bf16.mxu0 %v1132
    %1661 = vmatpush1.bf16.msra.mxu0 %v1131
    %1662 = vmatprep.subr.bf16.mxu0 %v1153
    %1663 = vmatpush1.bf16.msra.mxu0 %v1152
    %1664 = vmatprep.subr.bf16.mxu0 %v1412
    %1665 = vmatpush1.bf16.msra.mxu0 %v1409
    %1666 = vmatprep.subr.bf16.mxu0 0
    %1667 = vmatpush1.bf16.msra.mxu0 0
    %1668 = vmatprep.subr.bf16.mxu0 0
    %1669 = vmatpush1.bf16.msra.mxu0 0
    %1670 = vmatprep.subr.bf16.mxu0 0
    %1671 = vmatpush1.bf16.msra.mxu0 0
    %1672 = vmatprep.subr.bf16.mxu0 0
    %1673 = vmatpush1.bf16.msra.mxu0 0
    %1674 = vmatprep.subr.bf16.mxu0 0
    %1675 = vmatpush1.bf16.msra.mxu0 0
    %1676 = vmatprep.subr.bf16.mxu0 0
    %1677 = vmatpush1.bf16.msra.mxu0 0
    %1678 = vmatprep.mubr.bf16.mxu0 %v1375
    %1679 = vmatmul.mubr.bf16.gmra.mrb[0].mxu0 %v44
    %v1680 = vpop.f32.mrb[0].mxu0
    %v1681 = vadd.f32 %v304, %v1680
    %v1682 = vpop.f32.mrb[0].mxu0
    %v1683 = vadd.f32 %v308, %v1682
    %v1684 = vpop.f32.mrb[0].mxu0
    %v1685 = vpop.f32.mrb[0].mxu0
    %1686 = vdwg.mxu0
    %1687 = vmatprep.subr.bf16.mxu0 %v987
    %1688 = vmatpush1.bf16.msra.mxu0 %v986
    %1689 = vmatprep.subr.bf16.mxu0 %v1008
    %1690 = vmatpush1.bf16.msra.mxu0 %v1007
    %1691 = vmatprep.subr.bf16.mxu0 %v1029
    %1692 = vmatpush1.bf16.msra.mxu0 %v1028
    %1693 = vmatprep.subr.bf16.mxu0 %v1050
    %1694 = vmatpush1.bf16.msra.mxu0 %v1049
    %1695 = vmatprep.subr.bf16.mxu0 %v1071
    %1696 = vmatpush1.bf16.msra.mxu0 %v1070
    %1697 = vmatprep.subr.bf16.mxu0 %v1092
    %1698 = vmatpush1.bf16.msra.mxu0 %v1091
    %1699 = vmatprep.subr.bf16.mxu0 %v1113
    %1700 = vmatpush1.bf16.msra.mxu0 %v1112
    %1701 = vmatprep.subr.bf16.mxu0 %v1134
    %1702 = vmatpush1.bf16.msra.mxu0 %v1133
    %1703 = vmatprep.subr.bf16.mxu0 %v1155
    %1704 = vmatpush1.bf16.msra.mxu0 %v1154
    %1705 = vmatprep.subr.bf16.mxu0 %v1418
    %1706 = vmatpush1.bf16.msra.mxu0 %v1415
    %1707 = vmatprep.subr.bf16.mxu0 0
    %1708 = vmatpush1.bf16.msra.mxu0 0
    %1709 = vmatprep.subr.bf16.mxu0 0
    %1710 = vmatpush1.bf16.msra.mxu0 0
    %1711 = vmatprep.subr.bf16.mxu0 0
    %1712 = vmatpush1.bf16.msra.mxu0 0
    %1713 = vmatprep.subr.bf16.mxu0 0
    %1714 = vmatpush1.bf16.msra.mxu0 0
    %1715 = vmatprep.subr.bf16.mxu0 0
    %1716 = vmatpush1.bf16.msra.mxu0 0
    %1717 = vmatprep.subr.bf16.mxu0 0
    %1718 = vmatpush1.bf16.msra.mxu0 0
    %1719 = vmatprep.mubr.bf16.mxu0 %v1375
    %1720 = vmatmul.mubr.bf16.gmra.mrb[0].mxu0 %v44
    %v1721 = vpop.f32.mrb[0].mxu0
    %v1722 = vadd.f32 %v312, %v1721
    %v1723 = vpop.f32.mrb[0].mxu0
    %v1724 = vadd.f32 %v316, %v1723
    %v1725 = vpop.f32.mrb[0].mxu0
    %v1726 = vpop.f32.mrb[0].mxu0
    %1727 = vdwg.mxu0
    %1728 = vmatprep.subr.bf16.mxu0 %v989
    %1729 = vmatpush1.bf16.msra.mxu0 %v988
    %1730 = vmatprep.subr.bf16.mxu0 %v1010
    %1731 = vmatpush1.bf16.msra.mxu0 %v1009
    %1732 = vmatprep.subr.bf16.mxu0 %v1031
    %1733 = vmatpush1.bf16.msra.mxu0 %v1030
    %1734 = vmatprep.subr.bf16.mxu0 %v1052
    %1735 = vmatpush1.bf16.msra.mxu0 %v1051
    %1736 = vmatprep.subr.bf16.mxu0 %v1073
    %1737 = vmatpush1.bf16.msra.mxu0 %v1072
    %1738 = vmatprep.subr.bf16.mxu0 %v1094
    %1739 = vmatpush1.bf16.msra.mxu0 %v1093
    %1740 = vmatprep.subr.bf16.mxu0 %v1115
    %1741 = vmatpush1.bf16.msra.mxu0 %v1114
    %1742 = vmatprep.subr.bf16.mxu0 %v1136
    %1743 = vmatpush1.bf16.msra.mxu0 %v1135
    %1744 = vmatprep.subr.bf16.mxu0 %v1157
    %1745 = vmatpush1.bf16.msra.mxu0 %v1156
    %1746 = vmatprep.subr.bf16.mxu0 %v1424
    %1747 = vmatpush1.bf16.msra.mxu0 %v1421
    %1748 = vmatprep.subr.bf16.mxu0 0
    %1749 = vmatpush1.bf16.msra.mxu0 0
    %1750 = vmatprep.subr.bf16.mxu0 0
    %1751 = vmatpush1.bf16.msra.mxu0 0
    %1752 = vmatprep.subr.bf16.mxu0 0
    %1753 = vmatpush1.bf16.msra.mxu0 0
    %1754 = vmatprep.subr.bf16.mxu0 0
    %1755 = vmatpush1.bf16.msra.mxu0 0
    %1756 = vmatprep.subr.bf16.mxu0 0
    %1757 = vmatpush1.bf16.msra.mxu0 0
    %1758 = vmatprep.subr.bf16.mxu0 0
    %1759 = vmatpush1.bf16.msra.mxu0 0
    %1760 = vmatprep.mubr.bf16.mxu0 %v1375
    %1761 = vmatmul.mubr.bf16.gmra.mrb[0].mxu0 %v44
    %v1762 = vpop.f32.mrb[0].mxu0
    %v1763 = vadd.f32 %v320, %v1762
    %v1764 = vpop.f32.mrb[0].mxu0
    %v1765 = vadd.f32 %v324, %v1764
    %v1766 = vpop.f32.mrb[0].mxu0
    %v1767 = vpop.f32.mrb[0].mxu0
    %1768 = vdwg.mxu0
    %1769 = vmatprep.subr.bf16.mxu0 %v991
    %1770 = vmatpush1.bf16.msra.mxu0 %v990
    %1771 = vmatprep.subr.bf16.mxu0 %v1012
    %1772 = vmatpush1.bf16.msra.mxu0 %v1011
    %1773 = vmatprep.subr.bf16.mxu0 %v1033
    %1774 = vmatpush1.bf16.msra.mxu0 %v1032
    %1775 = vmatprep.subr.bf16.mxu0 %v1054
    %1776 = vmatpush1.bf16.msra.mxu0 %v1053
    %1777 = vmatprep.subr.bf16.mxu0 %v1075
    %1778 = vmatpush1.bf16.msra.mxu0 %v1074
    %1779 = vmatprep.subr.bf16.mxu0 %v1096
    %1780 = vmatpush1.bf16.msra.mxu0 %v1095
    %1781 = vmatprep.subr.bf16.mxu0 %v1117
    %1782 = vmatpush1.bf16.msra.mxu0 %v1116
    %1783 = vmatprep.subr.bf16.mxu0 %v1138
    %1784 = vmatpush1.bf16.msra.mxu0 %v1137
    %1785 = vmatprep.subr.bf16.mxu0 %v1159
    %1786 = vmatpush1.bf16.msra.mxu0 %v1158
    %1787 = vmatprep.subr.bf16.mxu0 %v1430
    %1788 = vmatpush1.bf16.msra.mxu0 %v1427
    %1789 = vmatprep.subr.bf16.mxu0 0
    %1790 = vmatpush1.bf16.msra.mxu0 0
    %1791 = vmatprep.subr.bf16.mxu0 0
    %1792 = vmatpush1.bf16.msra.mxu0 0
    %1793 = vmatprep.subr.bf16.mxu0 0
    %1794 = vmatpush1.bf16.msra.mxu0 0
    %1795 = vmatprep.subr.bf16.mxu0 0
    %1796 = vmatpush1.bf16.msra.mxu0 0
    %1797 = vmatprep.subr.bf16.mxu0 0
    %1798 = vmatpush1.bf16.msra.mxu0 0
    %1799 = vmatprep.subr.bf16.mxu0 0
    %1800 = vmatpush1.bf16.msra.mxu0 0
    %1801 = vmatprep.mubr.bf16.mxu0 %v1375
    %1802 = vmatmul.mubr.bf16.gmra.mrb[0].mxu0 %v44
    %v1803 = vpop.f32.mrb[0].mxu0
    %v1804 = vadd.f32 %v328, %v1803
    %v1805 = vpop.f32.mrb[0].mxu0
    %v1806 = vadd.f32 %v332, %v1805
    %v1807 = vpop.f32.mrb[0].mxu0
    %v1808 = vpop.f32.mrb[0].mxu0
    %1809 = vdwg.mxu0
    %1810 = vmatprep.subr.bf16.mxu0 %v993
    %1811 = vmatpush1.bf16.msra.mxu0 %v992
    %1812 = vmatprep.subr.bf16.mxu0 %v1014
    %1813 = vmatpush1.bf16.msra.mxu0 %v1013
    %1814 = vmatprep.subr.bf16.mxu0 %v1035
    %1815 = vmatpush1.bf16.msra.mxu0 %v1034
    %1816 = vmatprep.subr.bf16.mxu0 %v1056
    %1817 = vmatpush1.bf16.msra.mxu0 %v1055
    %1818 = vmatprep.subr.bf16.mxu0 %v1077
    %1819 = vmatpush1.bf16.msra.mxu0 %v1076
    %1820 = vmatprep.subr.bf16.mxu0 %v1098
    %1821 = vmatpush1.bf16.msra.mxu0 %v1097
    %1822 = vmatprep.subr.bf16.mxu0 %v1119
    %1823 = vmatpush1.bf16.msra.mxu0 %v1118
    %1824 = vmatprep.subr.bf16.mxu0 %v1140
    %1825 = vmatpush1.bf16.msra.mxu0 %v1139
    %1826 = vmatprep.subr.bf16.mxu0 %v1161
    %1827 = vmatpush1.bf16.msra.mxu0 %v1160
    %1828 = vmatprep.subr.bf16.mxu0 %v1436
    %1829 = vmatpush1.bf16.msra.mxu0 %v1433
    %1830 = vmatprep.subr.bf16.mxu0 0
    %1831 = vmatpush1.bf16.msra.mxu0 0
    %1832 = vmatprep.subr.bf16.mxu0 0
    %1833 = vmatpush1.bf16.msra.mxu0 0
    %1834 = vmatprep.subr.bf16.mxu0 0
    %1835 = vmatpush1.bf16.msra.mxu0 0
    %1836 = vmatprep.subr.bf16.mxu0 0
    %1837 = vmatpush1.bf16.msra.mxu0 0
    %1838 = vmatprep.subr.bf16.mxu0 0
    %1839 = vmatpush1.bf16.msra.mxu0 0
    %1840 = vmatprep.subr.bf16.mxu0 0
    %1841 = vmatpush1.bf16.msra.mxu0 0
    %1842 = vmatprep.mubr.bf16.mxu0 %v1375
    %1843 = vmatmul.mubr.bf16.gmra.mrb[0].mxu0 %v44
    %v1844 = vpop.f32.mrb[0].mxu0
    %v1845 = vadd.f32 %v336, %v1844
    %v1846 = vpop.f32.mrb[0].mxu0
    %v1847 = vadd.f32 %v340, %v1846
    %v1848 = vpop.f32.mrb[0].mxu0
    %v1849 = vpop.f32.mrb[0].mxu0
    %1850 = vdwg.mxu0
    %1851 = vmatprep.subr.bf16.mxu0 0
    %1852 = vmatpush1.bf16.msra.mxu0 %v994
    %1853 = vmatprep.subr.bf16.mxu0 0
    %1854 = vmatpush1.bf16.msra.mxu0 %v1015
    %1855 = vmatprep.subr.bf16.mxu0 0
    %1856 = vmatpush1.bf16.msra.mxu0 %v1036
    %1857 = vmatprep.subr.bf16.mxu0 0
    %1858 = vmatpush1.bf16.msra.mxu0 %v1057
    %1859 = vmatprep.subr.bf16.mxu0 0
    %1860 = vmatpush1.bf16.msra.mxu0 %v1078
    %1861 = vmatprep.subr.bf16.mxu0 0
    %1862 = vmatpush1.bf16.msra.mxu0 %v1099
    %1863 = vmatprep.subr.bf16.mxu0 0
    %1864 = vmatpush1.bf16.msra.mxu0 %v1120
    %1865 = vmatprep.subr.bf16.mxu0 0
    %1866 = vmatpush1.bf16.msra.mxu0 %v1141
    %1867 = vmatprep.subr.bf16.mxu0 0
    %1868 = vmatpush1.bf16.msra.mxu0 %v1162
    %1869 = vmatprep.subr.bf16.mxu0 0
    %1870 = vmatpush1.bf16.msra.mxu0 %v1439
    %1871 = vmatprep.subr.bf16.mxu0 0
    %1872 = vmatpush1.bf16.msra.mxu0 0
    %1873 = vmatprep.subr.bf16.mxu0 0
    %1874 = vmatpush1.bf16.msra.mxu0 0
    %1875 = vmatprep.subr.bf16.mxu0 0
    %1876 = vmatpush1.bf16.msra.mxu0 0
    %1877 = vmatprep.subr.bf16.mxu0 0
    %1878 = vmatpush1.bf16.msra.mxu0 0
    %1879 = vmatprep.subr.bf16.mxu0 0
    %1880 = vmatpush1.bf16.msra.mxu0 0
    %1881 = vmatprep.subr.bf16.mxu0 0
    %1882 = vmatpush1.bf16.msra.mxu0 0
    %1883 = vmatprep.mubr.bf16.mxu0 %v1375
    %1884 = vmatmul.mubr.bf16.gmra.mrb[0].mxu0 %v44
    %v1885 = vpop.f32.mrb[0].mxu0
    %v1886 = vadd.f32 %v344, %v1885
    %v1887 = vpop.f32.mrb[0].mxu0
    %v1888 = vpop.f32.mrb[0].mxu0
    %v1889 = vpop.f32.mrb[0].mxu0
    %1890 = vdwg.mxu0
    %v1891 = vld [vmem:[%s1] sm:$0xff]
    %v1892 = vld [vmem:[%s1 + $0x8] sm:$0xff]
    %v1893 = vld [vmem:[%s1 + $0x10] sm:$0xff]
    %v1894 = vld [vmem:[%s1 + $0x18] sm:$0xff]
    %v1895 = vpack.c.bf16 %v1892, %v1891
    %v1896 = vpack.c.bf16 %v1894, %v1893
    %v1897 = vld [vmem:[#allocation2] sm:$0xff]
    %v1898 = vld [vmem:[#allocation2 + $0x8] sm:$0xff]
    %v1899 = vld [vmem:[#allocation2 + $0x10] sm:$0xff]
    %v1900 = vld [vmem:[#allocation2 + $0x18] sm:$0xff]
    %v1901 = vld [vmem:[#allocation2 + $0x20] sm:$0xff]
    %v1902 = vld [vmem:[#allocation2 + $0x28] sm:$0xff]
    %v1903 = vld [vmem:[#allocation2 + $0x30] sm:$0xff]
    %v1904 = vld [vmem:[#allocation2 + $0x38] sm:$0xff]
    %v1905 = vld [vmem:[#allocation2 + $0x40] sm:$0xff]
    %v1906 = vld [vmem:[#allocation2 + $0x48] sm:$0xff]
    %v1907 = vld [vmem:[#allocation2 + $0x50] sm:$0xf]
    %v1908 = vld [vmem:[#allocation2 + $0x54] sm:$0xff]
    %v1909 = vld [vmem:[#allocation2 + $0x5c] sm:$0xff]
    %v1910 = vld [vmem:[#allocation2 + $0x64] sm:$0xff]
    %v1911 = vld [vmem:[#allocation2 + $0x6c] sm:$0xff]
    %v1912 = vld [vmem:[#allocation2 + $0x74] sm:$0xff]
    %v1913 = vld [vmem:[#allocation2 + $0x7c] sm:$0xff]
    %v1914 = vld [vmem:[#allocation2 + $0x84] sm:$0xff]
    %v1915 = vld [vmem:[#allocation2 + $0x8c] sm:$0xff]
    %v1916 = vld [vmem:[#allocation2 + $0x94] sm:$0xff]
    %v1917 = vld [vmem:[#allocation2 + $0x9c] sm:$0xff]
    %v1918 = vld [vmem:[#allocation2 + $0xa4] sm:$0xf]
    %v1919 = vld [vmem:[#allocation2 + $0xa8] sm:$0xff]
    %v1920 = vld [vmem:[#allocation2 + $0xb0] sm:$0xff]
    %v1921 = vld [vmem:[#allocation2 + $0xb8] sm:$0xff]
    %v1922 = vld [vmem:[#allocation2 + $0xc0] sm:$0xff]
    %v1923 = vld [vmem:[#allocation2 + $0xc8] sm:$0xff]
    %v1924 = vld [vmem:[#allocation2 + $0xd0] sm:$0xff]
    %v1925 = vld [vmem:[#allocation2 + $0xd8] sm:$0xff]
    %v1926 = vld [vmem:[#allocation2 + $0xe0] sm:$0xff]
    %v1927 = vld [vmem:[#allocation2 + $0xe8] sm:$0xff]
    %v1928 = vld [vmem:[#allocation2 + $0xf0] sm:$0xff]
    %v1929 = vld [vmem:[#allocation2 + $0xf8] sm:$0xf]
    %v1930 = vld [vmem:[#allocation2 + $0xfc] sm:$0xff]
    %v1931 = vld [vmem:[#allocation2 + $0x104] sm:$0xff]
    %v1932 = vld [vmem:[#allocation2 + $0x10c] sm:$0xff]
    %v1933 = vld [vmem:[#allocation2 + $0x114] sm:$0xff]
    %v1934 = vld [vmem:[#allocation2 + $0x11c] sm:$0xff]
    %v1935 = vld [vmem:[#allocation2 + $0x124] sm:$0xff]
    %v1936 = vld [vmem:[#allocation2 + $0x12c] sm:$0xff]
    %v1937 = vld [vmem:[#allocation2 + $0x134] sm:$0xff]
    %v1938 = vld [vmem:[#allocation2 + $0x13c] sm:$0xff]
    %v1939 = vld [vmem:[#allocation2 + $0x144] sm:$0xff]
    %v1940 = vld [vmem:[#allocation2 + $0x14c] sm:$0xf]
    %v1941 = vld [vmem:[#allocation2 + $0x150] sm:$0xff]
    %v1942 = vld [vmem:[#allocation2 + $0x158] sm:$0xff]
    %v1943 = vld [vmem:[#allocation2 + $0x160] sm:$0xff]
    %v1944 = vld [vmem:[#allocation2 + $0x168] sm:$0xff]
    %v1945 = vld [vmem:[#allocation2 + $0x170] sm:$0xff]
    %v1946 = vld [vmem:[#allocation2 + $0x178] sm:$0xff]
    %v1947 = vld [vmem:[#allocation2 + $0x180] sm:$0xff]
    %v1948 = vld [vmem:[#allocation2 + $0x188] sm:$0xff]
    %v1949 = vld [vmem:[#allocation2 + $0x190] sm:$0xff]
    %v1950 = vld [vmem:[#allocation2 + $0x198] sm:$0xff]
    %v1951 = vld [vmem:[#allocation2 + $0x1a0] sm:$0xf]
    %v1952 = vld [vmem:[#allocation2 + $0x1a4] sm:$0xff]
    %v1953 = vld [vmem:[#allocation2 + $0x1ac] sm:$0xff]
    %v1954 = vld [vmem:[#allocation2 + $0x1b4] sm:$0xff]
    %v1955 = vld [vmem:[#allocation2 + $0x1bc] sm:$0xff]
    %v1956 = vld [vmem:[#allocation2 + $0x1c4] sm:$0xff]
    %v1957 = vld [vmem:[#allocation2 + $0x1cc] sm:$0xff]
    %v1958 = vld [vmem:[#allocation2 + $0x1d4] sm:$0xff]
    %v1959 = vld [vmem:[#allocation2 + $0x1dc] sm:$0xff]
    %v1960 = vld [vmem:[#allocation2 + $0x1e4] sm:$0xff]
    %v1961 = vld [vmem:[#allocation2 + $0x1ec] sm:$0xff]
    %v1962 = vld [vmem:[#allocation2 + $0x1f4] sm:$0xf]
    %v2029 = vunpack.c.l.b16 %v1897
    %v2030 = vunpack.c.h.b16 %v1897
    %v2031 = vunpack.c.l.b16 %v1898
    %v2032 = vunpack.c.h.b16 %v1898
    %v2033 = vunpack.c.l.b16 %v1899
    %v2034 = vunpack.c.h.b16 %v1899
    %v2035 = vunpack.c.l.b16 %v1900
    %v2036 = vunpack.c.h.b16 %v1900
    %v2037 = vunpack.c.l.b16 %v1901
    %v2038 = vunpack.c.h.b16 %v1901
    %v2039 = vunpack.c.l.b16 %v1902
    %v2040 = vunpack.c.h.b16 %v1902
    %v2041 = vunpack.c.l.b16 %v1903
    %v2042 = vunpack.c.h.b16 %v1903
    %v2043 = vunpack.c.l.b16 %v1904
    %v2044 = vunpack.c.h.b16 %v1904
    %v2045 = vunpack.c.l.b16 %v1905
    %v2046 = vunpack.c.h.b16 %v1905
    %v2047 = vunpack.c.l.b16 %v1906
    %v2048 = vunpack.c.h.b16 %v1906
    %v2049 = vunpack.c.l.b16 %v1907
    %v2050 = vunpack.c.l.b16 %v1908
    %v2051 = vunpack.c.h.b16 %v1908
    %v2052 = vunpack.c.l.b16 %v1909
    %v2053 = vunpack.c.h.b16 %v1909
    %v2054 = vunpack.c.l.b16 %v1910
    %v2055 = vunpack.c.h.b16 %v1910
    %v2056 = vunpack.c.l.b16 %v1911
    %v2057 = vunpack.c.h.b16 %v1911
    %v2058 = vunpack.c.l.b16 %v1912
    %v2059 = vunpack.c.h.b16 %v1912
    %v2060 = vunpack.c.l.b16 %v1913
    %v2061 = vunpack.c.h.b16 %v1913
    %v2062 = vunpack.c.l.b16 %v1914
    %v2063 = vunpack.c.h.b16 %v1914
    %v2064 = vunpack.c.l.b16 %v1915
    %v2065 = vunpack.c.h.b16 %v1915
    %v2066 = vunpack.c.l.b16 %v1916
    %v2067 = vunpack.c.h.b16 %v1916
    %v2068 = vunpack.c.l.b16 %v1917
    %v2069 = vunpack.c.h.b16 %v1917
    %v2070 = vunpack.c.l.b16 %v1918
    %v2071 = vunpack.c.l.b16 %v1919
    %v2072 = vunpack.c.h.b16 %v1919
    %v2073 = vunpack.c.l.b16 %v1920
    %v2074 = vunpack.c.h.b16 %v1920
    %v2075 = vunpack.c.l.b16 %v1921
    %v2076 = vunpack.c.h.b16 %v1921
    %v2077 = vunpack.c.l.b16 %v1922
    %v2078 = vunpack.c.h.b16 %v1922
    %v2079 = vunpack.c.l.b16 %v1923
    %v2080 = vunpack.c.h.b16 %v1923
    %v2081 = vunpack.c.l.b16 %v1924
    %v2082 = vunpack.c.h.b16 %v1924
    %v2083 = vunpack.c.l.b16 %v1925
    %v2084 = vunpack.c.h.b16 %v1925
    %v2085 = vunpack.c.l.b16 %v1926
    %v2086 = vunpack.c.h.b16 %v1926
    %v2087 = vunpack.c.l.b16 %v1927
    %v2088 = vunpack.c.h.b16 %v1927
    %v2089 = vunpack.c.l.b16 %v1928
    %v2090 = vunpack.c.h.b16 %v1928
    %v2091 = vunpack.c.l.b16 %v1929
    %v2092 = vunpack.c.l.b16 %v1930
    %v2093 = vunpack.c.h.b16 %v1930
    %v2094 = vunpack.c.l.b16 %v1931
    %v2095 = vunpack.c.h.b16 %v1931
    %v2096 = vunpack.c.l.b16 %v1932
    %v2097 = vunpack.c.h.b16 %v1932
    %v2098 = vunpack.c.l.b16 %v1933
    %v2099 = vunpack.c.h.b16 %v1933
    %v2100 = vunpack.c.l.b16 %v1934
    %v2101 = vunpack.c.h.b16 %v1934
    %v2102 = vunpack.c.l.b16 %v1935
    %v2103 = vunpack.c.h.b16 %v1935
    %v2104 = vunpack.c.l.b16 %v1936
    %v2105 = vunpack.c.h.b16 %v1936
    %v2106 = vunpack.c.l.b16 %v1937
    %v2107 = vunpack.c.h.b16 %v1937
    %v2108 = vunpack.c.l.b16 %v1938
    %v2109 = vunpack.c.h.b16 %v1938
    %v2110 = vunpack.c.l.b16 %v1939
    %v2111 = vunpack.c.h.b16 %v1939
    %v2112 = vunpack.c.l.b16 %v1940
    %v2113 = vunpack.c.l.b16 %v1941
    %v2114 = vunpack.c.h.b16 %v1941
    %v2115 = vunpack.c.l.b16 %v1942
    %v2116 = vunpack.c.h.b16 %v1942
    %v2117 = vunpack.c.l.b16 %v1943
    %v2118 = vunpack.c.h.b16 %v1943
    %v2119 = vunpack.c.l.b16 %v1944
    %v2120 = vunpack.c.h.b16 %v1944
    %v2121 = vunpack.c.l.b16 %v1945
    %v2122 = vunpack.c.h.b16 %v1945
    %v2123 = vunpack.c.l.b16 %v1946
    %v2124 = vunpack.c.h.b16 %v1946
    %v2125 = vunpack.c.l.b16 %v1947
    %v2126 = vunpack.c.h.b16 %v1947
    %v2127 = vunpack.c.l.b16 %v1948
    %v2128 = vunpack.c.h.b16 %v1948
    %v2129 = vunpack.c.l.b16 %v1949
    %v2130 = vunpack.c.h.b16 %v1949
    %v2131 = vunpack.c.l.b16 %v1950
    %v2132 = vunpack.c.h.b16 %v1950
    %v2133 = vunpack.c.l.b16 %v1951
    %v2134 = vunpack.c.l.b16 %v1952
    %v2135 = vunpack.c.h.b16 %v1952
    %v2136 = vunpack.c.l.b16 %v1953
    %v2137 = vunpack.c.h.b16 %v1953
    %v2138 = vunpack.c.l.b16 %v1954
    %v2139 = vunpack.c.h.b16 %v1954
    %v2140 = vunpack.c.l.b16 %v1955
    %v2141 = vunpack.c.h.b16 %v1955
    %v2142 = vunpack.c.l.b16 %v1956
    %v2143 = vunpack.c.h.b16 %v1956
    %v2144 = vunpack.c.l.b16 %v1957
    %v2145 = vunpack.c.h.b16 %v1957
    %v2146 = vunpack.c.l.b16 %v1958
    %v2147 = vunpack.c.h.b16 %v1958
    %v2148 = vunpack.c.l.b16 %v1959
    %v2149 = vunpack.c.h.b16 %v1959
    %v2150 = vunpack.c.l.b16 %v1960
    %v2151 = vunpack.c.h.b16 %v1960
    %v2152 = vunpack.c.l.b16 %v1961
    %v2153 = vunpack.c.h.b16 %v1961
    %v2154 = vunpack.c.l.b16 %v1962
    %v2155 = vpack.c.b16 %v2050, %v2029
    %v2156 = vpack.c.b16 %v2051, %v2030
    %v2157 = vpack.c.b16 %v2052, %v2031
    %v2158 = vpack.c.b16 %v2053, %v2032
    %v2159 = vpack.c.b16 %v2054, %v2033
    %v2160 = vpack.c.b16 %v2055, %v2034
    %v2161 = vpack.c.b16 %v2056, %v2035
    %v2162 = vpack.c.b16 %v2057, %v2036
    %v2163 = vpack.c.b16 %v2058, %v2037
    %v2164 = vpack.c.b16 %v2059, %v2038
    %v2165 = vpack.c.b16 %v2060, %v2039
    %v2166 = vpack.c.b16 %v2061, %v2040
    %v2167 = vpack.c.b16 %v2062, %v2041
    %v2168 = vpack.c.b16 %v2063, %v2042
    %v2169 = vpack.c.b16 %v2064, %v2043
    %v2170 = vpack.c.b16 %v2065, %v2044
    %v2171 = vpack.c.b16 %v2066, %v2045
    %v2172 = vpack.c.b16 %v2067, %v2046
    %v2173 = vpack.c.b16 %v2068, %v2047
    %v2174 = vpack.c.b16 %v2069, %v2048
    %v2175 = vpack.c.b16 %v2070, %v2049
    %v2176 = vpack.c.b16 %v2092, %v2071
    %v2177 = vpack.c.b16 %v2093, %v2072
    %v2178 = vpack.c.b16 %v2094, %v2073
    %v2179 = vpack.c.b16 %v2095, %v2074
    %v2180 = vpack.c.b16 %v2096, %v2075
    %v2181 = vpack.c.b16 %v2097, %v2076
    %v2182 = vpack.c.b16 %v2098, %v2077
    %v2183 = vpack.c.b16 %v2099, %v2078
    %v2184 = vpack.c.b16 %v2100, %v2079
    %v2185 = vpack.c.b16 %v2101, %v2080
    %v2186 = vpack.c.b16 %v2102, %v2081
    %v2187 = vpack.c.b16 %v2103, %v2082
    %v2188 = vpack.c.b16 %v2104, %v2083
    %v2189 = vpack.c.b16 %v2105, %v2084
    %v2190 = vpack.c.b16 %v2106, %v2085
    %v2191 = vpack.c.b16 %v2107, %v2086
    %v2192 = vpack.c.b16 %v2108, %v2087
    %v2193 = vpack.c.b16 %v2109, %v2088
    %v2194 = vpack.c.b16 %v2110, %v2089
    %v2195 = vpack.c.b16 %v2111, %v2090
    %v2196 = vpack.c.b16 %v2112, %v2091
    %v2197 = vpack.c.b16 %v2134, %v2113
    %v2198 = vpack.c.b16 %v2135, %v2114
    %v2199 = vpack.c.b16 %v2136, %v2115
    %v2200 = vpack.c.b16 %v2137, %v2116
    %v2201 = vpack.c.b16 %v2138, %v2117
    %v2202 = vpack.c.b16 %v2139, %v2118
    %v2203 = vpack.c.b16 %v2140, %v2119
    %v2204 = vpack.c.b16 %v2141, %v2120
    %v2205 = vpack.c.b16 %v2142, %v2121
    %v2206 = vpack.c.b16 %v2143, %v2122
    %v2207 = vpack.c.b16 %v2144, %v2123
    %v2208 = vpack.c.b16 %v2145, %v2124
    %v2209 = vpack.c.b16 %v2146, %v2125
    %v2210 = vpack.c.b16 %v2147, %v2126
    %v2211 = vpack.c.b16 %v2148, %v2127
    %v2212 = vpack.c.b16 %v2149, %v2128
    %v2213 = vpack.c.b16 %v2150, %v2129
    %v2214 = vpack.c.b16 %v2151, %v2130
    %v2215 = vpack.c.b16 %v2152, %v2131
    %v2216 = vpack.c.b16 %v2153, %v2132
    %v2217 = vpack.c.b16 %v2154, %v2133
    %vm2281 = vcmask 392192
    %v2283 = vsel %vm2281, %v1895, 0
    %v2286 = vsel %vm2281, %v1896, 0
    %2288 = vmatprep.subr.bf16.mxu0 %v2156
    %2289 = vmatpush1.bf16.msra.mxu0 %v2155
    %2290 = vmatprep.subr.bf16.mxu0 %v2177
    %2291 = vmatpush1.bf16.msra.mxu0 %v2176
    %2292 = vmatprep.subr.bf16.mxu0 %v2198
    %2293 = vmatpush1.bf16.msra.mxu0 %v2197
    %2294 = vmatprep.subr.bf16.mxu0 0
    %2295 = vmatpush1.bf16.msra.mxu0 0
    %2296 = vmatprep.subr.bf16.mxu0 0
    %2297 = vmatpush1.bf16.msra.mxu0 0
    %2298 = vmatprep.subr.bf16.mxu0 0
    %2299 = vmatpush1.bf16.msra.mxu0 0
    %2300 = vmatprep.subr.bf16.mxu0 0
    %2301 = vmatpush1.bf16.msra.mxu0 0
    %2302 = vmatprep.subr.bf16.mxu0 0
    %2303 = vmatpush1.bf16.msra.mxu0 0
    %2304 = vmatprep.subr.bf16.mxu0 0
    %2305 = vmatpush1.bf16.msra.mxu0 0
    %2306 = vmatprep.subr.bf16.mxu0 0
    %2307 = vmatpush1.bf16.msra.mxu0 0
    %2308 = vmatprep.subr.bf16.mxu0 0
    %2309 = vmatpush1.bf16.msra.mxu0 0
    %2310 = vmatprep.subr.bf16.mxu0 0
    %2311 = vmatpush1.bf16.msra.mxu0 0
    %2312 = vmatprep.subr.bf16.mxu0 0
    %2313 = vmatpush1.bf16.msra.mxu0 0
    %2314 = vmatprep.subr.bf16.mxu0 0
    %2315 = vmatpush1.bf16.msra.mxu0 0
    %2316 = vmatprep.subr.bf16.mxu0 0
    %2317 = vmatpush1.bf16.msra.mxu0 0
    %2318 = vmatprep.subr.bf16.mxu0 0
    %2319 = vmatpush1.bf16.msra.mxu0 0
    %2320 = vmatprep.mubr.bf16.mxu0 0
    %2321 = vmatmul.mubr.bf16.gmra.mrb[0].mxu0 %v2283
    %v2322 = vpop.f32.mrb[0].mxu0
    %v2323 = vadd.f32 0.0, %v2322
    %v2324 = vpop.f32.mrb[0].mxu0
    %v2325 = vadd.f32 0.0, %v2324
    %v2326 = vpop.f32.mrb[0].mxu0
    %v2327 = vadd.f32 0.0, %v2326
    %v2328 = vpop.f32.mrb[0].mxu0
    %v2329 = vadd.f32 0.0, %v2328
    %2330 = vmatprep.mubr.bf16.mxu0 0
    %2331 = vmatmul.mubr.bf16.gmra.mrb[0].mxu0 %v2286
    %v2332 = vpop.f32.mrb[0].mxu0
    %v2333 = vadd.f32 0.0, %v2332
    %v2334 = vpop.f32.mrb[0].mxu0
    %v2335 = vadd.f32 0.0, %v2334
    %v2336 = vpop.f32.mrb[0].mxu0
    %v2337 = vadd.f32 0.0, %v2336
    %v2338 = vpop.f32.mrb[0].mxu0
    %v2339 = vadd.f32 0.0, %v2338
    %2340 = vdwg.mxu0
    %2341 = vmatprep.subr.bf16.mxu0 %v2158
    %2342 = vmatpush1.bf16.msra.mxu0 %v2157
    %2343 = vmatprep.subr.bf16.mxu0 %v2179
    %2344 = vmatpush1.bf16.msra.mxu0 %v2178
    %2345 = vmatprep.subr.bf16.mxu0 %v2200
    %2346 = vmatpush1.bf16.msra.mxu0 %v2199
    %2347 = vmatprep.subr.bf16.mxu0 0
    %2348 = vmatpush1.bf16.msra.mxu0 0
    %2349 = vmatprep.subr.bf16.mxu0 0
    %2350 = vmatpush1.bf16.msra.mxu0 0
    %2351 = vmatprep.subr.bf16.mxu0 0
    %2352 = vmatpush1.bf16.msra.mxu0 0
    %2353 = vmatprep.subr.bf16.mxu0 0
    %2354 = vmatpush1.bf16.msra.mxu0 0
    %2355 = vmatprep.subr.bf16.mxu0 0
    %2356 = vmatpush1.bf16.msra.mxu0 0
    %2357 = vmatprep.subr.bf16.mxu0 0
    %2358 = vmatpush1.bf16.msra.mxu0 0
    %2359 = vmatprep.subr.bf16.mxu0 0
    %2360 = vmatpush1.bf16.msra.mxu0 0
    %2361 = vmatprep.subr.bf16.mxu0 0
    %2362 = vmatpush1.bf16.msra.mxu0 0
    %2363 = vmatprep.subr.bf16.mxu0 0
    %2364 = vmatpush1.bf16.msra.mxu0 0
    %2365 = vmatprep.subr.bf16.mxu0 0
    %2366 = vmatpush1.bf16.msra.mxu0 0
    %2367 = vmatprep.subr.bf16.mxu0 0
    %2368 = vmatpush1.bf16.msra.mxu0 0
    %2369 = vmatprep.subr.bf16.mxu0 0
    %2370 = vmatpush1.bf16.msra.mxu0 0
    %2371 = vmatprep.subr.bf16.mxu0 0
    %2372 = vmatpush1.bf16.msra.mxu0 0
    %2373 = vmatprep.mubr.bf16.mxu0 0
    %2374 = vmatmul.mubr.bf16.gmra.mrb[0].mxu0 %v2283
    %v2375 = vpop.f32.mrb[0].mxu0
    %v2376 = vadd.f32 0.0, %v2375
    %v2377 = vpop.f32.mrb[0].mxu0
    %v2378 = vadd.f32 0.0, %v2377
    %v2379 = vpop.f32.mrb[0].mxu0
    %v2380 = vadd.f32 0.0, %v2379
    %v2381 = vpop.f32.mrb[0].mxu0
    %v2382 = vadd.f32 0.0, %v2381
    %2383 = vmatprep.mubr.bf16.mxu0 0
    %2384 = vmatmul.mubr.bf16.gmra.mrb[0].mxu0 %v2286
    %v2385 = vpop.f32.mrb[0].mxu0
    %v2386 = vadd.f32 0.0, %v2385
    %v2387 = vpop.f32.mrb[0].mxu0
    %v2388 = vadd.f32 0.0, %v2387
    %v2389 = vpop.f32.mrb[0].mxu0
    %v2390 = vadd.f32 0.0, %v2389
    %v2391 = vpop.f32.mrb[0].mxu0
    %v2392 = vadd.f32 0.0, %v2391
    %2393 = vdwg.mxu0
    %2394 = vmatprep.subr.bf16.mxu0 %v2160
    %2395 = vmatpush1.bf16.msra.mxu0 %v2159
    %2396 = vmatprep.subr.bf16.mxu0 %v2181
    %2397 = vmatpush1.bf16.msra.mxu0 %v2180
    %2398 = vmatprep.subr.bf16.mxu0 %v2202
    %2399 = vmatpush1.bf16.msra.mxu0 %v2201
    %2400 = vmatprep.subr.bf16.mxu0 0
    %2401 = vmatpush1.bf16.msra.mxu0 0
    %2402 = vmatprep.subr.bf16.mxu0 0
    %2403 = vmatpush1.bf16.msra.mxu0 0
    %2404 = vmatprep.subr.bf16.mxu0 0
    %2405 = vmatpush1.bf16.msra.mxu0 0
    %2406 = vmatprep.subr.bf16.mxu0 0
    %2407 = vmatpush1.bf16.msra.mxu0 0
    %2408 = vmatprep.subr.bf16.mxu0 0
    %2409 = vmatpush1.bf16.msra.mxu0 0
    %2410 = vmatprep.subr.bf16.mxu0 0
    %2411 = vmatpush1.bf16.msra.mxu0 0
    %2412 = vmatprep.subr.bf16.mxu0 0
    %2413 = vmatpush1.bf16.msra.mxu0 0
    %2414 = vmatprep.subr.bf16.mxu0 0
    %2415 = vmatpush1.bf16.msra.mxu0 0
    %2416 = vmatprep.subr.bf16.mxu0 0
    %2417 = vmatpush1.bf16.msra.mxu0 0
    %2418 = vmatprep.subr.bf16.mxu0 0
    %2419 = vmatpush1.bf16.msra.mxu0 0
    %2420 = vmatprep.subr.bf16.mxu0 0
    %2421 = vmatpush1.bf16.msra.mxu0 0
    %2422 = vmatprep.subr.bf16.mxu0 0
    %2423 = vmatpush1.bf16.msra.mxu0 0
    %2424 = vmatprep.subr.bf16.mxu0 0
    %2425 = vmatpush1.bf16.msra.mxu0 0
    %2426 = vmatprep.mubr.bf16.mxu0 0
    %2427 = vmatmul.mubr.bf16.gmra.mrb[0].mxu0 %v2283
    %v2428 = vpop.f32.mrb[0].mxu0
    %v2429 = vadd.f32 0.0, %v2428
    %v2430 = vpop.f32.mrb[0].mxu0
    %v2431 = vadd.f32 0.0, %v2430
    %v2432 = vpop.f32.mrb[0].mxu0
    %v2433 = vadd.f32 0.0, %v2432
    %v2434 = vpop.f32.mrb[0].mxu0
    %v2435 = vadd.f32 0.0, %v2434
    %2436 = vmatprep.mubr.bf16.mxu0 0
    %2437 = vmatmul.mubr.bf16.gmra.mrb[0].mxu0 %v2286
    %v2438 = vpop.f32.mrb[0].mxu0
    %v2439 = vadd.f32 0.0, %v2438
    %v2440 = vpop.f32.mrb[0].mxu0
    %v2441 = vadd.f32 0.0, %v2440
    %v2442 = vpop.f32.mrb[0].mxu0
    %v2443 = vadd.f32 0.0, %v2442
    %v2444 = vpop.f32.mrb[0].mxu0
    %v2445 = vadd.f32 0.0, %v2444
    %2446 = vdwg.mxu0
    %2447 = vmatprep.subr.bf16.mxu0 %v2162
    %2448 = vmatpush1.bf16.msra.mxu0 %v2161
    %2449 = vmatprep.subr.bf16.mxu0 %v2183
    %2450 = vmatpush1.bf16.msra.mxu0 %v2182
    %2451 = vmatprep.subr.bf16.mxu0 %v2204
    %2452 = vmatpush1.bf16.msra.mxu0 %v2203
    %2453 = vmatprep.subr.bf16.mxu0 0
    %2454 = vmatpush1.bf16.msra.mxu0 0
    %2455 = vmatprep.subr.bf16.mxu0 0
    %2456 = vmatpush1.bf16.msra.mxu0 0
    %2457 = vmatprep.subr.bf16.mxu0 0
    %2458 = vmatpush1.bf16.msra.mxu0 0
    %2459 = vmatprep.subr.bf16.mxu0 0
    %2460 = vmatpush1.bf16.msra.mxu0 0
    %2461 = vmatprep.subr.bf16.mxu0 0
    %2462 = vmatpush1.bf16.msra.mxu0 0
    %2463 = vmatprep.subr.bf16.mxu0 0
    %2464 = vmatpush1.bf16.msra.mxu0 0
    %2465 = vmatprep.subr.bf16.mxu0 0
    %2466 = vmatpush1.bf16.msra.mxu0 0
    %2467 = vmatprep.subr.bf16.mxu0 0
    %2468 = vmatpush1.bf16.msra.mxu0 0
    %2469 = vmatprep.subr.bf16.mxu0 0
    %2470 = vmatpush1.bf16.msra.mxu0 0
    %2471 = vmatprep.subr.bf16.mxu0 0
    %2472 = vmatpush1.bf16.msra.mxu0 0
    %2473 = vmatprep.subr.bf16.mxu0 0
    %2474 = vmatpush1.bf16.msra.mxu0 0
    %2475 = vmatprep.subr.bf16.mxu0 0
    %2476 = vmatpush1.bf16.msra.mxu0 0
    %2477 = vmatprep.subr.bf16.mxu0 0
    %2478 = vmatpush1.bf16.msra.mxu0 0
    %2479 = vmatprep.mubr.bf16.mxu0 0
    %2480 = vmatmul.mubr.bf16.gmra.mrb[0].mxu0 %v2283
    %v2481 = vpop.f32.mrb[0].mxu0
    %v2482 = vadd.f32 0.0, %v2481
    %v2483 = vpop.f32.mrb[0].mxu0
    %v2484 = vadd.f32 0.0, %v2483
    %v2485 = vpop.f32.mrb[0].mxu0
    %v2486 = vadd.f32 0.0, %v2485
    %v2487 = vpop.f32.mrb[0].mxu0
    %v2488 = vadd.f32 0.0, %v2487
    %2489 = vmatprep.mubr.bf16.mxu0 0
    %2490 = vmatmul.mubr.bf16.gmra.mrb[0].mxu0 %v2286
    %v2491 = vpop.f32.mrb[0].mxu0
    %v2492 = vadd.f32 0.0, %v2491
    %v2493 = vpop.f32.mrb[0].mxu0
    %v2494 = vadd.f32 0.0, %v2493
    %v2495 = vpop.f32.mrb[0].mxu0
    %v2496 = vadd.f32 0.0, %v2495
    %v2497 = vpop.f32.mrb[0].mxu0
    %v2498 = vadd.f32 0.0, %v2497
    %2499 = vdwg.mxu0
    %2500 = vmatprep.subr.bf16.mxu0 %v2164
    %2501 = vmatpush1.bf16.msra.mxu0 %v2163
    %2502 = vmatprep.subr.bf16.mxu0 %v2185
    %2503 = vmatpush1.bf16.msra.mxu0 %v2184
    %2504 = vmatprep.subr.bf16.mxu0 %v2206
    %2505 = vmatpush1.bf16.msra.mxu0 %v2205
    %2506 = vmatprep.subr.bf16.mxu0 0
    %2507 = vmatpush1.bf16.msra.mxu0 0
    %2508 = vmatprep.subr.bf16.mxu0 0
    %2509 = vmatpush1.bf16.msra.mxu0 0
    %2510 = vmatprep.subr.bf16.mxu0 0
    %2511 = vmatpush1.bf16.msra.mxu0 0
    %2512 = vmatprep.subr.bf16.mxu0 0
    %2513 = vmatpush1.bf16.msra.mxu0 0
    %2514 = vmatprep.subr.bf16.mxu0 0
    %2515 = vmatpush1.bf16.msra.mxu0 0
    %2516 = vmatprep.subr.bf16.mxu0 0
    %2517 = vmatpush1.bf16.msra.mxu0 0
    %2518 = vmatprep.subr.bf16.mxu0 0
    %2519 = vmatpush1.bf16.msra.mxu0 0
    %2520 = vmatprep.subr.bf16.mxu0 0
    %2521 = vmatpush1.bf16.msra.mxu0 0
    %2522 = vmatprep.subr.bf16.mxu0 0
    %2523 = vmatpush1.bf16.msra.mxu0 0
    %2524 = vmatprep.subr.bf16.mxu0 0
    %2525 = vmatpush1.bf16.msra.mxu0 0
    %2526 = vmatprep.subr.bf16.mxu0 0
    %2527 = vmatpush1.bf16.msra.mxu0 0
    %2528 = vmatprep.subr.bf16.mxu0 0
    %2529 = vmatpush1.bf16.msra.mxu0 0
    %2530 = vmatprep.subr.bf16.mxu0 0
    %2531 = vmatpush1.bf16.msra.mxu0 0
    %2532 = vmatprep.mubr.bf16.mxu0 0
    %2533 = vmatmul.mubr.bf16.gmra.mrb[0].mxu0 %v2283
    %v2534 = vpop.f32.mrb[0].mxu0
    %v2535 = vadd.f32 0.0, %v2534
    %v2536 = vpop.f32.mrb[0].mxu0
    %v2537 = vadd.f32 0.0, %v2536
    %v2538 = vpop.f32.mrb[0].mxu0
    %v2539 = vadd.f32 0.0, %v2538
    %v2540 = vpop.f32.mrb[0].mxu0
    %v2541 = vadd.f32 0.0, %v2540
    %2542 = vmatprep.mubr.bf16.mxu0 0
    %2543 = vmatmul.mubr.bf16.gmra.mrb[0].mxu0 %v2286
    %v2544 = vpop.f32.mrb[0].mxu0
    %v2545 = vadd.f32 0.0, %v2544
    %v2546 = vpop.f32.mrb[0].mxu0
    %v2547 = vadd.f32 0.0, %v2546
    %v2548 = vpop.f32.mrb[0].mxu0
    %v2549 = vadd.f32 0.0, %v2548
    %v2550 = vpop.f32.mrb[0].mxu0
    %v2551 = vadd.f32 0.0, %v2550
    %2552 = vdwg.mxu0
    %2553 = vmatprep.subr.bf16.mxu0 %v2166
    %2554 = vmatpush1.bf16.msra.mxu0 %v2165
    %2555 = vmatprep.subr.bf16.mxu0 %v2187
    %2556 = vmatpush1.bf16.msra.mxu0 %v2186
    %2557 = vmatprep.subr.bf16.mxu0 %v2208
    %2558 = vmatpush1.bf16.msra.mxu0 %v2207
    %2559 = vmatprep.subr.bf16.mxu0 0
    %2560 = vmatpush1.bf16.msra.mxu0 0
    %2561 = vmatprep.subr.bf16.mxu0 0
    %2562 = vmatpush1.bf16.msra.mxu0 0
    %2563 = vmatprep.subr.bf16.mxu0 0
    %2564 = vmatpush1.bf16.msra.mxu0 0
    %2565 = vmatprep.subr.bf16.mxu0 0
    %2566 = vmatpush1.bf16.msra.mxu0 0
    %2567 = vmatprep.subr.bf16.mxu0 0
    %2568 = vmatpush1.bf16.msra.mxu0 0
    %2569 = vmatprep.subr.bf16.mxu0 0
    %2570 = vmatpush1.bf16.msra.mxu0 0
    %2571 = vmatprep.subr.bf16.mxu0 0
    %2572 = vmatpush1.bf16.msra.mxu0 0
    %2573 = vmatprep.subr.bf16.mxu0 0
    %2574 = vmatpush1.bf16.msra.mxu0 0
    %2575 = vmatprep.subr.bf16.mxu0 0
    %2576 = vmatpush1.bf16.msra.mxu0 0
    %2577 = vmatprep.subr.bf16.mxu0 0
    %2578 = vmatpush1.bf16.msra.mxu0 0
    %2579 = vmatprep.subr.bf16.mxu0 0
    %2580 = vmatpush1.bf16.msra.mxu0 0
    %2581 = vmatprep.subr.bf16.mxu0 0
    %2582 = vmatpush1.bf16.msra.mxu0 0
    %2583 = vmatprep.subr.bf16.mxu0 0
    %2584 = vmatpush1.bf16.msra.mxu0 0
    %2585 = vmatprep.mubr.bf16.mxu0 0
    %2586 = vmatmul.mubr.bf16.gmra.mrb[0].mxu0 %v2283
    %v2587 = vpop.f32.mrb[0].mxu0
    %v2588 = vadd.f32 0.0, %v2587
    %v2589 = vpop.f32.mrb[0].mxu0
    %v2590 = vadd.f32 0.0, %v2589
    %v2591 = vpop.f32.mrb[0].mxu0
    %v2592 = vadd.f32 0.0, %v2591
    %v2593 = vpop.f32.mrb[0].mxu0
    %v2594 = vadd.f32 0.0, %v2593
    %2595 = vmatprep.mubr.bf16.mxu0 0
    %2596 = vmatmul.mubr.bf16.gmra.mrb[0].mxu0 %v2286
    %v2597 = vpop.f32.mrb[0].mxu0
    %v2598 = vadd.f32 0.0, %v2597
    %v2599 = vpop.f32.mrb[0].mxu0
    %v2600 = vadd.f32 0.0, %v2599
    %v2601 = vpop.f32.mrb[0].mxu0
    %v2602 = vadd.f32 0.0, %v2601
    %v2603 = vpop.f32.mrb[0].mxu0
    %v2604 = vadd.f32 0.0, %v2603
    %2605 = vdwg.mxu0
    %2606 = vmatprep.subr.bf16.mxu0 %v2168
    %2607 = vmatpush1.bf16.msra.mxu0 %v2167
    %2608 = vmatprep.subr.bf16.mxu0 %v2189
    %2609 = vmatpush1.bf16.msra.mxu0 %v2188
    %2610 = vmatprep.subr.bf16.mxu0 %v2210
    %2611 = vmatpush1.bf16.msra.mxu0 %v2209
    %2612 = vmatprep.subr.bf16.mxu0 0
    %2613 = vmatpush1.bf16.msra.mxu0 0
    %2614 = vmatprep.subr.bf16.mxu0 0
    %2615 = vmatpush1.bf16.msra.mxu0 0
    %2616 = vmatprep.subr.bf16.mxu0 0
    %2617 = vmatpush1.bf16.msra.mxu0 0
    %2618 = vmatprep.subr.bf16.mxu0 0
    %2619 = vmatpush1.bf16.msra.mxu0 0
    %2620 = vmatprep.subr.bf16.mxu0 0
    %2621 = vmatpush1.bf16.msra.mxu0 0
    %2622 = vmatprep.subr.bf16.mxu0 0
    %2623 = vmatpush1.bf16.msra.mxu0 0
    %2624 = vmatprep.subr.bf16.mxu0 0
    %2625 = vmatpush1.bf16.msra.mxu0 0
    %2626 = vmatprep.subr.bf16.mxu0 0
    %2627 = vmatpush1.bf16.msra.mxu0 0
    %2628 = vmatprep.subr.bf16.mxu0 0
    %2629 = vmatpush1.bf16.msra.mxu0 0
    %2630 = vmatprep.subr.bf16.mxu0 0
    %2631 = vmatpush1.bf16.msra.mxu0 0
    %2632 = vmatprep.subr.bf16.mxu0 0
    %2633 = vmatpush1.bf16.msra.mxu0 0
    %2634 = vmatprep.subr.bf16.mxu0 0
    %2635 = vmatpush1.bf16.msra.mxu0 0
    %2636 = vmatprep.subr.bf16.mxu0 0
    %2637 = vmatpush1.bf16.msra.mxu0 0
    %2638 = vmatprep.mubr.bf16.mxu0 0
    %2639 = vmatmul.mubr.bf16.gmra.mrb[0].mxu0 %v2283
    %v2640 = vpop.f32.mrb[0].mxu0
    %v2641 = vadd.f32 0.0, %v2640
    %v2642 = vpop.f32.mrb[0].mxu0
    %v2643 = vadd.f32 0.0, %v2642
    %v2644 = vpop.f32.mrb[0].mxu0
    %v2645 = vadd.f32 0.0, %v2644
    %v2646 = vpop.f32.mrb[0].mxu0
    %v2647 = vadd.f32 0.0, %v2646
    %2648 = vmatprep.mubr.bf16.mxu0 0
    %2649 = vmatmul.mubr.bf16.gmra.mrb[0].mxu0 %v2286
    %v2650 = vpop.f32.mrb[0].mxu0
    %v2651 = vadd.f32 0.0, %v2650
    %v2652 = vpop.f32.mrb[0].mxu0
    %v2653 = vadd.f32 0.0, %v2652
    %v2654 = vpop.f32.mrb[0].mxu0
    %v2655 = vadd.f32 0.0, %v2654
    %v2656 = vpop.f32.mrb[0].mxu0
    %v2657 = vadd.f32 0.0, %v2656
    %2658 = vdwg.mxu0
    %2659 = vmatprep.subr.bf16.mxu0 %v2170
    %2660 = vmatpush1.bf16.msra.mxu0 %v2169
    %2661 = vmatprep.subr.bf16.mxu0 %v2191
    %2662 = vmatpush1.bf16.msra.mxu0 %v2190
    %2663 = vmatprep.subr.bf16.mxu0 %v2212
    %2664 = vmatpush1.bf16.msra.mxu0 %v2211
    %2665 = vmatprep.subr.bf16.mxu0 0
    %2666 = vmatpush1.bf16.msra.mxu0 0
    %2667 = vmatprep.subr.bf16.mxu0 0
    %2668 = vmatpush1.bf16.msra.mxu0 0
    %2669 = vmatprep.subr.bf16.mxu0 0
    %2670 = vmatpush1.bf16.msra.mxu0 0
    %2671 = vmatprep.subr.bf16.mxu0 0
    %2672 = vmatpush1.bf16.msra.mxu0 0
    %2673 = vmatprep.subr.bf16.mxu0 0
    %2674 = vmatpush1.bf16.msra.mxu0 0
    %2675 = vmatprep.subr.bf16.mxu0 0
    %2676 = vmatpush1.bf16.msra.mxu0 0
    %2677 = vmatprep.subr.bf16.mxu0 0
    %2678 = vmatpush1.bf16.msra.mxu0 0
    %2679 = vmatprep.subr.bf16.mxu0 0
    %2680 = vmatpush1.bf16.msra.mxu0 0
    %2681 = vmatprep.subr.bf16.mxu0 0
    %2682 = vmatpush1.bf16.msra.mxu0 0
    %2683 = vmatprep.subr.bf16.mxu0 0
    %2684 = vmatpush1.bf16.msra.mxu0 0
    %2685 = vmatprep.subr.bf16.mxu0 0
    %2686 = vmatpush1.bf16.msra.mxu0 0
    %2687 = vmatprep.subr.bf16.mxu0 0
    %2688 = vmatpush1.bf16.msra.mxu0 0
    %2689 = vmatprep.subr.bf16.mxu0 0
    %2690 = vmatpush1.bf16.msra.mxu0 0
    %2691 = vmatprep.mubr.bf16.mxu0 0
    %2692 = vmatmul.mubr.bf16.gmra.mrb[0].mxu0 %v2283
    %v2693 = vpop.f32.mrb[0].mxu0
    %v2694 = vadd.f32 0.0, %v2693
    %v2695 = vpop.f32.mrb[0].mxu0
    %v2696 = vadd.f32 0.0, %v2695
    %v2697 = vpop.f32.mrb[0].mxu0
    %v2698 = vadd.f32 0.0, %v2697
    %v2699 = vpop.f32.mrb[0].mxu0
    %v2700 = vadd.f32 0.0, %v2699
    %2701 = vmatprep.mubr.bf16.mxu0 0
    %2702 = vmatmul.mubr.bf16.gmra.mrb[0].mxu0 %v2286
    %v2703 = vpop.f32.mrb[0].mxu0
    %v2704 = vadd.f32 0.0, %v2703
    %v2705 = vpop.f32.mrb[0].mxu0
    %v2706 = vadd.f32 0.0, %v2705
    %v2707 = vpop.f32.mrb[0].mxu0
    %v2708 = vadd.f32 0.0, %v2707
    %v2709 = vpop.f32.mrb[0].mxu0
    %v2710 = vadd.f32 0.0, %v2709
    %2711 = vdwg.mxu0
    %2712 = vmatprep.subr.bf16.mxu0 %v2172
    %2713 = vmatpush1.bf16.msra.mxu0 %v2171
    %2714 = vmatprep.subr.bf16.mxu0 %v2193
    %2715 = vmatpush1.bf16.msra.mxu0 %v2192
    %2716 = vmatprep.subr.bf16.mxu0 %v2214
    %2717 = vmatpush1.bf16.msra.mxu0 %v2213
    %2718 = vmatprep.subr.bf16.mxu0 0
    %2719 = vmatpush1.bf16.msra.mxu0 0
    %2720 = vmatprep.subr.bf16.mxu0 0
    %2721 = vmatpush1.bf16.msra.mxu0 0
    %2722 = vmatprep.subr.bf16.mxu0 0
    %2723 = vmatpush1.bf16.msra.mxu0 0
    %2724 = vmatprep.subr.bf16.mxu0 0
    %2725 = vmatpush1.bf16.msra.mxu0 0
    %2726 = vmatprep.subr.bf16.mxu0 0
    %2727 = vmatpush1.bf16.msra.mxu0 0
    %2728 = vmatprep.subr.bf16.mxu0 0
    %2729 = vmatpush1.bf16.msra.mxu0 0
    %2730 = vmatprep.subr.bf16.mxu0 0
    %2731 = vmatpush1.bf16.msra.mxu0 0
    %2732 = vmatprep.subr.bf16.mxu0 0
    %2733 = vmatpush1.bf16.msra.mxu0 0
    %2734 = vmatprep.subr.bf16.mxu0 0
    %2735 = vmatpush1.bf16.msra.mxu0 0
    %2736 = vmatprep.subr.bf16.mxu0 0
    %2737 = vmatpush1.bf16.msra.mxu0 0
    %2738 = vmatprep.subr.bf16.mxu0 0
    %2739 = vmatpush1.bf16.msra.mxu0 0
    %2740 = vmatprep.subr.bf16.mxu0 0
    %2741 = vmatpush1.bf16.msra.mxu0 0
    %2742 = vmatprep.subr.bf16.mxu0 0
    %2743 = vmatpush1.bf16.msra.mxu0 0
    %2744 = vmatprep.mubr.bf16.mxu0 0
    %2745 = vmatmul.mubr.bf16.gmra.mrb[0].mxu0 %v2283
    %v2746 = vpop.f32.mrb[0].mxu0
    %v2747 = vadd.f32 0.0, %v2746
    %v2748 = vpop.f32.mrb[0].mxu0
    %v2749 = vadd.f32 0.0, %v2748
    %v2750 = vpop.f32.mrb[0].mxu0
    %v2751 = vadd.f32 0.0, %v2750
    %v2752 = vpop.f32.mrb[0].mxu0
    %v2753 = vadd.f32 0.0, %v2752
    %2754 = vmatprep.mubr.bf16.mxu0 0
    %2755 = vmatmul.mubr.bf16.gmra.mrb[0].mxu0 %v2286
    %v2756 = vpop.f32.mrb[0].mxu0
    %v2757 = vadd.f32 0.0, %v2756
    %v2758 = vpop.f32.mrb[0].mxu0
    %v2759 = vadd.f32 0.0, %v2758
    %v2760 = vpop.f32.mrb[0].mxu0
    %v2761 = vadd.f32 0.0, %v2760
    %v2762 = vpop.f32.mrb[0].mxu0
    %v2763 = vadd.f32 0.0, %v2762
    %2764 = vdwg.mxu0
    %2765 = vmatprep.subr.bf16.mxu0 %v2174
    %2766 = vmatpush1.bf16.msra.mxu0 %v2173
    %2767 = vmatprep.subr.bf16.mxu0 %v2195
    %2768 = vmatpush1.bf16.msra.mxu0 %v2194
    %2769 = vmatprep.subr.bf16.mxu0 %v2216
    %2770 = vmatpush1.bf16.msra.mxu0 %v2215
    %2771 = vmatprep.subr.bf16.mxu0 0
    %2772 = vmatpush1.bf16.msra.mxu0 0
    %2773 = vmatprep.subr.bf16.mxu0 0
    %2774 = vmatpush1.bf16.msra.mxu0 0
    %2775 = vmatprep.subr.bf16.mxu0 0
    %2776 = vmatpush1.bf16.msra.mxu0 0
    %2777 = vmatprep.subr.bf16.mxu0 0
    %2778 = vmatpush1.bf16.msra.mxu0 0
    %2779 = vmatprep.subr.bf16.mxu0 0
    %2780 = vmatpush1.bf16.msra.mxu0 0
    %2781 = vmatprep.subr.bf16.mxu0 0
    %2782 = vmatpush1.bf16.msra.mxu0 0
    %2783 = vmatprep.subr.bf16.mxu0 0
    %2784 = vmatpush1.bf16.msra.mxu0 0
    %2785 = vmatprep.subr.bf16.mxu0 0
    %2786 = vmatpush1.bf16.msra.mxu0 0
    %2787 = vmatprep.subr.bf16.mxu0 0
    %2788 = vmatpush1.bf16.msra.mxu0 0
    %2789 = vmatprep.subr.bf16.mxu0 0
    %2790 = vmatpush1.bf16.msra.mxu0 0
    %2791 = vmatprep.subr.bf16.mxu0 0
    %2792 = vmatpush1.bf16.msra.mxu0 0
    %2793 = vmatprep.subr.bf16.mxu0 0
    %2794 = vmatpush1.bf16.msra.mxu0 0
    %2795 = vmatprep.subr.bf16.mxu0 0
    %2796 = vmatpush1.bf16.msra.mxu0 0
    %2797 = vmatprep.mubr.bf16.mxu0 0
    %2798 = vmatmul.mubr.bf16.gmra.mrb[0].mxu0 %v2283
    %v2799 = vpop.f32.mrb[0].mxu0
    %v2800 = vadd.f32 0.0, %v2799
    %v2801 = vpop.f32.mrb[0].mxu0
    %v2802 = vadd.f32 0.0, %v2801
    %v2803 = vpop.f32.mrb[0].mxu0
    %v2804 = vadd.f32 0.0, %v2803
    %v2805 = vpop.f32.mrb[0].mxu0
    %v2806 = vadd.f32 0.0, %v2805
    %2807 = vmatprep.mubr.bf16.mxu0 0
    %2808 = vmatmul.mubr.bf16.gmra.mrb[0].mxu0 %v2286
    %v2809 = vpop.f32.mrb[0].mxu0
    %v2810 = vadd.f32 0.0, %v2809
    %v2811 = vpop.f32.mrb[0].mxu0
    %v2812 = vadd.f32 0.0, %v2811
    %v2813 = vpop.f32.mrb[0].mxu0
    %v2814 = vadd.f32 0.0, %v2813
    %v2815 = vpop.f32.mrb[0].mxu0
    %v2816 = vadd.f32 0.0, %v2815
    %2817 = vdwg.mxu0
    %2818 = vmatprep.subr.bf16.mxu0 0
    %2819 = vmatpush1.bf16.msra.mxu0 %v2175
    %2820 = vmatprep.subr.bf16.mxu0 0
    %2821 = vmatpush1.bf16.msra.mxu0 %v2196
    %2822 = vmatprep.subr.bf16.mxu0 0
    %2823 = vmatpush1.bf16.msra.mxu0 %v2217
    %2824 = vmatprep.subr.bf16.mxu0 0
    %2825 = vmatpush1.bf16.msra.mxu0 0
    %2826 = vmatprep.subr.bf16.mxu0 0
    %2827 = vmatpush1.bf16.msra.mxu0 0
    %2828 = vmatprep.subr.bf16.mxu0 0
    %2829 = vmatpush1.bf16.msra.mxu0 0
    %2830 = vmatprep.subr.bf16.mxu0 0
    %2831 = vmatpush1.bf16.msra.mxu0 0
    %2832 = vmatprep.subr.bf16.mxu0 0
    %2833 = vmatpush1.bf16.msra.mxu0 0
    %2834 = vmatprep.subr.bf16.mxu0 0
    %2835 = vmatpush1.bf16.msra.mxu0 0
    %2836 = vmatprep.subr.bf16.mxu0 0
    %2837 = vmatpush1.bf16.msra.mxu0 0
    %2838 = vmatprep.subr.bf16.mxu0 0
    %2839 = vmatpush1.bf16.msra.mxu0 0
    %2840 = vmatprep.subr.bf16.mxu0 0
    %2841 = vmatpush1.bf16.msra.mxu0 0
    %2842 = vmatprep.subr.bf16.mxu0 0
    %2843 = vmatpush1.bf16.msra.mxu0 0
    %2844 = vmatprep.subr.bf16.mxu0 0
    %2845 = vmatpush1.bf16.msra.mxu0 0
    %2846 = vmatprep.subr.bf16.mxu0 0
    %2847 = vmatpush1.bf16.msra.mxu0 0
    %2848 = vmatprep.subr.bf16.mxu0 0
    %2849 = vmatpush1.bf16.msra.mxu0 0
    %2850 = vmatprep.mubr.bf16.mxu0 0
    %2851 = vmatmul.mubr.bf16.gmra.mrb[0].mxu0 %v2283
    %v2852 = vpop.f32.mrb[0].mxu0
    %v2853 = vadd.f32 0.0, %v2852
    %v2854 = vpop.f32.mrb[0].mxu0
    %v2855 = vpop.f32.mrb[0].mxu0
    %v2856 = vadd.f32 0.0, %v2855
    %v2857 = vpop.f32.mrb[0].mxu0
    %2858 = vmatprep.mubr.bf16.mxu0 0
    %2859 = vmatmul.mubr.bf16.gmra.mrb[0].mxu0 %v2286
    %v2860 = vpop.f32.mrb[0].mxu0
    %v2861 = vadd.f32 0.0, %v2860
    %v2862 = vpop.f32.mrb[0].mxu0
    %v2863 = vpop.f32.mrb[0].mxu0
    %v2864 = vadd.f32 0.0, %v2863
    %v2865 = vpop.f32.mrb[0].mxu0
    %2866 = vdwg.mxu0
    %v2867 = vmul.f32 %v2323, %v1476
    %v2868 = vmul.f32 %v2325, %v1478
    %v2869 = vmul.f32 %v2376, %v1517
    %v2870 = vmul.f32 %v2378, %v1519
    %v2871 = vmul.f32 %v2429, %v1558
    %v2872 = vmul.f32 %v2431, %v1560
    %v2873 = vmul.f32 %v2482, %v1599
    %v2874 = vmul.f32 %v2327, %v1601
    %v2875 = vmul.f32 %v2329, %v1640
    %v2876 = vmul.f32 %v2380, %v1642
    %v2877 = vmul.f32 %v2382, %v1681
    %v2878 = vmul.f32 %v2433, %v1683
    %v2879 = vmul.f32 %v2435, %v1722
    %v2880 = vmul.f32 %v2486, %v1724
    %v2881 = vadd.f32 %v2867, %v2874
    %v2882 = vadd.f32 %v2868, %v2875
    %v2883 = vadd.f32 %v2869, %v2876
    %v2884 = vadd.f32 %v2870, %v2877
    %v2885 = vadd.f32 %v2871, %v2878
    %v2886 = vadd.f32 %v2872, %v2879
    %v2887 = vadd.f32 %v2873, %v2880
    %v2888 = vmul.f32 %v2333, %v1763
    %v2889 = vmul.f32 %v2335, %v1765
    %v2890 = vmul.f32 %v2386, %v1804
    %v2891 = vmul.f32 %v2388, %v1806
    %v2892 = vmul.f32 %v2439, %v1845
    %v2893 = vmul.f32 %v2441, %v1847
    %v2894 = vmul.f32 %v2492, %v1886
    %v2895 = vadd.f32 %v2881, %v2888
    %v2896 = vadd.f32 %v2882, %v2889
    %v2897 = vadd.f32 %v2883, %v2890
    %v2898 = vadd.f32 %v2884, %v2891
    %v2899 = vadd.f32 %v2885, %v2892
    %v2900 = vadd.f32 %v2886, %v2893
    %v2901 = vadd.f32 %v2887, %v2894
    %v2902 = vadd.f32 %v2895, %v2337
    %v2903 = vadd.f32 %v2896, %v2339
    %v2904 = vadd.f32 %v2897, %v2390
    %v2905 = vadd.f32 %v2898, %v2392
    %v2906 = vadd.f32 %v2899, %v2443
    %v2907 = vadd.f32 %v2900, %v2445
    %v2908 = vadd.f32 %v2901, %v2496
    %2909 = vst [vmem:[#allocation5] sm:$0xff] %v2902
    %2910 = vst [vmem:[#allocation5 + $0x8] sm:$0xff] %v2903
    %2911 = vst [vmem:[#allocation5 + $0x10] sm:$0xff] %v2904
    %2912 = vst [vmem:[#allocation5 + $0x18] sm:$0xff] %v2905
    %2913 = vst [vmem:[#allocation5 + $0x20] sm:$0xff] %v2906
    %2914 = vst [vmem:[#allocation5 + $0x28] sm:$0xff] %v2907
    %2915 = vst [vmem:[#allocation5 + $0x30] sm:$0xff] %v2908
    %v2916 = vpack.c.bf16 %v2902, %v2902
    %v2917 = vpack.c.bf16 %v2903, %v2903
    %v2918 = vpack.c.bf16 %v2904, %v2904
    %v2919 = vpack.c.bf16 %v2905, %v2905
    %v2920 = vpack.c.bf16 %v2906, %v2906
    %v2921 = vpack.c.bf16 %v2907, %v2907
    %v2922 = vpack.c.bf16 %v2908, %v2908
    %v2923 = vld [vmem:[%s5] sm:$0xf]
    %v2924 = vld [vmem:[%s5 + $0x4] sm:$0xf]
    %v2925 = vld [vmem:[%s5 + $0x8] sm:$0xf]
    %v2926 = vld [vmem:[%s5 + $0xc] sm:$0xf]
    %v2927 = vld [vmem:[%s5 + $0x10] sm:$0xf]
    %v2928 = vld [vmem:[%s5 + $0x14] sm:$0xf]
    %v2929 = vld [vmem:[%s5 + $0x18] sm:$0xf]
    %v2930 = vld [vmem:[%s5 + $0x1c] sm:$0xf]
    %v2931 = vld [vmem:[%s5 + $0x20] sm:$0xf]
    %v2932 = vld [vmem:[%s5 + $0x24] sm:$0xf]
    %v2933 = vld [vmem:[%s5 + $0x28] sm:$0xf]
    %v2934 = vld [vmem:[%s5 + $0x2c] sm:$0xf]
    %v2935 = vld [vmem:[%s5 + $0x30] sm:$0xf]
    %v2936 = vld [vmem:[%s5 + $0x34] sm:$0xf]
    %v2937 = vld [vmem:[%s5 + $0x38] sm:$0xf]
    %v2938 = vld [vmem:[%s5 + $0x3c] sm:$0xf]
    %v2939 = vld [vmem:[%s5 + $0x40] sm:$0xf]
    %v2940 = vld [vmem:[%s5 + $0x44] sm:$0xf]
    %v2941 = vld [vmem:[%s5 + $0x48] sm:$0xf]
    %v2942 = vld [vmem:[%s5 + $0x4c] sm:$0xf]
    %v2943 = vld [vmem:[%s5 + $0x50] sm:$0xf]
    %v2944 = vld [vmem:[%s5 + $0x54] sm:$0xf]
    %v2945 = vld [vmem:[%s5 + $0x58] sm:$0xf]
    %v2946 = vld [vmem:[%s5 + $0x5c] sm:$0xf]
    %v2947 = vld [vmem:[%s5 + $0x60] sm:$0xf]
    %v2948 = vld [vmem:[%s5 + $0x64] sm:$0xf]
    %v2949 = vld [vmem:[%s5 + $0x68] sm:$0xf]
    %v2950 = vld [vmem:[%s5 + $0x6c] sm:$0xf]
    %v2951 = vld [vmem:[%s5 + $0x70] sm:$0xf]
    %v2952 = vld [vmem:[%s5 + $0x74] sm:$0xf]
    %v2953 = vld [vmem:[%s5 + $0x78] sm:$0xf]
    %v2954 = vld [vmem:[%s5 + $0x7c] sm:$0xf]
    %v2955 = vld [vmem:[%s5 + $0x80] sm:$0xf]
    %v2956 = vld [vmem:[%s5 + $0x84] sm:$0xf]
    %v2957 = vld [vmem:[%s5 + $0x88] sm:$0xf]
    %v2958 = vld [vmem:[%s5 + $0x8c] sm:$0xf]
    %v2959 = vld [vmem:[%s5 + $0x90] sm:$0xf]
    %v2960 = vld [vmem:[%s5 + $0x94] sm:$0xf]
    %v2961 = vld [vmem:[%s5 + $0x98] sm:$0xf]
    %v2962 = vld [vmem:[%s5 + $0x9c] sm:$0xf]
    %v2963 = vld [vmem:[%s5 + $0xa0] sm:$0xf]
    %v2964 = vld [vmem:[%s5 + $0xa4] sm:$0xf]
    %v2965 = vld [vmem:[%s5 + $0xa8] sm:$0xf]
    %v2966 = vld [vmem:[%s5 + $0xac] sm:$0xf]
    %v2967 = vld [vmem:[%s5 + $0xb0] sm:$0xf]
    %v2968 = vld [vmem:[%s5 + $0xb4] sm:$0xf]
    %v2969 = vld [vmem:[%s5 + $0xb8] sm:$0xf]
    %v2970 = vld [vmem:[%s5 + $0xbc] sm:$0xf]
    %v2971 = vld [vmem:[%s5 + $0xc0] sm:$0xf]
    %v2972 = vld [vmem:[%s5 + $0xc4] sm:$0xf]
    %v2973 = vld [vmem:[%s5 + $0xc8] sm:$0xf]
    %v2974 = vld [vmem:[%s5 + $0xcc] sm:$0xf]
    %v2975 = vld [vmem:[%s5 + $0xd0] sm:$0xf]
    %v2976 = vld [vmem:[%s5 + $0xd4] sm:$0xf]
    %v2977 = vld [vmem:[%s5 + $0xd8] sm:$0xf]
    %v2978 = vld [vmem:[%s5 + $0xdc] sm:$0xf]
    %v2979 = vld [vmem:[%s5 + $0xe0] sm:$0xf]
    %v2980 = vld [vmem:[%s5 + $0xe4] sm:$0xf]
    %v2981 = vld [vmem:[%s5 + $0xe8] sm:$0xf]
    %v2982 = vld [vmem:[%s5 + $0xec] sm:$0xf]
    %v2983 = vld [vmem:[%s5 + $0xf0] sm:$0xf]
    %v2984 = vld [vmem:[%s5 + $0xf4] sm:$0xf]
    %v2985 = vld [vmem:[%s5 + $0xf8] sm:$0xf]
    %v2986 = vld [vmem:[%s5 + $0xfc] sm:$0xf]
    %v2987 = vld [vmem:[%s5 + $0x100] sm:$0xf]
    %v2988 = vld [vmem:[%s5 + $0x104] sm:$0xf]
    %v2989 = vld [vmem:[%s5 + $0x108] sm:$0xf]
    %v2990 = vld [vmem:[%s5 + $0x10c] sm:$0xf]
    %v2991 = vld [vmem:[%s5 + $0x110] sm:$0xf]
    %v2992 = vld [vmem:[%s5 + $0x114] sm:$0xf]
    %v2993 = vld [vmem:[%s5 + $0x118] sm:$0xf]
    %v2994 = vld [vmem:[%s5 + $0x11c] sm:$0xf]
    %v2995 = vld [vmem:[%s5 + $0x120] sm:$0xf]
    %v2996 = vld [vmem:[%s5 + $0x124] sm:$0xf]
    %v2997 = vld [vmem:[%s5 + $0x128] sm:$0xf]
    %v2998 = vld [vmem:[%s5 + $0x12c] sm:$0xf]
    %v2999 = vld [vmem:[%s5 + $0x130] sm:$0xf]
    %v3000 = vld [vmem:[%s5 + $0x134] sm:$0xf]
    %v3001 = vld [vmem:[%s5 + $0x138] sm:$0xf]
    %v3002 = vld [vmem:[%s5 + $0x13c] sm:$0xf]
    %v3003 = vld [vmem:[%s5 + $0x140] sm:$0xf]
    %v3004 = vld [vmem:[%s5 + $0x144] sm:$0xf]
    %v3005 = vld [vmem:[%s5 + $0x148] sm:$0xf]
    %v3006 = vld [vmem:[%s5 + $0x14c] sm:$0xf]
    %v3007 = vld [vmem:[%s5 + $0x150] sm:$0xf]
    %v3008 = vld [vmem:[%s5 + $0x154] sm:$0xf]
    %v3009 = vld [vmem:[%s5 + $0x158] sm:$0xf]
    %v3010 = vld [vmem:[%s5 + $0x15c] sm:$0xf]
    %v3011 = vld [vmem:[%s5 + $0x160] sm:$0xf]
    %v3012 = vld [vmem:[%s5 + $0x164] sm:$0xf]
    %v3013 = vld [vmem:[%s5 + $0x168] sm:$0xf]
    %v3014 = vld [vmem:[%s5 + $0x16c] sm:$0xf]
    %v3015 = vld [vmem:[%s5 + $0x170] sm:$0xf]
    %v3016 = vld [vmem:[%s5 + $0x174] sm:$0xf]
    %v3017 = vld [vmem:[%s5 + $0x178] sm:$0xf]
    %v3018 = vld [vmem:[%s5 + $0x17c] sm:$0xf]
    %v3019 = vld [vmem:[%s5 + $0x180] sm:$0xf]
    %v3020 = vld [vmem:[%s5 + $0x184] sm:$0xf]
    %v3021 = vld [vmem:[%s5 + $0x188] sm:$0xf]
    %v3022 = vld [vmem:[%s5 + $0x18c] sm:$0xf]
    %v3023 = vld [vmem:[%s5 + $0x190] sm:$0xf]
    %v3024 = vld [vmem:[%s5 + $0x194] sm:$0xf]
    %v3025 = vld [vmem:[%s5 + $0x198] sm:$0xf]
    %v3026 = vld [vmem:[%s5 + $0x19c] sm:$0xf]
    %v3027 = vld [vmem:[%s5 + $0x1a0] sm:$0xf]
    %v3028 = vld [vmem:[%s5 + $0x1a4] sm:$0xf]
    %v3029 = vld [vmem:[%s5 + $0x1a8] sm:$0xf]
    %v3030 = vld [vmem:[%s5 + $0x1ac] sm:$0xf]
    %v3031 = vld [vmem:[%s5 + $0x1b0] sm:$0xf]
    %v3032 = vld [vmem:[%s5 + $0x1b4] sm:$0xf]
    %v3033 = vld [vmem:[%s5 + $0x1b8] sm:$0xf]
    %v3034 = vld [vmem:[%s5 + $0x1bc] sm:$0xf]
    %v3035 = vmul.f32 %v2484, %v1476
    %v3036 = vmul.f32 %v2535, %v1478
    %v3037 = vmul.f32 %v2537, %v1517
    %v3038 = vmul.f32 %v2588, %v1519
    %v3039 = vmul.f32 %v2590, %v1558
    %v3040 = vmul.f32 %v2641, %v1560
    %v3041 = vmul.f32 %v2643, %v1599
    %v3042 = vmul.f32 %v2488, %v1601
    %v3043 = vmul.f32 %v2539, %v1640
    %v3044 = vmul.f32 %v2541, %v1642
    %v3045 = vmul.f32 %v2592, %v1681
    %v3046 = vmul.f32 %v2594, %v1683
    %v3047 = vmul.f32 %v2645, %v1722
    %v3048 = vmul.f32 %v2647, %v1724
    %v3049 = vadd.f32 %v3035, %v3042
    %v3050 = vadd.f32 %v3036, %v3043
    %v3051 = vadd.f32 %v3037, %v3044
    %v3052 = vadd.f32 %v3038, %v3045
    %v3053 = vadd.f32 %v3039, %v3046
    %v3054 = vadd.f32 %v3040, %v3047
    %v3055 = vadd.f32 %v3041, %v3048
    %v3056 = vmul.f32 %v2494, %v1763
    %v3057 = vmul.f32 %v2545, %v1765
    %v3058 = vmul.f32 %v2547, %v1804
    %v3059 = vmul.f32 %v2598, %v1806
    %v3060 = vmul.f32 %v2600, %v1845
    %v3061 = vmul.f32 %v2651, %v1847
    %v3062 = vmul.f32 %v2653, %v1886
    %v3063 = vadd.f32 %v3049, %v3056
    %v3064 = vadd.f32 %v3050, %v3057
    %v3065 = vadd.f32 %v3051, %v3058
    %v3066 = vadd.f32 %v3052, %v3059
    %v3067 = vadd.f32 %v3053, %v3060
    %v3068 = vadd.f32 %v3054, %v3061
    %v3069 = vadd.f32 %v3055, %v3062
    %v3070 = vadd.f32 %v3063, %v2498
    %v3071 = vadd.f32 %v3064, %v2549
    %v3072 = vadd.f32 %v3065, %v2551
    %v3073 = vadd.f32 %v3066, %v2602
    %v3074 = vadd.f32 %v3067, %v2604
    %v3075 = vadd.f32 %v3068, %v2655
    %v3076 = vadd.f32 %v3069, %v2657
    %3077 = vst [vmem:[#allocation5 + $0x38] sm:$0xff] %v3070
    %3078 = vst [vmem:[#allocation5 + $0x40] sm:$0xff] %v3071
    %3079 = vst [vmem:[#allocation5 + $0x48] sm:$0xff] %v3072
    %3080 = vst [vmem:[#allocation5 + $0x50] sm:$0xff] %v3073
    %3081 = vst [vmem:[#allocation5 + $0x58] sm:$0xff] %v3074
    %3082 = vst [vmem:[#allocation5 + $0x60] sm:$0xff] %v3075
    %3083 = vst [vmem:[#allocation5 + $0x68] sm:$0xff] %v3076
    %v3084 = vpack.c.bf16 %v3070, %v3070
    %v3085 = vpack.c.bf16 %v3071, %v3071
    %v3086 = vpack.c.bf16 %v3072, %v3072
    %v3087 = vpack.c.bf16 %v3073, %v3073
    %v3088 = vpack.c.bf16 %v3074, %v3074
    %v3089 = vpack.c.bf16 %v3075, %v3075
    %v3090 = vpack.c.bf16 %v3076, %v3076
    %s3091 = scalar_lea.vmem %s5, 448
    %v3092 = vld [vmem:[%s3091] sm:$0xf]
    %v3093 = vld [vmem:[%s3091 + $0x4] sm:$0xf]
    %v3094 = vld [vmem:[%s3091 + $0x8] sm:$0xf]
    %v3095 = vld [vmem:[%s3091 + $0xc] sm:$0xf]
    %v3096 = vld [vmem:[%s3091 + $0x10] sm:$0xf]
    %v3097 = vld [vmem:[%s3091 + $0x14] sm:$0xf]
    %v3098 = vld [vmem:[%s3091 + $0x18] sm:$0xf]
    %v3099 = vld [vmem:[%s3091 + $0x1c] sm:$0xf]
    %v3100 = vld [vmem:[%s3091 + $0x20] sm:$0xf]
    %v3101 = vld [vmem:[%s3091 + $0x24] sm:$0xf]
    %v3102 = vld [vmem:[%s3091 + $0x28] sm:$0xf]
    %v3103 = vld [vmem:[%s3091 + $0x2c] sm:$0xf]
    %v3104 = vld [vmem:[%s3091 + $0x30] sm:$0xf]
    %v3105 = vld [vmem:[%s3091 + $0x34] sm:$0xf]
    %v3106 = vld [vmem:[%s3091 + $0x38] sm:$0xf]
    %v3107 = vld [vmem:[%s3091 + $0x3c] sm:$0xf]
    %v3108 = vld [vmem:[%s3091 + $0x40] sm:$0xf]
    %v3109 = vld [vmem:[%s3091 + $0x44] sm:$0xf]
    %v3110 = vld [vmem:[%s3091 + $0x48] sm:$0xf]
    %v3111 = vld [vmem:[%s3091 + $0x4c] sm:$0xf]
    %v3112 = vld [vmem:[%s3091 + $0x50] sm:$0xf]
    %v3113 = vld [vmem:[%s3091 + $0x54] sm:$0xf]
    %v3114 = vld [vmem:[%s3091 + $0x58] sm:$0xf]
    %v3115 = vld [vmem:[%s3091 + $0x5c] sm:$0xf]
    %v3116 = vld [vmem:[%s3091 + $0x60] sm:$0xf]
    %v3117 = vld [vmem:[%s3091 + $0x64] sm:$0xf]
    %v3118 = vld [vmem:[%s3091 + $0x68] sm:$0xf]
    %v3119 = vld [vmem:[%s3091 + $0x6c] sm:$0xf]
    %v3120 = vld [vmem:[%s3091 + $0x70] sm:$0xf]
    %v3121 = vld [vmem:[%s3091 + $0x74] sm:$0xf]
    %v3122 = vld [vmem:[%s3091 + $0x78] sm:$0xf]
    %v3123 = vld [vmem:[%s3091 + $0x7c] sm:$0xf]
    %v3124 = vld [vmem:[%s3091 + $0x80] sm:$0xf]
    %v3125 = vld [vmem:[%s3091 + $0x84] sm:$0xf]
    %v3126 = vld [vmem:[%s3091 + $0x88] sm:$0xf]
    %v3127 = vld [vmem:[%s3091 + $0x8c] sm:$0xf]
    %v3128 = vld [vmem:[%s3091 + $0x90] sm:$0xf]
    %v3129 = vld [vmem:[%s3091 + $0x94] sm:$0xf]
    %v3130 = vld [vmem:[%s3091 + $0x98] sm:$0xf]
    %v3131 = vld [vmem:[%s3091 + $0x9c] sm:$0xf]
    %v3132 = vld [vmem:[%s3091 + $0xa0] sm:$0xf]
    %v3133 = vld [vmem:[%s3091 + $0xa4] sm:$0xf]
    %v3134 = vld [vmem:[%s3091 + $0xa8] sm:$0xf]
    %v3135 = vld [vmem:[%s3091 + $0xac] sm:$0xf]
    %v3136 = vld [vmem:[%s3091 + $0xb0] sm:$0xf]
    %v3137 = vld [vmem:[%s3091 + $0xb4] sm:$0xf]
    %v3138 = vld [vmem:[%s3091 + $0xb8] sm:$0xf]
    %v3139 = vld [vmem:[%s3091 + $0xbc] sm:$0xf]
    %v3140 = vld [vmem:[%s3091 + $0xc0] sm:$0xf]
    %v3141 = vld [vmem:[%s3091 + $0xc4] sm:$0xf]
    %v3142 = vld [vmem:[%s3091 + $0xc8] sm:$0xf]
    %v3143 = vld [vmem:[%s3091 + $0xcc] sm:$0xf]
    %v3144 = vld [vmem:[%s3091 + $0xd0] sm:$0xf]
    %v3145 = vld [vmem:[%s3091 + $0xd4] sm:$0xf]
    %v3146 = vld [vmem:[%s3091 + $0xd8] sm:$0xf]
    %v3147 = vld [vmem:[%s3091 + $0xdc] sm:$0xf]
    %v3148 = vld [vmem:[%s3091 + $0xe0] sm:$0xf]
    %v3149 = vld [vmem:[%s3091 + $0xe4] sm:$0xf]
    %v3150 = vld [vmem:[%s3091 + $0xe8] sm:$0xf]
    %v3151 = vld [vmem:[%s3091 + $0xec] sm:$0xf]
    %v3152 = vld [vmem:[%s3091 + $0xf0] sm:$0xf]
    %v3153 = vld [vmem:[%s3091 + $0xf4] sm:$0xf]
    %v3154 = vld [vmem:[%s3091 + $0xf8] sm:$0xf]
    %v3155 = vld [vmem:[%s3091 + $0xfc] sm:$0xf]
    %v3156 = vld [vmem:[%s3091 + $0x100] sm:$0xf]
    %v3157 = vld [vmem:[%s3091 + $0x104] sm:$0xf]
    %v3158 = vld [vmem:[%s3091 + $0x108] sm:$0xf]
    %v3159 = vld [vmem:[%s3091 + $0x10c] sm:$0xf]
    %v3160 = vld [vmem:[%s3091 + $0x110] sm:$0xf]
    %v3161 = vld [vmem:[%s3091 + $0x114] sm:$0xf]
    %v3162 = vld [vmem:[%s3091 + $0x118] sm:$0xf]
    %v3163 = vld [vmem:[%s3091 + $0x11c] sm:$0xf]
    %v3164 = vld [vmem:[%s3091 + $0x120] sm:$0xf]
    %v3165 = vld [vmem:[%s3091 + $0x124] sm:$0xf]
    %v3166 = vld [vmem:[%s3091 + $0x128] sm:$0xf]
    %v3167 = vld [vmem:[%s3091 + $0x12c] sm:$0xf]
    %v3168 = vld [vmem:[%s3091 + $0x130] sm:$0xf]
    %v3169 = vld [vmem:[%s3091 + $0x134] sm:$0xf]
    %v3170 = vld [vmem:[%s3091 + $0x138] sm:$0xf]
    %v3171 = vld [vmem:[%s3091 + $0x13c] sm:$0xf]
    %v3172 = vld [vmem:[%s3091 + $0x140] sm:$0xf]
    %v3173 = vld [vmem:[%s3091 + $0x144] sm:$0xf]
    %v3174 = vld [vmem:[%s3091 + $0x148] sm:$0xf]
    %v3175 = vld [vmem:[%s3091 + $0x14c] sm:$0xf]
    %v3176 = vld [vmem:[%s3091 + $0x150] sm:$0xf]
    %v3177 = vld [vmem:[%s3091 + $0x154] sm:$0xf]
    %v3178 = vld [vmem:[%s3091 + $0x158] sm:$0xf]
    %v3179 = vld [vmem:[%s3091 + $0x15c] sm:$0xf]
    %v3180 = vld [vmem:[%s3091 + $0x160] sm:$0xf]
    %v3181 = vld [vmem:[%s3091 + $0x164] sm:$0xf]
    %v3182 = vld [vmem:[%s3091 + $0x168] sm:$0xf]
    %v3183 = vld [vmem:[%s3091 + $0x16c] sm:$0xf]
    %v3184 = vld [vmem:[%s3091 + $0x170] sm:$0xf]
    %v3185 = vld [vmem:[%s3091 + $0x174] sm:$0xf]
    %v3186 = vld [vmem:[%s3091 + $0x178] sm:$0xf]
    %v3187 = vld [vmem:[%s3091 + $0x17c] sm:$0xf]
    %v3188 = vld [vmem:[%s3091 + $0x180] sm:$0xf]
    %v3189 = vld [vmem:[%s3091 + $0x184] sm:$0xf]
    %v3190 = vld [vmem:[%s3091 + $0x188] sm:$0xf]
    %v3191 = vld [vmem:[%s3091 + $0x18c] sm:$0xf]
    %v3192 = vld [vmem:[%s3091 + $0x190] sm:$0xf]
    %v3193 = vld [vmem:[%s3091 + $0x194] sm:$0xf]
    %v3194 = vld [vmem:[%s3091 + $0x198] sm:$0xf]
    %v3195 = vld [vmem:[%s3091 + $0x19c] sm:$0xf]
    %v3196 = vld [vmem:[%s3091 + $0x1a0] sm:$0xf]
    %v3197 = vld [vmem:[%s3091 + $0x1a4] sm:$0xf]
    %v3198 = vld [vmem:[%s3091 + $0x1a8] sm:$0xf]
    %v3199 = vld [vmem:[%s3091 + $0x1ac] sm:$0xf]
    %v3200 = vld [vmem:[%s3091 + $0x1b0] sm:$0xf]
    %v3201 = vld [vmem:[%s3091 + $0x1b4] sm:$0xf]
    %v3202 = vld [vmem:[%s3091 + $0x1b8] sm:$0xf]
    %v3203 = vld [vmem:[%s3091 + $0x1bc] sm:$0xf]
    %v3316 = vunpack.c.l.b16 %v3092
    %v3317 = vunpack.c.l.b16 %v3093
    %v3318 = vunpack.c.l.b16 %v3094
    %v3319 = vunpack.c.l.b16 %v3095
    %v3320 = vunpack.c.l.b16 %v3096
    %v3321 = vunpack.c.l.b16 %v3097
    %v3322 = vunpack.c.l.b16 %v3098
    %v3323 = vunpack.c.l.b16 %v3099
    %v3324 = vunpack.c.l.b16 %v3100
    %v3325 = vunpack.c.l.b16 %v3101
    %v3326 = vunpack.c.l.b16 %v3102
    %v3327 = vunpack.c.l.b16 %v3103
    %v3328 = vunpack.c.l.b16 %v3104
    %v3329 = vunpack.c.l.b16 %v3105
    %v3330 = vunpack.c.l.b16 %v3106
    %v3331 = vunpack.c.l.b16 %v3107
    %v3332 = vunpack.c.l.b16 %v3108
    %v3333 = vunpack.c.l.b16 %v3109
    %v3334 = vunpack.c.l.b16 %v3110
    %v3335 = vunpack.c.l.b16 %v3111
    %v3336 = vunpack.c.l.b16 %v3112
    %v3337 = vunpack.c.l.b16 %v3113
    %v3338 = vunpack.c.l.b16 %v3114
    %v3339 = vunpack.c.l.b16 %v3115
    %v3340 = vunpack.c.l.b16 %v3116
    %v3341 = vunpack.c.l.b16 %v3117
    %v3342 = vunpack.c.l.b16 %v3118
    %v3343 = vunpack.c.l.b16 %v3119
    %v3344 = vunpack.c.l.b16 %v3120
    %v3345 = vunpack.c.l.b16 %v3121
    %v3346 = vunpack.c.l.b16 %v3122
    %v3347 = vunpack.c.l.b16 %v3123
    %v3348 = vunpack.c.l.b16 %v3124
    %v3349 = vunpack.c.l.b16 %v3125
    %v3350 = vunpack.c.l.b16 %v3126
    %v3351 = vunpack.c.l.b16 %v3127
    %v3352 = vunpack.c.l.b16 %v3128
    %v3353 = vunpack.c.l.b16 %v3129
    %v3354 = vunpack.c.l.b16 %v3130
    %v3355 = vunpack.c.l.b16 %v3131
    %v3356 = vunpack.c.l.b16 %v3132
    %v3357 = vunpack.c.l.b16 %v3133
    %v3358 = vunpack.c.l.b16 %v3134
    %v3359 = vunpack.c.l.b16 %v3135
    %v3360 = vunpack.c.l.b16 %v3136
    %v3361 = vunpack.c.l.b16 %v3137
    %v3362 = vunpack.c.l.b16 %v3138
    %v3363 = vunpack.c.l.b16 %v3139
    %v3364 = vunpack.c.l.b16 %v3140
    %v3365 = vunpack.c.l.b16 %v3141
    %v3366 = vunpack.c.l.b16 %v3142
    %v3367 = vunpack.c.l.b16 %v3143
    %v3368 = vunpack.c.l.b16 %v3144
    %v3369 = vunpack.c.l.b16 %v3145
    %v3370 = vunpack.c.l.b16 %v3146
    %v3371 = vunpack.c.l.b16 %v3147
    %v3372 = vunpack.c.l.b16 %v3148
    %v3373 = vunpack.c.l.b16 %v3149
    %v3374 = vunpack.c.l.b16 %v3150
    %v3375 = vunpack.c.l.b16 %v3151
    %v3376 = vunpack.c.l.b16 %v3152
    %v3377 = vunpack.c.l.b16 %v3153
    %v3378 = vunpack.c.l.b16 %v3154
    %v3379 = vunpack.c.l.b16 %v3155
    %v3380 = vunpack.c.l.b16 %v3156
    %v3381 = vunpack.c.l.b16 %v3157
    %v3382 = vunpack.c.l.b16 %v3158
    %v3383 = vunpack.c.l.b16 %v3159
    %v3384 = vunpack.c.l.b16 %v3160
    %v3385 = vunpack.c.l.b16 %v3161
    %v3386 = vunpack.c.l.b16 %v3162
    %v3387 = vunpack.c.l.b16 %v3163
    %v3388 = vunpack.c.l.b16 %v3164
    %v3389 = vunpack.c.l.b16 %v3165
    %v3390 = vunpack.c.l.b16 %v3166
    %v3391 = vunpack.c.l.b16 %v3167
    %v3392 = vunpack.c.l.b16 %v3168
    %v3393 = vunpack.c.l.b16 %v3169
    %v3394 = vunpack.c.l.b16 %v3170
    %v3395 = vunpack.c.l.b16 %v3171
    %v3396 = vunpack.c.l.b16 %v3172
    %v3397 = vunpack.c.l.b16 %v3173
    %v3398 = vunpack.c.l.b16 %v3174
    %v3399 = vunpack.c.l.b16 %v3175
    %v3400 = vunpack.c.l.b16 %v3176
    %v3401 = vunpack.c.l.b16 %v3177
    %v3402 = vunpack.c.l.b16 %v3178
    %v3403 = vunpack.c.l.b16 %v3179
    %v3404 = vunpack.c.l.b16 %v3180
    %v3405 = vunpack.c.l.b16 %v3181
    %v3406 = vunpack.c.l.b16 %v3182
    %v3407 = vunpack.c.l.b16 %v3183
    %v3408 = vunpack.c.l.b16 %v3184
    %v3409 = vunpack.c.l.b16 %v3185
    %v3410 = vunpack.c.l.b16 %v3186
    %v3411 = vunpack.c.l.b16 %v3187
    %v3412 = vunpack.c.l.b16 %v3188
    %v3413 = vunpack.c.l.b16 %v3189
    %v3414 = vunpack.c.l.b16 %v3190
    %v3415 = vunpack.c.l.b16 %v3191
    %v3416 = vunpack.c.l.b16 %v3192
    %v3417 = vunpack.c.l.b16 %v3193
    %v3418 = vunpack.c.l.b16 %v3194
    %v3419 = vunpack.c.l.b16 %v3195
    %v3420 = vunpack.c.l.b16 %v3196
    %v3421 = vunpack.c.l.b16 %v3197
    %v3422 = vunpack.c.l.b16 %v3198
    %v3423 = vunpack.c.l.b16 %v3199
    %v3424 = vunpack.c.l.b16 %v3200
    %v3425 = vunpack.c.l.b16 %v3201
    %v3426 = vunpack.c.l.b16 %v3202
    %v3427 = vunpack.c.l.b16 %v3203
    %v3428 = vpack.c.b16 %v3317, %v3316
    %v3429 = vpack.c.b16 %v3319, %v3318
    %v3430 = vpack.c.b16 %v3321, %v3320
    %v3431 = vpack.c.b16 %v3323, %v3322
    %v3432 = vpack.c.b16 %v3325, %v3324
    %v3433 = vpack.c.b16 %v3327, %v3326
    %v3434 = vpack.c.b16 %v3329, %v3328
    %v3435 = vpack.c.b16 %v3331, %v3330
    %v3436 = vpack.c.b16 %v3333, %v3332
    %v3437 = vpack.c.b16 %v3335, %v3334
    %v3438 = vpack.c.b16 %v3337, %v3336
    %v3439 = vpack.c.b16 %v3339, %v3338
    %v3440 = vpack.c.b16 %v3341, %v3340
    %v3441 = vpack.c.b16 %v3343, %v3342
    %v3442 = vpack.c.b16 %v3345, %v3344
    %v3443 = vpack.c.b16 %v3347, %v3346
    %v3444 = vpack.c.b16 %v3349, %v3348
    %v3445 = vpack.c.b16 %v3351, %v3350
    %v3446 = vpack.c.b16 %v3353, %v3352
    %v3447 = vpack.c.b16 %v3355, %v3354
    %v3448 = vpack.c.b16 %v3357, %v3356
    %v3449 = vpack.c.b16 %v3359, %v3358
    %v3450 = vpack.c.b16 %v3361, %v3360
    %v3451 = vpack.c.b16 %v3363, %v3362
    %v3452 = vpack.c.b16 %v3365, %v3364
    %v3453 = vpack.c.b16 %v3367, %v3366
    %v3454 = vpack.c.b16 %v3369, %v3368
    %v3455 = vpack.c.b16 %v3371, %v3370
    %v3456 = vpack.c.b16 %v3373, %v3372
    %v3457 = vpack.c.b16 %v3375, %v3374
    %v3458 = vpack.c.b16 %v3377, %v3376
    %v3459 = vpack.c.b16 %v3379, %v3378
    %v3460 = vpack.c.b16 %v3381, %v3380
    %v3461 = vpack.c.b16 %v3383, %v3382
    %v3462 = vpack.c.b16 %v3385, %v3384
    %v3463 = vpack.c.b16 %v3387, %v3386
    %v3464 = vpack.c.b16 %v3389, %v3388
    %v3465 = vpack.c.b16 %v3391, %v3390
    %v3466 = vpack.c.b16 %v3393, %v3392
    %v3467 = vpack.c.b16 %v3395, %v3394
    %v3468 = vpack.c.b16 %v3397, %v3396
    %v3469 = vpack.c.b16 %v3399, %v3398
    %v3470 = vpack.c.b16 %v3401, %v3400
    %v3471 = vpack.c.b16 %v3403, %v3402
    %v3472 = vpack.c.b16 %v3405, %v3404
    %v3473 = vpack.c.b16 %v3407, %v3406
    %v3474 = vpack.c.b16 %v3409, %v3408
    %v3475 = vpack.c.b16 %v3411, %v3410
    %v3476 = vpack.c.b16 %v3413, %v3412
    %v3477 = vpack.c.b16 %v3415, %v3414
    %v3478 = vpack.c.b16 %v3417, %v3416
    %v3479 = vpack.c.b16 %v3419, %v3418
    %v3480 = vpack.c.b16 %v3421, %v3420
    %v3481 = vpack.c.b16 %v3423, %v3422
    %v3482 = vpack.c.b16 %v3425, %v3424
    %v3483 = vpack.c.b16 %v3427, %v3426
    %3540 = vmatprep.subr.bf16.mxu0 0
    %3541 = vmatpush1.bf16.msra.mxu0 %v3428
    %3542 = vmatprep.subr.bf16.mxu0 0
    %3543 = vmatpush1.bf16.msra.mxu0 %v3429
    %3544 = vmatprep.subr.bf16.mxu0 0
    %3545 = vmatpush1.bf16.msra.mxu0 %v3430
    %3546 = vmatprep.subr.bf16.mxu0 0
    %3547 = vmatpush1.bf16.msra.mxu0 %v3431
    %3548 = vmatprep.subr.bf16.mxu0 0
    %3549 = vmatpush1.bf16.msra.mxu0 %v3432
    %3550 = vmatprep.subr.bf16.mxu0 0
    %3551 = vmatpush1.bf16.msra.mxu0 %v3433
    %3552 = vmatprep.subr.bf16.mxu0 0
    %3553 = vmatpush1.bf16.msra.mxu0 %v3434
    %3554 = vmatprep.subr.bf16.mxu0 0
    %3555 = vmatpush1.bf16.msra.mxu0 %v3435
    %3556 = vmatprep.subr.bf16.mxu0 0
    %3557 = vmatpush1.bf16.msra.mxu0 %v3436
    %3558 = vmatprep.subr.bf16.mxu0 0
    %3559 = vmatpush1.bf16.msra.mxu0 %v3437
    %3560 = vmatprep.subr.bf16.mxu0 0
    %3561 = vmatpush1.bf16.msra.mxu0 %v3438
    %3562 = vmatprep.subr.bf16.mxu0 0
    %3563 = vmatpush1.bf16.msra.mxu0 %v3439
    %3564 = vmatprep.subr.bf16.mxu0 0
    %3565 = vmatpush1.bf16.msra.mxu0 %v3440
    %3566 = vmatprep.subr.bf16.mxu0 0
    %3567 = vmatpush1.bf16.msra.mxu0 %v3441
    %3568 = vmatprep.subr.bf16.mxu0 0
    %3569 = vmatpush1.bf16.msra.mxu0 %v3442
    %3570 = vmatprep.subr.bf16.mxu0 0
    %3571 = vmatpush1.bf16.msra.mxu0 %v3443
    %3572 = vmatprep.mubr.bf16.mxu0 %v3085
    %3573 = vmatmul.mubr.bf16.gmra.mrb[0].mxu0 %v3084
    %v3574 = vpop.f32.mrb[0].mxu0
    %v3575 = vadd.f32 0.0, %v3574
    %v3576 = vpop.f32.mrb[0].mxu0
    %v3577 = vpop.f32.mrb[0].mxu0
    %v3578 = vpop.f32.mrb[0].mxu0
    %3579 = vdwg.mxu0
    %3580 = vmatprep.subr.bf16.mxu0 0
    %3581 = vmatpush1.bf16.msra.mxu0 %v3444
    %3582 = vmatprep.subr.bf16.mxu0 0
    %3583 = vmatpush1.bf16.msra.mxu0 %v3445
    %3584 = vmatprep.subr.bf16.mxu0 0
    %3585 = vmatpush1.bf16.msra.mxu0 %v3446
    %3586 = vmatprep.subr.bf16.mxu0 0
    %3587 = vmatpush1.bf16.msra.mxu0 %v3447
    %3588 = vmatprep.subr.bf16.mxu0 0
    %3589 = vmatpush1.bf16.msra.mxu0 %v3448
    %3590 = vmatprep.subr.bf16.mxu0 0
    %3591 = vmatpush1.bf16.msra.mxu0 %v3449
    %3592 = vmatprep.subr.bf16.mxu0 0
    %3593 = vmatpush1.bf16.msra.mxu0 %v3450
    %3594 = vmatprep.subr.bf16.mxu0 0
    %3595 = vmatpush1.bf16.msra.mxu0 %v3451
    %3596 = vmatprep.subr.bf16.mxu0 0
    %3597 = vmatpush1.bf16.msra.mxu0 %v3452
    %3598 = vmatprep.subr.bf16.mxu0 0
    %3599 = vmatpush1.bf16.msra.mxu0 %v3453
    %3600 = vmatprep.subr.bf16.mxu0 0
    %3601 = vmatpush1.bf16.msra.mxu0 %v3454
    %3602 = vmatprep.subr.bf16.mxu0 0
    %3603 = vmatpush1.bf16.msra.mxu0 %v3455
    %3604 = vmatprep.subr.bf16.mxu0 0
    %3605 = vmatpush1.bf16.msra.mxu0 %v3456
    %3606 = vmatprep.subr.bf16.mxu0 0
    %3607 = vmatpush1.bf16.msra.mxu0 %v3457
    %3608 = vmatprep.subr.bf16.mxu0 0
    %3609 = vmatpush1.bf16.msra.mxu0 %v3458
    %3610 = vmatprep.subr.bf16.mxu0 0
    %3611 = vmatpush1.bf16.msra.mxu0 %v3459
    %3612 = vmatprep.mubr.bf16.mxu0 %v3087
    %3613 = vmatmul.mubr.bf16.gmra.mrb[0].mxu0 %v3086
    %v3614 = vpop.f32.mrb[0].mxu0
    %v3615 = vadd.f32 %v3575, %v3614
    %v3616 = vpop.f32.mrb[0].mxu0
    %v3617 = vpop.f32.mrb[0].mxu0
    %v3618 = vpop.f32.mrb[0].mxu0
    %3619 = vdwg.mxu0
    %3620 = vmatprep.subr.bf16.mxu0 0
    %3621 = vmatpush1.bf16.msra.mxu0 %v3460
    %3622 = vmatprep.subr.bf16.mxu0 0
    %3623 = vmatpush1.bf16.msra.mxu0 %v3461
    %3624 = vmatprep.subr.bf16.mxu0 0
    %3625 = vmatpush1.bf16.msra.mxu0 %v3462
    %3626 = vmatprep.subr.bf16.mxu0 0
    %3627 = vmatpush1.bf16.msra.mxu0 %v3463
    %3628 = vmatprep.subr.bf16.mxu0 0
    %3629 = vmatpush1.bf16.msra.mxu0 %v3464
    %3630 = vmatprep.subr.bf16.mxu0 0
    %3631 = vmatpush1.bf16.msra.mxu0 %v3465
    %3632 = vmatprep.subr.bf16.mxu0 0
    %3633 = vmatpush1.bf16.msra.mxu0 %v3466
    %3634 = vmatprep.subr.bf16.mxu0 0
    %3635 = vmatpush1.bf16.msra.mxu0 %v3467
    %3636 = vmatprep.subr.bf16.mxu0 0
    %3637 = vmatpush1.bf16.msra.mxu0 %v3468
    %3638 = vmatprep.subr.bf16.mxu0 0
    %3639 = vmatpush1.bf16.msra.mxu0 %v3469
    %3640 = vmatprep.subr.bf16.mxu0 0
    %3641 = vmatpush1.bf16.msra.mxu0 %v3470
    %3642 = vmatprep.subr.bf16.mxu0 0
    %3643 = vmatpush1.bf16.msra.mxu0 %v3471
    %3644 = vmatprep.subr.bf16.mxu0 0
    %3645 = vmatpush1.bf16.msra.mxu0 %v3472
    %3646 = vmatprep.subr.bf16.mxu0 0
    %3647 = vmatpush1.bf16.msra.mxu0 %v3473
    %3648 = vmatprep.subr.bf16.mxu0 0
    %3649 = vmatpush1.bf16.msra.mxu0 %v3474
    %3650 = vmatprep.subr.bf16.mxu0 0
    %3651 = vmatpush1.bf16.msra.mxu0 %v3475
    %3652 = vmatprep.mubr.bf16.mxu0 %v3089
    %3653 = vmatmul.mubr.bf16.gmra.mrb[0].mxu0 %v3088
    %v3654 = vpop.f32.mrb[0].mxu0
    %v3655 = vadd.f32 %v3615, %v3654
    %v3656 = vpop.f32.mrb[0].mxu0
    %v3657 = vpop.f32.mrb[0].mxu0
    %v3658 = vpop.f32.mrb[0].mxu0
    %3659 = vdwg.mxu0
    %3660 = vmatprep.subr.bf16.mxu0 0
    %3661 = vmatpush1.bf16.msra.mxu0 %v3476
    %3662 = vmatprep.subr.bf16.mxu0 0
    %3663 = vmatpush1.bf16.msra.mxu0 %v3477
    %3664 = vmatprep.subr.bf16.mxu0 0
    %3665 = vmatpush1.bf16.msra.mxu0 %v3478
    %3666 = vmatprep.subr.bf16.mxu0 0
    %3667 = vmatpush1.bf16.msra.mxu0 %v3479
    %3668 = vmatprep.subr.bf16.mxu0 0
    %3669 = vmatpush1.bf16.msra.mxu0 %v3480
    %3670 = vmatprep.subr.bf16.mxu0 0
    %3671 = vmatpush1.bf16.msra.mxu0 %v3481
    %3672 = vmatprep.subr.bf16.mxu0 0
    %3673 = vmatpush1.bf16.msra.mxu0 %v3482
    %3674 = vmatprep.subr.bf16.mxu0 0
    %3675 = vmatpush1.bf16.msra.mxu0 %v3483
    %3676 = vmatprep.subr.bf16.mxu0 0
    %3677 = vmatpush1.bf16.msra.mxu0 0
    %3678 = vmatprep.subr.bf16.mxu0 0
    %3679 = vmatpush1.bf16.msra.mxu0 0
    %3680 = vmatprep.subr.bf16.mxu0 0
    %3681 = vmatpush1.bf16.msra.mxu0 0
    %3682 = vmatprep.subr.bf16.mxu0 0
    %3683 = vmatpush1.bf16.msra.mxu0 0
    %3684 = vmatprep.subr.bf16.mxu0 0
    %3685 = vmatpush1.bf16.msra.mxu0 0
    %3686 = vmatprep.subr.bf16.mxu0 0
    %3687 = vmatpush1.bf16.msra.mxu0 0
    %3688 = vmatprep.subr.bf16.mxu0 0
    %3689 = vmatpush1.bf16.msra.mxu0 0
    %3690 = vmatprep.subr.bf16.mxu0 0
    %3691 = vmatpush1.bf16.msra.mxu0 0
    %3692 = vmatprep.mubr.bf16.mxu0 0
    %3693 = vmatmul.mubr.bf16.gmra.mrb[0].mxu0 %v3090
    %v3694 = vpop.f32.mrb[0].mxu0
    %v3695 = vadd.f32 %v3655, %v3694
    %v3696 = vpop.f32.mrb[0].mxu0
    %v3697 = vpop.f32.mrb[0].mxu0
    %v3698 = vpop.f32.mrb[0].mxu0
    %3699 = vdwg.mxu0
    %v3812 = vunpack.c.l.b16 %v2923
    %v3813 = vunpack.c.l.b16 %v2924
    %v3814 = vunpack.c.l.b16 %v2925
    %v3815 = vunpack.c.l.b16 %v2926
    %v3816 = vunpack.c.l.b16 %v2927
    %v3817 = vunpack.c.l.b16 %v2928
    %v3818 = vunpack.c.l.b16 %v2929
    %v3819 = vunpack.c.l.b16 %v2930
    %v3820 = vunpack.c.l.b16 %v2931
    %v3821 = vunpack.c.l.b16 %v2932
    %v3822 = vunpack.c.l.b16 %v2933
    %v3823 = vunpack.c.l.b16 %v2934
    %v3824 = vunpack.c.l.b16 %v2935
    %v3825 = vunpack.c.l.b16 %v2936
    %v3826 = vunpack.c.l.b16 %v2937
    %v3827 = vunpack.c.l.b16 %v2938
    %v3828 = vunpack.c.l.b16 %v2939
    %v3829 = vunpack.c.l.b16 %v2940
    %v3830 = vunpack.c.l.b16 %v2941
    %v3831 = vunpack.c.l.b16 %v2942
    %v3832 = vunpack.c.l.b16 %v2943
    %v3833 = vunpack.c.l.b16 %v2944
    %v3834 = vunpack.c.l.b16 %v2945
    %v3835 = vunpack.c.l.b16 %v2946
    %v3836 = vunpack.c.l.b16 %v2947
    %v3837 = vunpack.c.l.b16 %v2948
    %v3838 = vunpack.c.l.b16 %v2949
    %v3839 = vunpack.c.l.b16 %v2950
    %v3840 = vunpack.c.l.b16 %v2951
    %v3841 = vunpack.c.l.b16 %v2952
    %v3842 = vunpack.c.l.b16 %v2953
    %v3843 = vunpack.c.l.b16 %v2954
    %v3844 = vunpack.c.l.b16 %v2955
    %v3845 = vunpack.c.l.b16 %v2956
    %v3846 = vunpack.c.l.b16 %v2957
    %v3847 = vunpack.c.l.b16 %v2958
    %v3848 = vunpack.c.l.b16 %v2959
    %v3849 = vunpack.c.l.b16 %v2960
    %v3850 = vunpack.c.l.b16 %v2961
    %v3851 = vunpack.c.l.b16 %v2962
    %v3852 = vunpack.c.l.b16 %v2963
    %v3853 = vunpack.c.l.b16 %v2964
    %v3854 = vunpack.c.l.b16 %v2965
    %v3855 = vunpack.c.l.b16 %v2966
    %v3856 = vunpack.c.l.b16 %v2967
    %v3857 = vunpack.c.l.b16 %v2968
    %v3858 = vunpack.c.l.b16 %v2969
    %v3859 = vunpack.c.l.b16 %v2970
    %v3860 = vunpack.c.l.b16 %v2971
    %v3861 = vunpack.c.l.b16 %v2972
    %v3862 = vunpack.c.l.b16 %v2973
    %v3863 = vunpack.c.l.b16 %v2974
    %v3864 = vunpack.c.l.b16 %v2975
    %v3865 = vunpack.c.l.b16 %v2976
    %v3866 = vunpack.c.l.b16 %v2977
    %v3867 = vunpack.c.l.b16 %v2978
    %v3868 = vunpack.c.l.b16 %v2979
    %v3869 = vunpack.c.l.b16 %v2980
    %v3870 = vunpack.c.l.b16 %v2981
    %v3871 = vunpack.c.l.b16 %v2982
    %v3872 = vunpack.c.l.b16 %v2983
    %v3873 = vunpack.c.l.b16 %v2984
    %v3874 = vunpack.c.l.b16 %v2985
    %v3875 = vunpack.c.l.b16 %v2986
    %v3876 = vunpack.c.l.b16 %v2987
    %v3877 = vunpack.c.l.b16 %v2988
    %v3878 = vunpack.c.l.b16 %v2989
    %v3879 = vunpack.c.l.b16 %v2990
    %v3880 = vunpack.c.l.b16 %v2991
    %v3881 = vunpack.c.l.b16 %v2992
    %v3882 = vunpack.c.l.b16 %v2993
    %v3883 = vunpack.c.l.b16 %v2994
    %v3884 = vunpack.c.l.b16 %v2995
    %v3885 = vunpack.c.l.b16 %v2996
    %v3886 = vunpack.c.l.b16 %v2997
    %v3887 = vunpack.c.l.b16 %v2998
    %v3888 = vunpack.c.l.b16 %v2999
    %v3889 = vunpack.c.l.b16 %v3000
    %v3890 = vunpack.c.l.b16 %v3001
    %v3891 = vunpack.c.l.b16 %v3002
    %v3892 = vunpack.c.l.b16 %v3003
    %v3893 = vunpack.c.l.b16 %v3004
    %v3894 = vunpack.c.l.b16 %v3005
    %v3895 = vunpack.c.l.b16 %v3006
    %v3896 = vunpack.c.l.b16 %v3007
    %v3897 = vunpack.c.l.b16 %v3008
    %v3898 = vunpack.c.l.b16 %v3009
    %v3899 = vunpack.c.l.b16 %v3010
    %v3900 = vunpack.c.l.b16 %v3011
    %v3901 = vunpack.c.l.b16 %v3012
    %v3902 = vunpack.c.l.b16 %v3013
    %v3903 = vunpack.c.l.b16 %v3014
    %v3904 = vunpack.c.l.b16 %v3015
    %v3905 = vunpack.c.l.b16 %v3016
    %v3906 = vunpack.c.l.b16 %v3017
    %v3907 = vunpack.c.l.b16 %v3018
    %v3908 = vunpack.c.l.b16 %v3019
    %v3909 = vunpack.c.l.b16 %v3020
    %v3910 = vunpack.c.l.b16 %v3021
    %v3911 = vunpack.c.l.b16 %v3022
    %v3912 = vunpack.c.l.b16 %v3023
    %v3913 = vunpack.c.l.b16 %v3024
    %v3914 = vunpack.c.l.b16 %v3025
    %v3915 = vunpack.c.l.b16 %v3026
    %v3916 = vunpack.c.l.b16 %v3027
    %v3917 = vunpack.c.l.b16 %v3028
    %v3918 = vunpack.c.l.b16 %v3029
    %v3919 = vunpack.c.l.b16 %v3030
    %v3920 = vunpack.c.l.b16 %v3031
    %v3921 = vunpack.c.l.b16 %v3032
    %v3922 = vunpack.c.l.b16 %v3033
    %v3923 = vunpack.c.l.b16 %v3034
    %v3924 = vpack.c.b16 %v3813, %v3812
    %v3925 = vpack.c.b16 %v3815, %v3814
    %v3926 = vpack.c.b16 %v3817, %v3816
    %v3927 = vpack.c.b16 %v3819, %v3818
    %v3928 = vpack.c.b16 %v3821, %v3820
    %v3929 = vpack.c.b16 %v3823, %v3822
    %v3930 = vpack.c.b16 %v3825, %v3824
    %v3931 = vpack.c.b16 %v3827, %v3826
    %v3932 = vpack.c.b16 %v3829, %v3828
    %v3933 = vpack.c.b16 %v3831, %v3830
    %v3934 = vpack.c.b16 %v3833, %v3832
    %v3935 = vpack.c.b16 %v3835, %v3834
    %v3936 = vpack.c.b16 %v3837, %v3836
    %v3937 = vpack.c.b16 %v3839, %v3838
    %v3938 = vpack.c.b16 %v3841, %v3840
    %v3939 = vpack.c.b16 %v3843, %v3842
    %v3940 = vpack.c.b16 %v3845, %v3844
    %v3941 = vpack.c.b16 %v3847, %v3846
    %v3942 = vpack.c.b16 %v3849, %v3848
    %v3943 = vpack.c.b16 %v3851, %v3850
    %v3944 = vpack.c.b16 %v3853, %v3852
    %v3945 = vpack.c.b16 %v3855, %v3854
    %v3946 = vpack.c.b16 %v3857, %v3856
    %v3947 = vpack.c.b16 %v3859, %v3858
    %v3948 = vpack.c.b16 %v3861, %v3860
    %v3949 = vpack.c.b16 %v3863, %v3862
    %v3950 = vpack.c.b16 %v3865, %v3864
    %v3951 = vpack.c.b16 %v3867, %v3866
    %v3952 = vpack.c.b16 %v3869, %v3868
    %v3953 = vpack.c.b16 %v3871, %v3870
    %v3954 = vpack.c.b16 %v3873, %v3872
    %v3955 = vpack.c.b16 %v3875, %v3874
    %v3956 = vpack.c.b16 %v3877, %v3876
    %v3957 = vpack.c.b16 %v3879, %v3878
    %v3958 = vpack.c.b16 %v3881, %v3880
    %v3959 = vpack.c.b16 %v3883, %v3882
    %v3960 = vpack.c.b16 %v3885, %v3884
    %v3961 = vpack.c.b16 %v3887, %v3886
    %v3962 = vpack.c.b16 %v3889, %v3888
    %v3963 = vpack.c.b16 %v3891, %v3890
    %v3964 = vpack.c.b16 %v3893, %v3892
    %v3965 = vpack.c.b16 %v3895, %v3894
    %v3966 = vpack.c.b16 %v3897, %v3896
    %v3967 = vpack.c.b16 %v3899, %v3898
    %v3968 = vpack.c.b16 %v3901, %v3900
    %v3969 = vpack.c.b16 %v3903, %v3902
    %v3970 = vpack.c.b16 %v3905, %v3904
    %v3971 = vpack.c.b16 %v3907, %v3906
    %v3972 = vpack.c.b16 %v3909, %v3908
    %v3973 = vpack.c.b16 %v3911, %v3910
    %v3974 = vpack.c.b16 %v3913, %v3912
    %v3975 = vpack.c.b16 %v3915, %v3914
    %v3976 = vpack.c.b16 %v3917, %v3916
    %v3977 = vpack.c.b16 %v3919, %v3918
    %v3978 = vpack.c.b16 %v3921, %v3920
    %v3979 = vpack.c.b16 %v3923, %v3922
    %4036 = vmatprep.subr.bf16.mxu0 0
    %4037 = vmatpush1.bf16.msra.mxu0 %v3924
    %4038 = vmatprep.subr.bf16.mxu0 0
    %4039 = vmatpush1.bf16.msra.mxu0 %v3925
    %4040 = vmatprep.subr.bf16.mxu0 0
    %4041 = vmatpush1.bf16.msra.mxu0 %v3926
    %4042 = vmatprep.subr.bf16.mxu0 0
    %4043 = vmatpush1.bf16.msra.mxu0 %v3927
    %4044 = vmatprep.subr.bf16.mxu0 0
    %4045 = vmatpush1.bf16.msra.mxu0 %v3928
    %4046 = vmatprep.subr.bf16.mxu0 0
    %4047 = vmatpush1.bf16.msra.mxu0 %v3929
    %4048 = vmatprep.subr.bf16.mxu0 0
    %4049 = vmatpush1.bf16.msra.mxu0 %v3930
    %4050 = vmatprep.subr.bf16.mxu0 0
    %4051 = vmatpush1.bf16.msra.mxu0 %v3931
    %4052 = vmatprep.subr.bf16.mxu0 0
    %4053 = vmatpush1.bf16.msra.mxu0 %v3932
    %4054 = vmatprep.subr.bf16.mxu0 0
    %4055 = vmatpush1.bf16.msra.mxu0 %v3933
    %4056 = vmatprep.subr.bf16.mxu0 0
    %4057 = vmatpush1.bf16.msra.mxu0 %v3934
    %4058 = vmatprep.subr.bf16.mxu0 0
    %4059 = vmatpush1.bf16.msra.mxu0 %v3935
    %4060 = vmatprep.subr.bf16.mxu0 0
    %4061 = vmatpush1.bf16.msra.mxu0 %v3936
    %4062 = vmatprep.subr.bf16.mxu0 0
    %4063 = vmatpush1.bf16.msra.mxu0 %v3937
    %4064 = vmatprep.subr.bf16.mxu0 0
    %4065 = vmatpush1.bf16.msra.mxu0 %v3938
    %4066 = vmatprep.subr.bf16.mxu0 0
    %4067 = vmatpush1.bf16.msra.mxu0 %v3939
    %4068 = vmatprep.mubr.bf16.mxu0 %v2917
    %4069 = vmatmul.mubr.bf16.gmra.mrb[0].mxu0 %v2916
    %v4070 = vpop.f32.mrb[0].mxu0
    %v4071 = vadd.f32 %v3695, %v4070
    %v4072 = vpop.f32.mrb[0].mxu0
    %v4073 = vpop.f32.mrb[0].mxu0
    %v4074 = vpop.f32.mrb[0].mxu0
    %4075 = vdwg.mxu0
    %4076 = vmatprep.subr.bf16.mxu0 0
    %4077 = vmatpush1.bf16.msra.mxu0 %v3940
    %4078 = vmatprep.subr.bf16.mxu0 0
    %4079 = vmatpush1.bf16.msra.mxu0 %v3941
    %4080 = vmatprep.subr.bf16.mxu0 0
    %4081 = vmatpush1.bf16.msra.mxu0 %v3942
    %4082 = vmatprep.subr.bf16.mxu0 0
    %4083 = vmatpush1.bf16.msra.mxu0 %v3943
    %4084 = vmatprep.subr.bf16.mxu0 0
    %4085 = vmatpush1.bf16.msra.mxu0 %v3944
    %4086 = vmatprep.subr.bf16.mxu0 0
    %4087 = vmatpush1.bf16.msra.mxu0 %v3945
    %4088 = vmatprep.subr.bf16.mxu0 0
    %4089 = vmatpush1.bf16.msra.mxu0 %v3946
    %4090 = vmatprep.subr.bf16.mxu0 0
    %4091 = vmatpush1.bf16.msra.mxu0 %v3947
    %4092 = vmatprep.subr.bf16.mxu0 0
    %4093 = vmatpush1.bf16.msra.mxu0 %v3948
    %4094 = vmatprep.subr.bf16.mxu0 0
    %4095 = vmatpush1.bf16.msra.mxu0 %v3949
    %4096 = vmatprep.subr.bf16.mxu0 0
    %4097 = vmatpush1.bf16.msra.mxu0 %v3950
    %4098 = vmatprep.subr.bf16.mxu0 0
    %4099 = vmatpush1.bf16.msra.mxu0 %v3951
    %4100 = vmatprep.subr.bf16.mxu0 0
    %4101 = vmatpush1.bf16.msra.mxu0 %v3952
    %4102 = vmatprep.subr.bf16.mxu0 0
    %4103 = vmatpush1.bf16.msra.mxu0 %v3953
    %4104 = vmatprep.subr.bf16.mxu0 0
    %4105 = vmatpush1.bf16.msra.mxu0 %v3954
    %4106 = vmatprep.subr.bf16.mxu0 0
    %4107 = vmatpush1.bf16.msra.mxu0 %v3955
    %4108 = vmatprep.mubr.bf16.mxu0 %v2919
    %4109 = vmatmul.mubr.bf16.gmra.mrb[0].mxu0 %v2918
    %v4110 = vpop.f32.mrb[0].mxu0
    %v4111 = vadd.f32 %v4071, %v4110
    %v4112 = vpop.f32.mrb[0].mxu0
    %v4113 = vpop.f32.mrb[0].mxu0
    %v4114 = vpop.f32.mrb[0].mxu0
    %4115 = vdwg.mxu0
    %4116 = vmatprep.subr.bf16.mxu0 0
    %4117 = vmatpush1.bf16.msra.mxu0 %v3956
    %4118 = vmatprep.subr.bf16.mxu0 0
    %4119 = vmatpush1.bf16.msra.mxu0 %v3957
    %4120 = vmatprep.subr.bf16.mxu0 0
    %4121 = vmatpush1.bf16.msra.mxu0 %v3958
    %4122 = vmatprep.subr.bf16.mxu0 0
    %4123 = vmatpush1.bf16.msra.mxu0 %v3959
    %4124 = vmatprep.subr.bf16.mxu0 0
    %4125 = vmatpush1.bf16.msra.mxu0 %v3960
    %4126 = vmatprep.subr.bf16.mxu0 0
    %4127 = vmatpush1.bf16.msra.mxu0 %v3961
    %4128 = vmatprep.subr.bf16.mxu0 0
    %4129 = vmatpush1.bf16.msra.mxu0 %v3962
    %4130 = vmatprep.subr.bf16.mxu0 0
    %4131 = vmatpush1.bf16.msra.mxu0 %v3963
    %4132 = vmatprep.subr.bf16.mxu0 0
    %4133 = vmatpush1.bf16.msra.mxu0 %v3964
    %4134 = vmatprep.subr.bf16.mxu0 0
    %4135 = vmatpush1.bf16.msra.mxu0 %v3965
    %4136 = vmatprep.subr.bf16.mxu0 0
    %4137 = vmatpush1.bf16.msra.mxu0 %v3966
    %4138 = vmatprep.subr.bf16.mxu0 0
    %4139 = vmatpush1.bf16.msra.mxu0 %v3967
    %4140 = vmatprep.subr.bf16.mxu0 0
    %4141 = vmatpush1.bf16.msra.mxu0 %v3968
    %4142 = vmatprep.subr.bf16.mxu0 0
    %4143 = vmatpush1.bf16.msra.mxu0 %v3969
    %4144 = vmatprep.subr.bf16.mxu0 0
    %4145 = vmatpush1.bf16.msra.mxu0 %v3970
    %4146 = vmatprep.subr.bf16.mxu0 0
    %4147 = vmatpush1.bf16.msra.mxu0 %v3971
    %4148 = vmatprep.mubr.bf16.mxu0 %v2921
    %4149 = vmatmul.mubr.bf16.gmra.mrb[0].mxu0 %v2920
    %v4150 = vpop.f32.mrb[0].mxu0
    %v4151 = vadd.f32 %v4111, %v4150
    %v4152 = vpop.f32.mrb[0].mxu0
    %v4153 = vpop.f32.mrb[0].mxu0
    %v4154 = vpop.f32.mrb[0].mxu0
    %4155 = vdwg.mxu0
    %4156 = vmatprep.subr.bf16.mxu0 0
    %4157 = vmatpush1.bf16.msra.mxu0 %v3972
    %4158 = vmatprep.subr.bf16.mxu0 0
    %4159 = vmatpush1.bf16.msra.mxu0 %v3973
    %4160 = vmatprep.subr.bf16.mxu0 0
    %4161 = vmatpush1.bf16.msra.mxu0 %v3974
    %4162 = vmatprep.subr.bf16.mxu0 0
    %4163 = vmatpush1.bf16.msra.mxu0 %v3975
    %4164 = vmatprep.subr.bf16.mxu0 0
    %4165 = vmatpush1.bf16.msra.mxu0 %v3976
    %4166 = vmatprep.subr.bf16.mxu0 0
    %4167 = vmatpush1.bf16.msra.mxu0 %v3977
    %4168 = vmatprep.subr.bf16.mxu0 0
    %4169 = vmatpush1.bf16.msra.mxu0 %v3978
    %4170 = vmatprep.subr.bf16.mxu0 0
    %4171 = vmatpush1.bf16.msra.mxu0 %v3979
    %4172 = vmatprep.subr.bf16.mxu0 0
    %4173 = vmatpush1.bf16.msra.mxu0 0
    %4174 = vmatprep.subr.bf16.mxu0 0
    %4175 = vmatpush1.bf16.msra.mxu0 0
    %4176 = vmatprep.subr.bf16.mxu0 0
    %4177 = vmatpush1.bf16.msra.mxu0 0
    %4178 = vmatprep.subr.bf16.mxu0 0
    %4179 = vmatpush1.bf16.msra.mxu0 0
    %4180 = vmatprep.subr.bf16.mxu0 0
    %4181 = vmatpush1.bf16.msra.mxu0 0
    %4182 = vmatprep.subr.bf16.mxu0 0
    %4183 = vmatpush1.bf16.msra.mxu0 0
    %4184 = vmatprep.subr.bf16.mxu0 0
    %4185 = vmatpush1.bf16.msra.mxu0 0
    %4186 = vmatprep.subr.bf16.mxu0 0
    %4187 = vmatpush1.bf16.msra.mxu0 0
    %4188 = vmatprep.mubr.bf16.mxu0 0
    %4189 = vmatmul.mubr.bf16.gmra.mrb[0].mxu0 %v2922
    %v4190 = vpop.f32.mrb[0].mxu0
    %v4191 = vadd.f32 %v4151, %v4190
    %v4192 = vpop.f32.mrb[0].mxu0
    %v4193 = vpop.f32.mrb[0].mxu0
    %v4194 = vpop.f32.mrb[0].mxu0
    %4195 = vdwg.mxu0
    %v4196 = vmul.f32 %v2694, %v1476
    %v4197 = vmul.f32 %v2696, %v1478
    %v4198 = vmul.f32 %v2747, %v1517
    %v4199 = vmul.f32 %v2749, %v1519
    %v4200 = vmul.f32 %v2800, %v1558
    %v4201 = vmul.f32 %v2802, %v1560
    %v4202 = vmul.f32 %v2853, %v1599
    %v4203 = vmul.f32 %v2698, %v1601
    %v4204 = vmul.f32 %v2700, %v1640
    %v4205 = vmul.f32 %v2751, %v1642
    %v4206 = vmul.f32 %v2753, %v1681
    %v4207 = vmul.f32 %v2804, %v1683
    %v4208 = vmul.f32 %v2806, %v1722
    %v4209 = vmul.f32 %v2856, %v1724
    %v4210 = vadd.f32 %v4196, %v4203
    %v4211 = vadd.f32 %v4197, %v4204
    %v4212 = vadd.f32 %v4198, %v4205
    %v4213 = vadd.f32 %v4199, %v4206
    %v4214 = vadd.f32 %v4200, %v4207
    %v4215 = vadd.f32 %v4201, %v4208
    %v4216 = vadd.f32 %v4202, %v4209
    %v4217 = vmul.f32 %v2704, %v1763
    %v4218 = vmul.f32 %v2706, %v1765
    %v4219 = vmul.f32 %v2757, %v1804
    %v4220 = vmul.f32 %v2759, %v1806
    %v4221 = vmul.f32 %v2810, %v1845
    %v4222 = vmul.f32 %v2812, %v1847
    %v4223 = vmul.f32 %v2861, %v1886
    %v4224 = vadd.f32 %v4210, %v4217
    %v4225 = vadd.f32 %v4211, %v4218
    %v4226 = vadd.f32 %v4212, %v4219
    %v4227 = vadd.f32 %v4213, %v4220
    %v4228 = vadd.f32 %v4214, %v4221
    %v4229 = vadd.f32 %v4215, %v4222
    %v4230 = vadd.f32 %v4216, %v4223
    %v4231 = vadd.f32 %v4224, %v2708
    %v4232 = vadd.f32 %v4225, %v2710
    %v4233 = vadd.f32 %v4226, %v2761
    %v4234 = vadd.f32 %v4227, %v2763
    %v4235 = vadd.f32 %v4228, %v2814
    %v4236 = vadd.f32 %v4229, %v2816
    %v4237 = vadd.f32 %v4230, %v2864
    %4238 = vst [vmem:[#allocation5 + $0x70] sm:$0xff] %v4231
    %4239 = vst [vmem:[#allocation5 + $0x78] sm:$0xff] %v4232
    %4240 = vst [vmem:[#allocation5 + $0x80] sm:$0xff] %v4233
    %4241 = vst [vmem:[#allocation5 + $0x88] sm:$0xff] %v4234
    %4242 = vst [vmem:[#allocation5 + $0x90] sm:$0xff] %v4235
    %4243 = vst [vmem:[#allocation5 + $0x98] sm:$0xff] %v4236
    %4244 = vst [vmem:[#allocation5 + $0xa0] sm:$0xff] %v4237
    %v4245 = vpack.c.bf16 %v4231, %v4231
    %v4246 = vpack.c.bf16 %v4232, %v4232
    %v4247 = vpack.c.bf16 %v4233, %v4233
    %v4248 = vpack.c.bf16 %v4234, %v4234
    %v4249 = vpack.c.bf16 %v4235, %v4235
    %v4250 = vpack.c.bf16 %v4236, %v4236
    %v4251 = vpack.c.bf16 %v4237, %v4237
    %s4252 = scalar_lea.vmem %s5, 896
    %v4253 = vld [vmem:[%s4252] sm:$0xf]
    %v4254 = vld [vmem:[%s4252 + $0x4] sm:$0xf]
    %v4255 = vld [vmem:[%s4252 + $0x8] sm:$0xf]
    %v4256 = vld [vmem:[%s4252 + $0xc] sm:$0xf]
    %v4257 = vld [vmem:[%s4252 + $0x10] sm:$0xf]
    %v4258 = vld [vmem:[%s4252 + $0x14] sm:$0xf]
    %v4259 = vld [vmem:[%s4252 + $0x18] sm:$0xf]
    %v4260 = vld [vmem:[%s4252 + $0x1c] sm:$0xf]
    %v4261 = vld [vmem:[%s4252 + $0x20] sm:$0xf]
    %v4262 = vld [vmem:[%s4252 + $0x24] sm:$0xf]
    %v4263 = vld [vmem:[%s4252 + $0x28] sm:$0xf]
    %v4264 = vld [vmem:[%s4252 + $0x2c] sm:$0xf]
    %v4265 = vld [vmem:[%s4252 + $0x30] sm:$0xf]
    %v4266 = vld [vmem:[%s4252 + $0x34] sm:$0xf]
    %v4267 = vld [vmem:[%s4252 + $0x38] sm:$0xf]
    %v4268 = vld [vmem:[%s4252 + $0x3c] sm:$0xf]
    %v4269 = vld [vmem:[%s4252 + $0x40] sm:$0xf]
    %v4270 = vld [vmem:[%s4252 + $0x44] sm:$0xf]
    %v4271 = vld [vmem:[%s4252 + $0x48] sm:$0xf]
    %v4272 = vld [vmem:[%s4252 + $0x4c] sm:$0xf]
    %v4273 = vld [vmem:[%s4252 + $0x50] sm:$0xf]
    %v4274 = vld [vmem:[%s4252 + $0x54] sm:$0xf]
    %v4275 = vld [vmem:[%s4252 + $0x58] sm:$0xf]
    %v4276 = vld [vmem:[%s4252 + $0x5c] sm:$0xf]
    %v4277 = vld [vmem:[%s4252 + $0x60] sm:$0xf]
    %v4278 = vld [vmem:[%s4252 + $0x64] sm:$0xf]
    %v4279 = vld [vmem:[%s4252 + $0x68] sm:$0xf]
    %v4280 = vld [vmem:[%s4252 + $0x6c] sm:$0xf]
    %v4281 = vld [vmem:[%s4252 + $0x70] sm:$0xf]
    %v4282 = vld [vmem:[%s4252 + $0x74] sm:$0xf]
    %v4283 = vld [vmem:[%s4252 + $0x78] sm:$0xf]
    %v4284 = vld [vmem:[%s4252 + $0x7c] sm:$0xf]
    %v4285 = vld [vmem:[%s4252 + $0x80] sm:$0xf]
    %v4286 = vld [vmem:[%s4252 + $0x84] sm:$0xf]
    %v4287 = vld [vmem:[%s4252 + $0x88] sm:$0xf]
    %v4288 = vld [vmem:[%s4252 + $0x8c] sm:$0xf]
    %v4289 = vld [vmem:[%s4252 + $0x90] sm:$0xf]
    %v4290 = vld [vmem:[%s4252 + $0x94] sm:$0xf]
    %v4291 = vld [vmem:[%s4252 + $0x98] sm:$0xf]
    %v4292 = vld [vmem:[%s4252 + $0x9c] sm:$0xf]
    %v4293 = vld [vmem:[%s4252 + $0xa0] sm:$0xf]
    %v4294 = vld [vmem:[%s4252 + $0xa4] sm:$0xf]
    %v4295 = vld [vmem:[%s4252 + $0xa8] sm:$0xf]
    %v4296 = vld [vmem:[%s4252 + $0xac] sm:$0xf]
    %v4297 = vld [vmem:[%s4252 + $0xb0] sm:$0xf]
    %v4298 = vld [vmem:[%s4252 + $0xb4] sm:$0xf]
    %v4299 = vld [vmem:[%s4252 + $0xb8] sm:$0xf]
    %v4300 = vld [vmem:[%s4252 + $0xbc] sm:$0xf]
    %v4301 = vld [vmem:[%s4252 + $0xc0] sm:$0xf]
    %v4302 = vld [vmem:[%s4252 + $0xc4] sm:$0xf]
    %v4303 = vld [vmem:[%s4252 + $0xc8] sm:$0xf]
    %v4304 = vld [vmem:[%s4252 + $0xcc] sm:$0xf]
    %v4305 = vld [vmem:[%s4252 + $0xd0] sm:$0xf]
    %v4306 = vld [vmem:[%s4252 + $0xd4] sm:$0xf]
    %v4307 = vld [vmem:[%s4252 + $0xd8] sm:$0xf]
    %v4308 = vld [vmem:[%s4252 + $0xdc] sm:$0xf]
    %v4309 = vld [vmem:[%s4252 + $0xe0] sm:$0xf]
    %v4310 = vld [vmem:[%s4252 + $0xe4] sm:$0xf]
    %v4311 = vld [vmem:[%s4252 + $0xe8] sm:$0xf]
    %v4312 = vld [vmem:[%s4252 + $0xec] sm:$0xf]
    %v4313 = vld [vmem:[%s4252 + $0xf0] sm:$0xf]
    %v4314 = vld [vmem:[%s4252 + $0xf4] sm:$0xf]
    %v4315 = vld [vmem:[%s4252 + $0xf8] sm:$0xf]
    %v4316 = vld [vmem:[%s4252 + $0xfc] sm:$0xf]
    %v4317 = vld [vmem:[%s4252 + $0x100] sm:$0xf]
    %v4318 = vld [vmem:[%s4252 + $0x104] sm:$0xf]
    %v4319 = vld [vmem:[%s4252 + $0x108] sm:$0xf]
    %v4320 = vld [vmem:[%s4252 + $0x10c] sm:$0xf]
    %v4321 = vld [vmem:[%s4252 + $0x110] sm:$0xf]
    %v4322 = vld [vmem:[%s4252 + $0x114] sm:$0xf]
    %v4323 = vld [vmem:[%s4252 + $0x118] sm:$0xf]
    %v4324 = vld [vmem:[%s4252 + $0x11c] sm:$0xf]
    %v4325 = vld [vmem:[%s4252 + $0x120] sm:$0xf]
    %v4326 = vld [vmem:[%s4252 + $0x124] sm:$0xf]
    %v4327 = vld [vmem:[%s4252 + $0x128] sm:$0xf]
    %v4328 = vld [vmem:[%s4252 + $0x12c] sm:$0xf]
    %v4329 = vld [vmem:[%s4252 + $0x130] sm:$0xf]
    %v4330 = vld [vmem:[%s4252 + $0x134] sm:$0xf]
    %v4331 = vld [vmem:[%s4252 + $0x138] sm:$0xf]
    %v4332 = vld [vmem:[%s4252 + $0x13c] sm:$0xf]
    %v4333 = vld [vmem:[%s4252 + $0x140] sm:$0xf]
    %v4334 = vld [vmem:[%s4252 + $0x144] sm:$0xf]
    %v4335 = vld [vmem:[%s4252 + $0x148] sm:$0xf]
    %v4336 = vld [vmem:[%s4252 + $0x14c] sm:$0xf]
    %v4337 = vld [vmem:[%s4252 + $0x150] sm:$0xf]
    %v4338 = vld [vmem:[%s4252 + $0x154] sm:$0xf]
    %v4339 = vld [vmem:[%s4252 + $0x158] sm:$0xf]
    %v4340 = vld [vmem:[%s4252 + $0x15c] sm:$0xf]
    %v4341 = vld [vmem:[%s4252 + $0x160] sm:$0xf]
    %v4342 = vld [vmem:[%s4252 + $0x164] sm:$0xf]
    %v4343 = vld [vmem:[%s4252 + $0x168] sm:$0xf]
    %v4344 = vld [vmem:[%s4252 + $0x16c] sm:$0xf]
    %v4345 = vld [vmem:[%s4252 + $0x170] sm:$0xf]
    %v4346 = vld [vmem:[%s4252 + $0x174] sm:$0xf]
    %v4347 = vld [vmem:[%s4252 + $0x178] sm:$0xf]
    %v4348 = vld [vmem:[%s4252 + $0x17c] sm:$0xf]
    %v4349 = vld [vmem:[%s4252 + $0x180] sm:$0xf]
    %v4350 = vld [vmem:[%s4252 + $0x184] sm:$0xf]
    %v4351 = vld [vmem:[%s4252 + $0x188] sm:$0xf]
    %v4352 = vld [vmem:[%s4252 + $0x18c] sm:$0xf]
    %v4353 = vld [vmem:[%s4252 + $0x190] sm:$0xf]
    %v4354 = vld [vmem:[%s4252 + $0x194] sm:$0xf]
    %v4355 = vld [vmem:[%s4252 + $0x198] sm:$0xf]
    %v4356 = vld [vmem:[%s4252 + $0x19c] sm:$0xf]
    %v4357 = vld [vmem:[%s4252 + $0x1a0] sm:$0xf]
    %v4358 = vld [vmem:[%s4252 + $0x1a4] sm:$0xf]
    %v4359 = vld [vmem:[%s4252 + $0x1a8] sm:$0xf]
    %v4360 = vld [vmem:[%s4252 + $0x1ac] sm:$0xf]
    %v4361 = vld [vmem:[%s4252 + $0x1b0] sm:$0xf]
    %v4362 = vld [vmem:[%s4252 + $0x1b4] sm:$0xf]
    %v4363 = vld [vmem:[%s4252 + $0x1b8] sm:$0xf]
    %v4364 = vld [vmem:[%s4252 + $0x1bc] sm:$0xf]
    %v4477 = vunpack.c.l.b16 %v4253
    %v4478 = vunpack.c.l.b16 %v4254
    %v4479 = vunpack.c.l.b16 %v4255
    %v4480 = vunpack.c.l.b16 %v4256
    %v4481 = vunpack.c.l.b16 %v4257
    %v4482 = vunpack.c.l.b16 %v4258
    %v4483 = vunpack.c.l.b16 %v4259
    %v4484 = vunpack.c.l.b16 %v4260
    %v4485 = vunpack.c.l.b16 %v4261
    %v4486 = vunpack.c.l.b16 %v4262
    %v4487 = vunpack.c.l.b16 %v4263
    %v4488 = vunpack.c.l.b16 %v4264
    %v4489 = vunpack.c.l.b16 %v4265
    %v4490 = vunpack.c.l.b16 %v4266
    %v4491 = vunpack.c.l.b16 %v4267
    %v4492 = vunpack.c.l.b16 %v4268
    %v4493 = vunpack.c.l.b16 %v4269
    %v4494 = vunpack.c.l.b16 %v4270
    %v4495 = vunpack.c.l.b16 %v4271
    %v4496 = vunpack.c.l.b16 %v4272
    %v4497 = vunpack.c.l.b16 %v4273
    %v4498 = vunpack.c.l.b16 %v4274
    %v4499 = vunpack.c.l.b16 %v4275
    %v4500 = vunpack.c.l.b16 %v4276
    %v4501 = vunpack.c.l.b16 %v4277
    %v4502 = vunpack.c.l.b16 %v4278
    %v4503 = vunpack.c.l.b16 %v4279
    %v4504 = vunpack.c.l.b16 %v4280
    %v4505 = vunpack.c.l.b16 %v4281
    %v4506 = vunpack.c.l.b16 %v4282
    %v4507 = vunpack.c.l.b16 %v4283
    %v4508 = vunpack.c.l.b16 %v4284
    %v4509 = vunpack.c.l.b16 %v4285
    %v4510 = vunpack.c.l.b16 %v4286
    %v4511 = vunpack.c.l.b16 %v4287
    %v4512 = vunpack.c.l.b16 %v4288
    %v4513 = vunpack.c.l.b16 %v4289
    %v4514 = vunpack.c.l.b16 %v4290
    %v4515 = vunpack.c.l.b16 %v4291
    %v4516 = vunpack.c.l.b16 %v4292
    %v4517 = vunpack.c.l.b16 %v4293
    %v4518 = vunpack.c.l.b16 %v4294
    %v4519 = vunpack.c.l.b16 %v4295
    %v4520 = vunpack.c.l.b16 %v4296
    %v4521 = vunpack.c.l.b16 %v4297
    %v4522 = vunpack.c.l.b16 %v4298
    %v4523 = vunpack.c.l.b16 %v4299
    %v4524 = vunpack.c.l.b16 %v4300
    %v4525 = vunpack.c.l.b16 %v4301
    %v4526 = vunpack.c.l.b16 %v4302
    %v4527 = vunpack.c.l.b16 %v4303
    %v4528 = vunpack.c.l.b16 %v4304
    %v4529 = vunpack.c.l.b16 %v4305
    %v4530 = vunpack.c.l.b16 %v4306
    %v4531 = vunpack.c.l.b16 %v4307
    %v4532 = vunpack.c.l.b16 %v4308
    %v4533 = vunpack.c.l.b16 %v4309
    %v4534 = vunpack.c.l.b16 %v4310
    %v4535 = vunpack.c.l.b16 %v4311
    %v4536 = vunpack.c.l.b16 %v4312
    %v4537 = vunpack.c.l.b16 %v4313
    %v4538 = vunpack.c.l.b16 %v4314
    %v4539 = vunpack.c.l.b16 %v4315
    %v4540 = vunpack.c.l.b16 %v4316
    %v4541 = vunpack.c.l.b16 %v4317
    %v4542 = vunpack.c.l.b16 %v4318
    %v4543 = vunpack.c.l.b16 %v4319
    %v4544 = vunpack.c.l.b16 %v4320
    %v4545 = vunpack.c.l.b16 %v4321
    %v4546 = vunpack.c.l.b16 %v4322
    %v4547 = vunpack.c.l.b16 %v4323
    %v4548 = vunpack.c.l.b16 %v4324
    %v4549 = vunpack.c.l.b16 %v4325
    %v4550 = vunpack.c.l.b16 %v4326
    %v4551 = vunpack.c.l.b16 %v4327
    %v4552 = vunpack.c.l.b16 %v4328
    %v4553 = vunpack.c.l.b16 %v4329
    %v4554 = vunpack.c.l.b16 %v4330
    %v4555 = vunpack.c.l.b16 %v4331
    %v4556 = vunpack.c.l.b16 %v4332
    %v4557 = vunpack.c.l.b16 %v4333
    %v4558 = vunpack.c.l.b16 %v4334
    %v4559 = vunpack.c.l.b16 %v4335
    %v4560 = vunpack.c.l.b16 %v4336
    %v4561 = vunpack.c.l.b16 %v4337
    %v4562 = vunpack.c.l.b16 %v4338
    %v4563 = vunpack.c.l.b16 %v4339
    %v4564 = vunpack.c.l.b16 %v4340
    %v4565 = vunpack.c.l.b16 %v4341
    %v4566 = vunpack.c.l.b16 %v4342
    %v4567 = vunpack.c.l.b16 %v4343
    %v4568 = vunpack.c.l.b16 %v4344
    %v4569 = vunpack.c.l.b16 %v4345
    %v4570 = vunpack.c.l.b16 %v4346
    %v4571 = vunpack.c.l.b16 %v4347
    %v4572 = vunpack.c.l.b16 %v4348
    %v4573 = vunpack.c.l.b16 %v4349
    %v4574 = vunpack.c.l.b16 %v4350
    %v4575 = vunpack.c.l.b16 %v4351
    %v4576 = vunpack.c.l.b16 %v4352
    %v4577 = vunpack.c.l.b16 %v4353
    %v4578 = vunpack.c.l.b16 %v4354
    %v4579 = vunpack.c.l.b16 %v4355
    %v4580 = vunpack.c.l.b16 %v4356
    %v4581 = vunpack.c.l.b16 %v4357
    %v4582 = vunpack.c.l.b16 %v4358
    %v4583 = vunpack.c.l.b16 %v4359
    %v4584 = vunpack.c.l.b16 %v4360
    %v4585 = vunpack.c.l.b16 %v4361
    %v4586 = vunpack.c.l.b16 %v4362
    %v4587 = vunpack.c.l.b16 %v4363
    %v4588 = vunpack.c.l.b16 %v4364
    %v4589 = vpack.c.b16 %v4478, %v4477
    %v4590 = vpack.c.b16 %v4480, %v4479
    %v4591 = vpack.c.b16 %v4482, %v4481
    %v4592 = vpack.c.b16 %v4484, %v4483
    %v4593 = vpack.c.b16 %v4486, %v4485
    %v4594 = vpack.c.b16 %v4488, %v4487
    %v4595 = vpack.c.b16 %v4490, %v4489
    %v4596 = vpack.c.b16 %v4492, %v4491
    %v4597 = vpack.c.b16 %v4494, %v4493
    %v4598 = vpack.c.b16 %v4496, %v4495
    %v4599 = vpack.c.b16 %v4498, %v4497
    %v4600 = vpack.c.b16 %v4500, %v4499
    %v4601 = vpack.c.b16 %v4502, %v4501
    %v4602 = vpack.c.b16 %v4504, %v4503
    %v4603 = vpack.c.b16 %v4506, %v4505
    %v4604 = vpack.c.b16 %v4508, %v4507
    %v4605 = vpack.c.b16 %v4510, %v4509
    %v4606 = vpack.c.b16 %v4512, %v4511
    %v4607 = vpack.c.b16 %v4514, %v4513
    %v4608 = vpack.c.b16 %v4516, %v4515
    %v4609 = vpack.c.b16 %v4518, %v4517
    %v4610 = vpack.c.b16 %v4520, %v4519
    %v4611 = vpack.c.b16 %v4522, %v4521
    %v4612 = vpack.c.b16 %v4524, %v4523
    %v4613 = vpack.c.b16 %v4526, %v4525
    %v4614 = vpack.c.b16 %v4528, %v4527
    %v4615 = vpack.c.b16 %v4530, %v4529
    %v4616 = vpack.c.b16 %v4532, %v4531
    %v4617 = vpack.c.b16 %v4534, %v4533
    %v4618 = vpack.c.b16 %v4536, %v4535
    %v4619 = vpack.c.b16 %v4538, %v4537
    %v4620 = vpack.c.b16 %v4540, %v4539
    %v4621 = vpack.c.b16 %v4542, %v4541
    %v4622 = vpack.c.b16 %v4544, %v4543
    %v4623 = vpack.c.b16 %v4546, %v4545
    %v4624 = vpack.c.b16 %v4548, %v4547
    %v4625 = vpack.c.b16 %v4550, %v4549
    %v4626 = vpack.c.b16 %v4552, %v4551
    %v4627 = vpack.c.b16 %v4554, %v4553
    %v4628 = vpack.c.b16 %v4556, %v4555
    %v4629 = vpack.c.b16 %v4558, %v4557
    %v4630 = vpack.c.b16 %v4560, %v4559
    %v4631 = vpack.c.b16 %v4562, %v4561
    %v4632 = vpack.c.b16 %v4564, %v4563
    %v4633 = vpack.c.b16 %v4566, %v4565
    %v4634 = vpack.c.b16 %v4568, %v4567
    %v4635 = vpack.c.b16 %v4570, %v4569
    %v4636 = vpack.c.b16 %v4572, %v4571
    %v4637 = vpack.c.b16 %v4574, %v4573
    %v4638 = vpack.c.b16 %v4576, %v4575
    %v4639 = vpack.c.b16 %v4578, %v4577
    %v4640 = vpack.c.b16 %v4580, %v4579
    %v4641 = vpack.c.b16 %v4582, %v4581
    %v4642 = vpack.c.b16 %v4584, %v4583
    %v4643 = vpack.c.b16 %v4586, %v4585
    %v4644 = vpack.c.b16 %v4588, %v4587
    %4701 = vmatprep.subr.bf16.mxu0 0
    %4702 = vmatpush1.bf16.msra.mxu0 %v4589
    %4703 = vmatprep.subr.bf16.mxu0 0
    %4704 = vmatpush1.bf16.msra.mxu0 %v4590
    %4705 = vmatprep.subr.bf16.mxu0 0
    %4706 = vmatpush1.bf16.msra.mxu0 %v4591
    %4707 = vmatprep.subr.bf16.mxu0 0
    %4708 = vmatpush1.bf16.msra.mxu0 %v4592
    %4709 = vmatprep.subr.bf16.mxu0 0
    %4710 = vmatpush1.bf16.msra.mxu0 %v4593
    %4711 = vmatprep.subr.bf16.mxu0 0
    %4712 = vmatpush1.bf16.msra.mxu0 %v4594
    %4713 = vmatprep.subr.bf16.mxu0 0
    %4714 = vmatpush1.bf16.msra.mxu0 %v4595
    %4715 = vmatprep.subr.bf16.mxu0 0
    %4716 = vmatpush1.bf16.msra.mxu0 %v4596
    %4717 = vmatprep.subr.bf16.mxu0 0
    %4718 = vmatpush1.bf16.msra.mxu0 %v4597
    %4719 = vmatprep.subr.bf16.mxu0 0
    %4720 = vmatpush1.bf16.msra.mxu0 %v4598
    %4721 = vmatprep.subr.bf16.mxu0 0
    %4722 = vmatpush1.bf16.msra.mxu0 %v4599
    %4723 = vmatprep.subr.bf16.mxu0 0
    %4724 = vmatpush1.bf16.msra.mxu0 %v4600
    %4725 = vmatprep.subr.bf16.mxu0 0
    %4726 = vmatpush1.bf16.msra.mxu0 %v4601
    %4727 = vmatprep.subr.bf16.mxu0 0
    %4728 = vmatpush1.bf16.msra.mxu0 %v4602
    %4729 = vmatprep.subr.bf16.mxu0 0
    %4730 = vmatpush1.bf16.msra.mxu0 %v4603
    %4731 = vmatprep.subr.bf16.mxu0 0
    %4732 = vmatpush1.bf16.msra.mxu0 %v4604
    %4733 = vmatprep.mubr.bf16.mxu0 %v4246
    %4734 = vmatmul.mubr.bf16.gmra.mrb[0].mxu0 %v4245
    %v4735 = vpop.f32.mrb[0].mxu0
    %v4736 = vadd.f32 0.0, %v4735
    %v4737 = vpop.f32.mrb[0].mxu0
    %v4738 = vpop.f32.mrb[0].mxu0
    %v4739 = vpop.f32.mrb[0].mxu0
    %4740 = vdwg.mxu0
    %4741 = vmatprep.subr.bf16.mxu0 0
    %4742 = vmatpush1.bf16.msra.mxu0 %v4605
    %4743 = vmatprep.subr.bf16.mxu0 0
    %4744 = vmatpush1.bf16.msra.mxu0 %v4606
    %4745 = vmatprep.subr.bf16.mxu0 0
    %4746 = vmatpush1.bf16.msra.mxu0 %v4607
    %4747 = vmatprep.subr.bf16.mxu0 0
    %4748 = vmatpush1.bf16.msra.mxu0 %v4608
    %4749 = vmatprep.subr.bf16.mxu0 0
    %4750 = vmatpush1.bf16.msra.mxu0 %v4609
    %4751 = vmatprep.subr.bf16.mxu0 0
    %4752 = vmatpush1.bf16.msra.mxu0 %v4610
    %4753 = vmatprep.subr.bf16.mxu0 0
    %4754 = vmatpush1.bf16.msra.mxu0 %v4611
    %4755 = vmatprep.subr.bf16.mxu0 0
    %4756 = vmatpush1.bf16.msra.mxu0 %v4612
    %4757 = vmatprep.subr.bf16.mxu0 0
    %4758 = vmatpush1.bf16.msra.mxu0 %v4613
    %4759 = vmatprep.subr.bf16.mxu0 0
    %4760 = vmatpush1.bf16.msra.mxu0 %v4614
    %4761 = vmatprep.subr.bf16.mxu0 0
    %4762 = vmatpush1.bf16.msra.mxu0 %v4615
    %4763 = vmatprep.subr.bf16.mxu0 0
    %4764 = vmatpush1.bf16.msra.mxu0 %v4616
    %4765 = vmatprep.subr.bf16.mxu0 0
    %4766 = vmatpush1.bf16.msra.mxu0 %v4617
    %4767 = vmatprep.subr.bf16.mxu0 0
    %4768 = vmatpush1.bf16.msra.mxu0 %v4618
    %4769 = vmatprep.subr.bf16.mxu0 0
    %4770 = vmatpush1.bf16.msra.mxu0 %v4619
    %4771 = vmatprep.subr.bf16.mxu0 0
    %4772 = vmatpush1.bf16.msra.mxu0 %v4620
    %4773 = vmatprep.mubr.bf16.mxu0 %v4248
    %4774 = vmatmul.mubr.bf16.gmra.mrb[0].mxu0 %v4247
    %v4775 = vpop.f32.mrb[0].mxu0
    %v4776 = vadd.f32 %v4736, %v4775
    %v4777 = vpop.f32.mrb[0].mxu0
    %v4778 = vpop.f32.mrb[0].mxu0
    %v4779 = vpop.f32.mrb[0].mxu0
    %4780 = vdwg.mxu0
    %4781 = vmatprep.subr.bf16.mxu0 0
    %4782 = vmatpush1.bf16.msra.mxu0 %v4621
    %4783 = vmatprep.subr.bf16.mxu0 0
    %4784 = vmatpush1.bf16.msra.mxu0 %v4622
    %4785 = vmatprep.subr.bf16.mxu0 0
    %4786 = vmatpush1.bf16.msra.mxu0 %v4623
    %4787 = vmatprep.subr.bf16.mxu0 0
    %4788 = vmatpush1.bf16.msra.mxu0 %v4624
    %4789 = vmatprep.subr.bf16.mxu0 0
    %4790 = vmatpush1.bf16.msra.mxu0 %v4625
    %4791 = vmatprep.subr.bf16.mxu0 0
    %4792 = vmatpush1.bf16.msra.mxu0 %v4626
    %4793 = vmatprep.subr.bf16.mxu0 0
    %4794 = vmatpush1.bf16.msra.mxu0 %v4627
    %4795 = vmatprep.subr.bf16.mxu0 0
    %4796 = vmatpush1.bf16.msra.mxu0 %v4628
    %4797 = vmatprep.subr.bf16.mxu0 0
    %4798 = vmatpush1.bf16.msra.mxu0 %v4629
    %4799 = vmatprep.subr.bf16.mxu0 0
    %4800 = vmatpush1.bf16.msra.mxu0 %v4630
    %4801 = vmatprep.subr.bf16.mxu0 0
    %4802 = vmatpush1.bf16.msra.mxu0 %v4631
    %4803 = vmatprep.subr.bf16.mxu0 0
    %4804 = vmatpush1.bf16.msra.mxu0 %v4632
    %4805 = vmatprep.subr.bf16.mxu0 0
    %4806 = vmatpush1.bf16.msra.mxu0 %v4633
    %4807 = vmatprep.subr.bf16.mxu0 0
    %4808 = vmatpush1.bf16.msra.mxu0 %v4634
    %4809 = vmatprep.subr.bf16.mxu0 0
    %4810 = vmatpush1.bf16.msra.mxu0 %v4635
    %4811 = vmatprep.subr.bf16.mxu0 0
    %4812 = vmatpush1.bf16.msra.mxu0 %v4636
    %4813 = vmatprep.mubr.bf16.mxu0 %v4250
    %4814 = vmatmul.mubr.bf16.gmra.mrb[0].mxu0 %v4249
    %v4815 = vpop.f32.mrb[0].mxu0
    %v4816 = vadd.f32 %v4776, %v4815
    %v4817 = vpop.f32.mrb[0].mxu0
    %v4818 = vpop.f32.mrb[0].mxu0
    %v4819 = vpop.f32.mrb[0].mxu0
    %4820 = vdwg.mxu0
    %4821 = vmatprep.subr.bf16.mxu0 0
    %4822 = vmatpush1.bf16.msra.mxu0 %v4637
    %4823 = vmatprep.subr.bf16.mxu0 0
    %4824 = vmatpush1.bf16.msra.mxu0 %v4638
    %4825 = vmatprep.subr.bf16.mxu0 0
    %4826 = vmatpush1.bf16.msra.mxu0 %v4639
    %4827 = vmatprep.subr.bf16.mxu0 0
    %4828 = vmatpush1.bf16.msra.mxu0 %v4640
    %4829 = vmatprep.subr.bf16.mxu0 0
    %4830 = vmatpush1.bf16.msra.mxu0 %v4641
    %4831 = vmatprep.subr.bf16.mxu0 0
    %4832 = vmatpush1.bf16.msra.mxu0 %v4642
    %4833 = vmatprep.subr.bf16.mxu0 0
    %4834 = vmatpush1.bf16.msra.mxu0 %v4643
    %4835 = vmatprep.subr.bf16.mxu0 0
    %4836 = vmatpush1.bf16.msra.mxu0 %v4644
    %4837 = vmatprep.subr.bf16.mxu0 0
    %4838 = vmatpush1.bf16.msra.mxu0 0
    %4839 = vmatprep.subr.bf16.mxu0 0
    %4840 = vmatpush1.bf16.msra.mxu0 0
    %4841 = vmatprep.subr.bf16.mxu0 0
    %4842 = vmatpush1.bf16.msra.mxu0 0
    %4843 = vmatprep.subr.bf16.mxu0 0
    %4844 = vmatpush1.bf16.msra.mxu0 0
    %4845 = vmatprep.subr.bf16.mxu0 0
    %4846 = vmatpush1.bf16.msra.mxu0 0
    %4847 = vmatprep.subr.bf16.mxu0 0
    %4848 = vmatpush1.bf16.msra.mxu0 0
    %4849 = vmatprep.subr.bf16.mxu0 0
    %4850 = vmatpush1.bf16.msra.mxu0 0
    %4851 = vmatprep.subr.bf16.mxu0 0
    %4852 = vmatpush1.bf16.msra.mxu0 0
    %4853 = vmatprep.mubr.bf16.mxu0 0
    %4854 = vmatmul.mubr.bf16.gmra.mrb[0].mxu0 %v4251
    %v4855 = vpop.f32.mrb[0].mxu0
    %v4856 = vadd.f32 %v4816, %v4855
    %v4857 = vpop.f32.mrb[0].mxu0
    %v4858 = vpop.f32.mrb[0].mxu0
    %v4859 = vpop.f32.mrb[0].mxu0
    %4860 = vdwg.mxu0
    %v4861 = vadd.f32 %v4191, %v4856
    %4862 = vst.msk [vmem:[#allocation6] sm:$0xff] %vm2281, %v4861
    // Predicated region
    $region30: #{tpu_custom_call.1} parent=1 // pred_check
      _
    $region31: #{tpu_custom_call.1} parent=1 // pred_check_branch
      %4864 = sbr.rel (0) target = $region33
    $region32: #{tpu_custom_call.1} parent=1 // pred_region
      %s4866 = ssub.s32 2688, 2688
      %4867 = vsyncadd [#allocation4], %s4866
      %s4869 = sshll.u32 [#allocation5], 4
      %s4870 = int_to_ptr.vmem [resolvable:$true] %s4869
      %4872 = dma.vmem_to_hbm [thread:$0]  %s4870, 2688, %s6, [#allocation4]
    $region33: #{tpu_custom_call.1} parent=1 // pred_fallthru
      _
    // Predicated region
    $region34: #{tpu_custom_call.1} parent=1 // pred_check
      _
    $region35: #{tpu_custom_call.1} parent=1 // pred_check_branch
      %4874 = sbr.rel (0) target = $region37
    $region36: #{tpu_custom_call.1} parent=1 // pred_region
      %s4876 = ssub.s32 128, 128
      %4877 = vsyncadd [#allocation7], %s4876
      %s4879 = sshll.u32 [#allocation6], 4
      %s4880 = int_to_ptr.vmem [resolvable:$true] %s4879
      %4882 = dma.vmem_to_hbm [thread:$0]  %s4880, 128, %s7, [#allocation7]
    $region37: #{tpu_custom_call.1} parent=1 // pred_fallthru
      _
    // Predicated region
    $region38: #{tpu_custom_call.1} parent=1 // pred_check
      _
    $region39: #{tpu_custom_call.1} parent=1 // pred_check_branch
      %4884 = sbr.rel (0) target = $region41
    $region40: #{tpu_custom_call.1} parent=1 // pred_region
      %4885 = dma.done [#allocation4], 2688
    $region41: #{tpu_custom_call.1} parent=1 // pred_fallthru
      _
    // Predicated region
    $region42: #{tpu_custom_call.1} parent=1 // pred_check
      _
    $region43: #{tpu_custom_call.1} parent=1 // pred_check_branch
      %4887 = sbr.rel (0) target = $region45
    $region44: #{tpu_custom_call.1} parent=1 // pred_region
      %4888 = dma.done [#allocation7], 128
    $region45: #{tpu_custom_call.1} parent=1 // pred_fallthru
      _
    %4889 = vsyncpa [#allocation3], 1
    %4890 = vsyncpa [#allocation4], 1
    %4891 = vsyncpa [#allocation7], 1

</llo_original>
